<compile_context>
chip_gen: v7x
topology: tpu7x:2x2x1
jax: 0.10.0
libtpu: 0.0.40
codegen_flags: <defaults>
</compile_context>

<pallas_src>
import functools
import math

import jax
import jax.numpy as jnp
import numpy as np
from jax import lax
from jax.experimental import pallas as pl
from jax.experimental.pallas import tpu as pltpu

_LANES = 128
_SUBLANES = 8


def _round_up(x, m):
    return ((x + m - 1) // m) * m


def _pick_th(H_out, W_out, target_m=256):
    """Output-row tile height so that M = TH*W_out ~ target and M % 8 == 0."""
    step = 8 // math.gcd(W_out, 8)            # TH multiple of `step` => M % 8 == 0
    th = ((target_m // W_out) // step) * step
    if th == 0 and step * W_out <= 2 * target_m:
        th = step                             # accept a bigger tile to keep M % 8 == 0
    if th == 0:                               # very wide rows: give up on the 8-alignment
        return max(1, min(H_out, max(1, target_m // W_out)))
    return min(th, _round_up(H_out, step))


def _conv_bn_relu_kernel(x_ref, w_ref, bias_ref, o_ref, *scratch,
                         TH, W_out, KH, KW, Cin_p, TCo, n_co):
    """Grid = (N, H_tiles, Cout_tiles).

    x_ref:    (1, Hp_in, Wp_in, Cin_p)  full padded image (resident per n)
    w_ref:    (KH*KW*Cin_p, Cout_p)     scale-folded im2col weight (resident,
                                        constant index_map -> fetched once)
    bias_ref: (1, Cout_p)               folded BN bias (f32, resident)
    o_ref:    (1, TH, W_out, TCo)       lane-dense output tile
    scratch:  optional (M, K) VMEM im2col scratch (only when Cin_p % 128 == 0)
    """
    hi = pl.program_id(1)
    co = pl.program_id(2)
    h0 = pl.multiple_of(hi * TH, TH)
    M = TH * W_out
    K = KH * KW * Cin_p

    def w_cols(row0, nrows):
        if n_co == 1:
            return w_ref[row0:row0 + nrows, :]
        off = pl.multiple_of(co * TCo, TCo)          # TCo is a multiple of 128
        return w_ref[row0:row0 + nrows, pl.ds(off, TCo)]

    def b_cols():
        if n_co == 1:
            return bias_ref[...]
        off = pl.multiple_of(co * TCo, TCo)
        return bias_ref[:, pl.ds(off, TCo)]

    def patch(kh, kw):
        # Slice straight from the ref (dynamic start only on the leading H dim).
        p = x_ref[0, pl.ds(h0 + kh, TH), pl.ds(kw, W_out), :]
        return p.reshape(M, Cin_p)

    if scratch:
        # Lane-dense im2col (Cin_p is a multiple of 128 -> unmasked stores),
        # built once per (n, h-tile) and reused by every Cout tile.
        # NOTE: relies on the Cout axis being innermost + "arbitrary".
        patches_ref = scratch[0]

        def build():
            for kh in range(KH):
                for kw in range(KW):
                    col = (kh * KW + kw) * Cin_p
                    patches_ref[:, col:col + Cin_p] = patch(kh, kw)

        if n_co == 1:
            build()
        else:
            pl.when(co == 0)(build)

        y = jnp.dot(patches_ref[...], w_cols(0, K),
                    preferred_element_type=jnp.float32)
    else:
        # Small-Cin path: no scratch, accumulate KH*KW shifted matmuls.
        y = None
        for kh in range(KH):
            for kw in range(KW):
                row = (kh * KW + kw) * Cin_p
                t = jnp.dot(patch(kh, kw), w_cols(row, Cin_p),
                            preferred_element_type=jnp.float32)
                y = t if y is None else y + t

    # Fused BN bias + ReLU epilogue in f32 (scale already folded into weights).
    y = jnp.maximum(y + b_cols(), 0.0)
    o_ref[...] = y.reshape(o_ref.shape).astype(o_ref.dtype)


def basic_conv2d(x_nchw, weight_oihw, bn_gamma, bn_beta, bn_mean, bn_var,
                 *, padding=1, eps=1e-5, compute_dtype=None):
    """BasicConv2d forward (PyTorch NCHW / OIHW layouts at the boundary)."""
    N, Cin, Hin, Win = x_nchw.shape
    Cout, _, KH, KW = weight_oihw.shape
    if compute_dtype is None:
        compute_dtype = x_nchw.dtype   # jnp.bfloat16 recommended on v6e/v7x

    # ---- Fold BatchNorm (eval) into per-Cout scale / bias; fold scale into W.
    inv_std = lax.rsqrt(bn_var.astype(jnp.float32) + eps)
    scale = bn_gamma.astype(jnp.float32) * inv_std
    bias = bn_beta.astype(jnp.float32) - bn_mean.astype(jnp.float32) * scale

    # ---- Geometry / tiling ----
    H_out = Hin + 2 * padding - KH + 1
    W_out = Win + 2 * padding - KW + 1

    # Channel padding: pad Cin to 128 when large enough that lane-dense im2col
    # pays off; otherwise sublane-align only and use the shifted-matmul path.
    Cin_p = _round_up(Cin, _LANES) if Cin >= 64 else _round_up(Cin, _SUBLANES)
    use_im2col = (Cin_p % _LANES == 0) and (KH * KW > 1)

    Cout_p = _round_up(Cout, _LANES)
    if Cout_p <= 2 * _LANES:
        TCo = Cout_p                          # collapse the Cout grid axis
    elif Cout_p % (2 * _LANES) == 0:
        TCo = 2 * _LANES                      # 256-lane tiles (v6e/v7x MXU width)
    else:
        TCo = _LANES
    n_co = Cout_p // TCo

    TH = _pick_th(H_out, W_out)               # M = TH*W_out ~ 256, multiple of 8
    Hp_out = _round_up(H_out, TH)
    n_h = Hp_out // TH
    M = TH * W_out
    K = KH * KW * Cin_p

    # ---- Boundary glue: NCHW -> NHWC, conv pad + row-tile pad + channel pad.
    x_nhwc = jnp.transpose(x_nchw, (0, 2, 3, 1)).astype(compute_dtype)
    x_pad = jnp.pad(
        x_nhwc,
        ((0, 0),
         (padding, padding + (Hp_out - H_out)),
         (padding, padding),
         (0, Cin_p - Cin)))
    Hp_in, Wp_in = x_pad.shape[1], x_pad.shape[2]

    # OIHW -> HWIO, fold BN scale (f32), pad Cin/Cout, flatten to (K, Cout_p).
    w_hwio = jnp.transpose(weight_oihw, (2, 3, 1, 0)).astype(jnp.float32)
    w_hwio = w_hwio * scale[None, None, None, :]
    w_hwio = jnp.pad(w_hwio, ((0, 0), (0, 0), (0, Cin_p - Cin), (0, Cout_p - Cout)))
    w2d = w_hwio.reshape(K, Cout_p).astype(compute_dtype)
    bias_p = jnp.pad(bias, (0, Cout_p - Cout)).reshape(1, Cout_p)   # f32

    kernel = functools.partial(
        _conv_bn_relu_kernel, TH=TH, W_out=W_out, KH=KH, KW=KW,
        Cin_p=Cin_p, TCo=TCo, n_co=n_co)

    scratch_shapes = []
    if use_im2col:
        scratch_shapes.append(pltpu.VMEM((M, K), compute_dtype))

    out_nhwc = pl.pallas_call(
        kernel,
        out_shape=jax.ShapeDtypeStruct((N, Hp_out, W_out, Cout_p), x_nchw.dtype),
        grid_spec=pltpu.PrefetchScalarGridSpec(
            num_scalar_prefetch=0,
            grid=(N, n_h, n_co),
            in_specs=[
                # Padded image: resident per batch element (block index only
                # changes with n).  TODO(synk): for very large feature maps on
                # v7x (64 MiB VMEM) switch to memory_space=pl.ANY + manual
                # double-buffered DMA of the (TH+KH-1)-row slab per h-tile.
                pl.BlockSpec((1, Hp_in, Wp_in, Cin_p), lambda n, h, c: (n, 0, 0, 0)),
                # Scale-folded weight: constant block index -> one HBM fetch
                # for the whole call; Cout tile sliced in-kernel when n_co > 1.
                pl.BlockSpec((K, Cout_p), lambda n, h, c: (0, 0)),
                # Folded BN bias (f32), also resident.
                pl.BlockSpec((1, Cout_p), lambda n, h, c: (0, 0)),
            ],
            out_specs=pl.BlockSpec((1, TH, W_out, TCo),
                                   lambda n, h, c: (n, h, 0, c)),
            scratch_shapes=scratch_shapes,
        ),
        compiler_params=pltpu.CompilerParams(
            # n / h-tile axes are independent (megacore-shardable); the Cout
            # axis MUST stay innermost + "arbitrary" because the im2col
            # scratch is built at co == 0 and reused for co > 0.
            dimension_semantics=("parallel", "parallel", "arbitrary"),
            vmem_limit_bytes=64 * 1024 * 1024,
        ),
    )(x_pad, w2d, bias_p)

    # Drop row/channel padding, back to PyTorch NCHW.
    out_nhwc = out_nhwc[:, :H_out, :, :Cout]
    return jnp.transpose(out_nhwc, (0, 3, 1, 2))


def _reference(x_nchw, weight_oihw, bn_gamma, bn_beta, bn_mean, bn_var,
               *, padding=1, eps=1e-5):
    y = lax.conv_general_dilated(
        x_nchw.astype(jnp.float32), weight_oihw.astype(jnp.float32),
        window_strides=(1, 1), padding=[(padding, padding), (padding, padding)],
        dimension_numbers=("NCHW", "OIHW", "NCHW"))
    inv_std = 1.0 / jnp.sqrt(bn_var + eps)
    y = (y - bn_mean[None, :, None, None]) * inv_std[None, :, None, None]
    y = y * bn_gamma[None, :, None, None] + bn_beta[None, :, None, None]
    return jnp.maximum(y, 0.0)


if __name__ == "__main__":
    key = jax.random.PRNGKey(0)
    kx, kw, kg, kb, km, kv = jax.random.split(key, 6)

    N, Cin, Hin, Win = 2, 4, 16, 16
    Cout, KH, KW = 8, 3, 3
    padding = 1

    x = jax.random.normal(kx, (N, Cin, Hin, Win), dtype=jnp.float32)
    weight = jax.random.normal(kw, (Cout, Cin, KH, KW), dtype=jnp.float32) * 0.1
    gamma = 1.0 + 0.1 * jax.random.normal(kg, (Cout,), dtype=jnp.float32)
    beta = 0.1 * jax.random.normal(kb, (Cout,), dtype=jnp.float32)
    running_mean = 0.1 * jax.random.normal(km, (Cout,), dtype=jnp.float32)
    running_var = jnp.abs(1.0 + 0.1 * jax.random.normal(kv, (Cout,), dtype=jnp.float32))

    ref = _reference(x, weight, gamma, beta, running_mean, running_var,
                     padding=padding)

    # f32 path (exact PyTorch semantics).
    out = basic_conv2d(x, weight, gamma, beta, running_mean, running_var,
                       padding=padding)
    out = jax.block_until_ready(out)
    np.testing.assert_allclose(np.asarray(out), np.asarray(ref),
                               atol=2e-4, rtol=2e-4)

    # bf16-operand path (v6e/v7x recommendation): f32 accumulation + f32
    # bias/ReLU epilogue, looser tolerance for bf16 operand rounding.
    out_bf16 = basic_conv2d(x, weight, gamma, beta, running_mean, running_var,
                            padding=padding, compute_dtype=jnp.bfloat16)
    out_bf16 = jax.block_until_ready(out_bf16)
    np.testing.assert_allclose(np.asarray(out_bf16), np.asarray(ref),
                               atol=5e-2, rtol=5e-2)

    print("KERNEL_OK")
</pallas_src>

<mosaic_0001>
module attributes {stable_mosaic.version = 11 : i64} {
  func.func @_conv_bn_relu_kernel(%arg0: i32, %arg1: i32, %arg2: i32, %arg3: memref<1x18x18x8xf32, #tpu.memory_space<vmem>>, %arg4: memref<72x128xf32, #tpu.memory_space<vmem>>, %arg5: memref<1x128xf32, #tpu.memory_space<vmem>>, %arg6: memref<1x16x16x128xf32, #tpu.memory_space<vmem>>) attributes {dimension_semantics = [#tpu.dimension_semantics<parallel>, #tpu.dimension_semantics<parallel>, #tpu.dimension_semantics<arbitrary>], iteration_bounds = array<i64: 2, 1, 1>, scalar_prefetch = 0 : i64, scratch_operands = 0 : i64, tpu.core_type = #tpu.core_type<tc>, window_params = [{transform_indices = @transform_0, window_bounds = array<i64: 1, 18, 18, 8>}, {pipeline_mode = #tpu.pipeline_mode<synchronous>, transform_indices = @transform_1, window_bounds = array<i64: 72, 128>}, {pipeline_mode = #tpu.pipeline_mode<synchronous>, transform_indices = @transform_2, window_bounds = array<i64: 1, 128>}, {transform_indices = @transform_3, window_bounds = array<i64: 1, 16, 16, 128>}]} {
    %c16_i32 = arith.constant 16 : i32
    %0 = arith.muli %arg1, %c16_i32 : i32
    %1 = tpu.assume_multiple %0, 16 : i32
    %c0_i32 = arith.constant 0 : i32
    %2 = arith.addi %1, %c0_i32 : i32
    %c0 = arith.constant 0 : index
    %3 = arith.index_cast %2 : i32 to index
    %c0_0 = arith.constant 0 : index
    %c0_1 = arith.constant 0 : index
    %4 = vector.load %arg3[%c0, %3, %c0_0, %c0_1] : memref<1x18x18x8xf32, #tpu.memory_space<vmem>>, vector<1x16x16x8xf32>
    %5 = vector.shape_cast %4 : vector<1x16x16x8xf32> to vector<16x16x8xf32>
    %6 = vector.shape_cast %5 : vector<16x16x8xf32> to vector<256x8xf32>
    %c0_2 = arith.constant 0 : index
    %c0_3 = arith.constant 0 : index
    %7 = vector.load %arg4[%c0_2, %c0_3] : memref<72x128xf32, #tpu.memory_space<vmem>>, vector<8x128xf32>
    %cst = arith.constant dense<0.000000e+00> : vector<256x128xf32>
    %8 = tpu.matmul %6, %7, %cst {dimension_numbers = #tpu.dot_dimension_numbers<[1], [0], [0], [1], [0, 0, 1, 1], [], []>} : vector<256x8xf32>, vector<8x128xf32>, vector<256x128xf32> -> vector<256x128xf32>
    %c0_i32_4 = arith.constant 0 : i32
    %9 = arith.addi %1, %c0_i32_4 : i32
    %c0_5 = arith.constant 0 : index
    %10 = arith.index_cast %9 : i32 to index
    %c1 = arith.constant 1 : index
    %c0_6 = arith.constant 0 : index
    %11 = vector.load %arg3[%c0_5, %10, %c1, %c0_6] : memref<1x18x18x8xf32, #tpu.memory_space<vmem>>, vector<1x16x16x8xf32>
    %12 = vector.shape_cast %11 : vector<1x16x16x8xf32> to vector<16x16x8xf32>
    %13 = vector.shape_cast %12 : vector<16x16x8xf32> to vector<256x8xf32>
    %c8 = arith.constant 8 : index
    %c0_7 = arith.constant 0 : index
    %14 = vector.load %arg4[%c8, %c0_7] : memref<72x128xf32, #tpu.memory_space<vmem>>, vector<8x128xf32>
    %cst_8 = arith.constant dense<0.000000e+00> : vector<256x128xf32>
    %15 = tpu.matmul %13, %14, %cst_8 {dimension_numbers = #tpu.dot_dimension_numbers<[1], [0], [0], [1], [0, 0, 1, 1], [], []>} : vector<256x8xf32>, vector<8x128xf32>, vector<256x128xf32> -> vector<256x128xf32>
    %16 = arith.addf %8, %15 : vector<256x128xf32>
    %c0_i32_9 = arith.constant 0 : i32
    %17 = arith.addi %1, %c0_i32_9 : i32
    %c0_10 = arith.constant 0 : index
    %18 = arith.index_cast %17 : i32 to index
    %c2 = arith.constant 2 : index
    %c0_11 = arith.constant 0 : index
    %19 = vector.load %arg3[%c0_10, %18, %c2, %c0_11] : memref<1x18x18x8xf32, #tpu.memory_space<vmem>>, vector<1x16x16x8xf32>
    %20 = vector.shape_cast %19 : vector<1x16x16x8xf32> to vector<16x16x8xf32>
    %21 = vector.shape_cast %20 : vector<16x16x8xf32> to vector<256x8xf32>
    %c16 = arith.constant 16 : index
    %c0_12 = arith.constant 0 : index
    %22 = vector.load %arg4[%c16, %c0_12] : memref<72x128xf32, #tpu.memory_space<vmem>>, vector<8x128xf32>
    %cst_13 = arith.constant dense<0.000000e+00> : vector<256x128xf32>
    %23 = tpu.matmul %21, %22, %cst_13 {dimension_numbers = #tpu.dot_dimension_numbers<[1], [0], [0], [1], [0, 0, 1, 1], [], []>} : vector<256x8xf32>, vector<8x128xf32>, vector<256x128xf32> -> vector<256x128xf32>
    %24 = arith.addf %16, %23 : vector<256x128xf32>
    %c1_i32 = arith.constant 1 : i32
    %25 = arith.addi %1, %c1_i32 : i32
    %c0_14 = arith.constant 0 : index
    %26 = arith.index_cast %25 : i32 to index
    %c0_15 = arith.constant 0 : index
    %c0_16 = arith.constant 0 : index
    %27 = vector.load %arg3[%c0_14, %26, %c0_15, %c0_16] : memref<1x18x18x8xf32, #tpu.memory_space<vmem>>, vector<1x16x16x8xf32>
    %28 = vector.shape_cast %27 : vector<1x16x16x8xf32> to vector<16x16x8xf32>
    %29 = vector.shape_cast %28 : vector<16x16x8xf32> to vector<256x8xf32>
    %c24 = arith.constant 24 : index
    %c0_17 = arith.constant 0 : index
    %30 = vector.load %arg4[%c24, %c0_17] : memref<72x128xf32, #tpu.memory_space<vmem>>, vector<8x128xf32>
    %cst_18 = arith.constant dense<0.000000e+00> : vector<256x128xf32>
    %31 = tpu.matmul %29, %30, %cst_18 {dimension_numbers = #tpu.dot_dimension_numbers<[1], [0], [0], [1], [0, 0, 1, 1], [], []>} : vector<256x8xf32>, vector<8x128xf32>, vector<256x128xf32> -> vector<256x128xf32>
    %32 = arith.addf %24, %31 : vector<256x128xf32>
    %c1_i32_19 = arith.constant 1 : i32
    %33 = arith.addi %1, %c1_i32_19 : i32
    %c0_20 = arith.constant 0 : index
    %34 = arith.index_cast %33 : i32 to index
    %c1_21 = arith.constant 1 : index
    %c0_22 = arith.constant 0 : index
    %35 = vector.load %arg3[%c0_20, %34, %c1_21, %c0_22] : memref<1x18x18x8xf32, #tpu.memory_space<vmem>>, vector<1x16x16x8xf32>
    %36 = vector.shape_cast %35 : vector<1x16x16x8xf32> to vector<16x16x8xf32>
    %37 = vector.shape_cast %36 : vector<16x16x8xf32> to vector<256x8xf32>
    %c32 = arith.constant 32 : index
    %c0_23 = arith.constant 0 : index
    %38 = vector.load %arg4[%c32, %c0_23] : memref<72x128xf32, #tpu.memory_space<vmem>>, vector<8x128xf32>
    %cst_24 = arith.constant dense<0.000000e+00> : vector<256x128xf32>
    %39 = tpu.matmul %37, %38, %cst_24 {dimension_numbers = #tpu.dot_dimension_numbers<[1], [0], [0], [1], [0, 0, 1, 1], [], []>} : vector<256x8xf32>, vector<8x128xf32>, vector<256x128xf32> -> vector<256x128xf32>
    %40 = arith.addf %32, %39 : vector<256x128xf32>
    %c1_i32_25 = arith.constant 1 : i32
    %41 = arith.addi %1, %c1_i32_25 : i32
    %c0_26 = arith.constant 0 : index
    %42 = arith.index_cast %41 : i32 to index
    %c2_27 = arith.constant 2 : index
    %c0_28 = arith.constant 0 : index
    %43 = vector.load %arg3[%c0_26, %42, %c2_27, %c0_28] : memref<1x18x18x8xf32, #tpu.memory_space<vmem>>, vector<1x16x16x8xf32>
    %44 = vector.shape_cast %43 : vector<1x16x16x8xf32> to vector<16x16x8xf32>
    %45 = vector.shape_cast %44 : vector<16x16x8xf32> to vector<256x8xf32>
    %c40 = arith.constant 40 : index
    %c0_29 = arith.constant 0 : index
    %46 = vector.load %arg4[%c40, %c0_29] : memref<72x128xf32, #tpu.memory_space<vmem>>, vector<8x128xf32>
    %cst_30 = arith.constant dense<0.000000e+00> : vector<256x128xf32>
    %47 = tpu.matmul %45, %46, %cst_30 {dimension_numbers = #tpu.dot_dimension_numbers<[1], [0], [0], [1], [0, 0, 1, 1], [], []>} : vector<256x8xf32>, vector<8x128xf32>, vector<256x128xf32> -> vector<256x128xf32>
    %48 = arith.addf %40, %47 : vector<256x128xf32>
    %c2_i32 = arith.constant 2 : i32
    %49 = arith.addi %1, %c2_i32 : i32
    %c0_31 = arith.constant 0 : index
    %50 = arith.index_cast %49 : i32 to index
    %c0_32 = arith.constant 0 : index
    %c0_33 = arith.constant 0 : index
    %51 = vector.load %arg3[%c0_31, %50, %c0_32, %c0_33] : memref<1x18x18x8xf32, #tpu.memory_space<vmem>>, vector<1x16x16x8xf32>
    %52 = vector.shape_cast %51 : vector<1x16x16x8xf32> to vector<16x16x8xf32>
    %53 = vector.shape_cast %52 : vector<16x16x8xf32> to vector<256x8xf32>
    %c48 = arith.constant 48 : index
    %c0_34 = arith.constant 0 : index
    %54 = vector.load %arg4[%c48, %c0_34] : memref<72x128xf32, #tpu.memory_space<vmem>>, vector<8x128xf32>
    %cst_35 = arith.constant dense<0.000000e+00> : vector<256x128xf32>
    %55 = tpu.matmul %53, %54, %cst_35 {dimension_numbers = #tpu.dot_dimension_numbers<[1], [0], [0], [1], [0, 0, 1, 1], [], []>} : vector<256x8xf32>, vector<8x128xf32>, vector<256x128xf32> -> vector<256x128xf32>
    %56 = arith.addf %48, %55 : vector<256x128xf32>
    %c2_i32_36 = arith.constant 2 : i32
    %57 = arith.addi %1, %c2_i32_36 : i32
    %c0_37 = arith.constant 0 : index
    %58 = arith.index_cast %57 : i32 to index
    %c1_38 = arith.constant 1 : index
    %c0_39 = arith.constant 0 : index
    %59 = vector.load %arg3[%c0_37, %58, %c1_38, %c0_39] : memref<1x18x18x8xf32, #tpu.memory_space<vmem>>, vector<1x16x16x8xf32>
    %60 = vector.shape_cast %59 : vector<1x16x16x8xf32> to vector<16x16x8xf32>
    %61 = vector.shape_cast %60 : vector<16x16x8xf32> to vector<256x8xf32>
    %c56 = arith.constant 56 : index
    %c0_40 = arith.constant 0 : index
    %62 = vector.load %arg4[%c56, %c0_40] : memref<72x128xf32, #tpu.memory_space<vmem>>, vector<8x128xf32>
    %cst_41 = arith.constant dense<0.000000e+00> : vector<256x128xf32>
    %63 = tpu.matmul %61, %62, %cst_41 {dimension_numbers = #tpu.dot_dimension_numbers<[1], [0], [0], [1], [0, 0, 1, 1], [], []>} : vector<256x8xf32>, vector<8x128xf32>, vector<256x128xf32> -> vector<256x128xf32>
    %64 = arith.addf %56, %63 : vector<256x128xf32>
    %c2_i32_42 = arith.constant 2 : i32
    %65 = arith.addi %1, %c2_i32_42 : i32
    %c0_43 = arith.constant 0 : index
    %66 = arith.index_cast %65 : i32 to index
    %c2_44 = arith.constant 2 : index
    %c0_45 = arith.constant 0 : index
    %67 = vector.load %arg3[%c0_43, %66, %c2_44, %c0_45] : memref<1x18x18x8xf32, #tpu.memory_space<vmem>>, vector<1x16x16x8xf32>
    %68 = vector.shape_cast %67 : vector<1x16x16x8xf32> to vector<16x16x8xf32>
    %69 = vector.shape_cast %68 : vector<16x16x8xf32> to vector<256x8xf32>
    %c64 = arith.constant 64 : index
    %c0_46 = arith.constant 0 : index
    %70 = vector.load %arg4[%c64, %c0_46] : memref<72x128xf32, #tpu.memory_space<vmem>>, vector<8x128xf32>
    %cst_47 = arith.constant dense<0.000000e+00> : vector<256x128xf32>
    %71 = tpu.matmul %69, %70, %cst_47 {dimension_numbers = #tpu.dot_dimension_numbers<[1], [0], [0], [1], [0, 0, 1, 1], [], []>} : vector<256x8xf32>, vector<8x128xf32>, vector<256x128xf32> -> vector<256x128xf32>
    %72 = arith.addf %64, %71 : vector<256x128xf32>
    %c0_48 = arith.constant 0 : index
    %c0_49 = arith.constant 0 : index
    %73 = vector.load %arg5[%c0_48, %c0_49] : memref<1x128xf32, #tpu.memory_space<vmem>>, vector<1x128xf32>
    %74 = vector.broadcast %73 : vector<1x128xf32> to vector<256x128xf32>
    %75 = arith.addf %72, %74 : vector<256x128xf32>
    %cst_50 = arith.constant 0.000000e+00 : f32
    %76 = vector.broadcast %cst_50 : f32 to vector<256x128xf32>
    %77 = arith.maximumf %75, %76 : vector<256x128xf32>
    %78 = vector.shape_cast %77 : vector<256x128xf32> to vector<1x16x16x128xf32>
    %c0_51 = arith.constant 0 : index
    %c0_52 = arith.constant 0 : index
    %c0_53 = arith.constant 0 : index
    %c0_54 = arith.constant 0 : index
    %79 = vector.load %arg6[%c0_51, %c0_52, %c0_53, %c0_54] : memref<1x16x16x128xf32, #tpu.memory_space<vmem>>, vector<1x16x16x128xf32>
    tpu.vector_store %arg6[%c0_51, %c0_52, %c0_53, %c0_54], %78 {strides = array<i32>} : memref<1x16x16x128xf32, #tpu.memory_space<vmem>>, vector<1x16x16x128xf32>,
    return
  }
  func.func @transform_0(%arg0: i32, %arg1: i32, %arg2: i32) -> (i32, i32, i32, i32) {
    %c0_i32 = arith.constant 0 : i32
    %c0_i32_0 = arith.constant 0 : i32
    %c0_i32_1 = arith.constant 0 : i32
    %c0_i32_2 = arith.constant 0 : i32
    return %arg0, %c0_i32, %c0_i32_0, %c0_i32_1 : i32, i32, i32, i32
  }
  func.func @transform_1(%arg0: i32, %arg1: i32, %arg2: i32) -> (i32, i32) {
    %c0_i32 = arith.constant 0 : i32
    %c0_i32_0 = arith.constant 0 : i32
    %c0_i32_1 = arith.constant 0 : i32
    return %c0_i32, %c0_i32_0 : i32, i32
  }
  func.func @transform_2(%arg0: i32, %arg1: i32, %arg2: i32) -> (i32, i32) {
    %c0_i32 = arith.constant 0 : i32
    %c0_i32_0 = arith.constant 0 : i32
    %c0_i32_1 = arith.constant 0 : i32
    return %c0_i32, %c0_i32_0 : i32, i32
  }
  func.func @transform_3(%arg0: i32, %arg1: i32, %arg2: i32) -> (i32, i32, i32, i32) {
    %c0_i32 = arith.constant 0 : i32
    %c0_i32_0 = arith.constant 0 : i32
    return %arg0, %arg1, %c0_i32, %arg2 : i32, i32, i32, i32
  }
}

</mosaic_0001>

<llo_original>
// kernel: tpu_custom_call.1
$region0: #{tpu_custom_call.1}
  #allocation0 [shape = 'u32[]', space=smem, size = 0x4, offset = 0x4, fixed_abs, tag = 'smem constant byte address 0x4 - core index']
  #allocation1 [shape = 'u32[144,128]{1,0:T(1,128)}', space=vmem, size = 0x12000, scoped, tag = 'internal scratch']
  %s0 = inlined_call_operand.hbm [shape: f32[2,18,18,8], index: 0, kind: input, shape index: {}]
  %s1 = inlined_call_operand.hbm [shape: f32[72,128], index: 1, kind: input, shape index: {}]
  %s2 = inlined_call_operand.hbm [shape: f32[1,128], index: 2, kind: input, shape index: {}]
  %s3 = inlined_call_operand.hbm [shape: f32[2,16,16,128], index: 3, kind: output, shape index: {}]
  %s4 = sld [smem:[#allocation0]]
  $region57: #{tpu_custom_call.1} parent=0
    _
  %s6 = ssub.s32 1, %s4
  %s7 = scalar_select 0, %s6, %s4
  $region1: #{tpu_custom_call.1} parent=0
    #allocation2 [shape = 'u8[442368]{0}', space=vmem, size = 0x6c000, scoped, tag = 'input window, operand 0']
    #allocation3 [shape = 's32[2]{0}', space=sflag, size = 0x8, scoped, tag = 'scoped memory for tpu_custom_call.1']
    #allocation4 [shape = 's32[2]{0}', space=sflag, size = 0x8, scoped, tag = 'scoped memory for tpu_custom_call.1']
    #allocation5 [shape = 'u8[36864]{0}', space=vmem, size = 0x9000, scoped, tag = 'input window, operand 1, single buffered']
    #allocation6 [shape = 's32[1]{0}', space=sflag, size = 0x4, scoped, tag = 'scoped memory for tpu_custom_call.1']
    #allocation7 [shape = 'u8[512]{0}', space=vmem, size = 0x400, scoped, tag = 'input window, operand 2, single buffered']
    #allocation8 [shape = 'u8[262144]{0}', space=vmem, size = 0x40000, scoped, tag = 'output window, operand 0']
    %8 = vsyncpa [#allocation3], 0
    %s9 = scalar_lea.sflag [#allocation3], 1
    %10 = vsyncpa %s9, 0
    %11 = vsyncpa [#allocation6], 0
    %12 = vsyncpa [#allocation4], 0
    %s13 = scalar_lea.sflag [#allocation4], 1
    %14 = vsyncpa %s13, 0
    loop: start=0, step=1, limit=4
    $region2: #{tpu_custom_call.1} parent=1 // loop_pre_header
      _
    $region3: #{tpu_custom_call.1} parent=1 // loop_header
      %s16 = sphi 0, %s20
      %p17 = scmp.ge.s32.totalorder %s16, 4
      %s23 = sphi 0, %s42
      %s24 = sphi 0, %s38
      %s25 = sphi 0, %s34
      %s26 = sphi 0, %s23
      %s27 = sphi 0, %s24
      %s28 = sphi 0, %s25
      %s29 = sphi 0, %s26
      %s30 = sphi 0, %s27
      %s31 = sphi 0, %s28
      %s45 = sphi 0, %s47
      %s48 = sphi 0, %s45
      %s49 = sphi 0, %s48
      %s65 = sphi 0, %s49
      %s69 = sphi 0, %s69
      %s71 = sphi 0, %s69
      %s72 = sphi 0, %s71
      %s86 = sphi 0, %s72
      %s90 = sphi 0, %s90
      %s92 = sphi 0, %s90
      %s93 = sphi 0, %s92
      %s107 = sphi 0, %s93
      %s117 = sphi 0, %s119
      %s120 = sphi 0, %s117
      %s121 = sphi 0, %s120
      %s137 = sphi 0, %s121
    $region4: #{tpu_custom_call.1} parent=1 // loop_header_branch
      %19 = sbr.rel (%p17) target = $region8
    $region5: #{tpu_custom_call.1} parent=1 // loop_body
      %s21 = ssub.s32 %s16, 1
      %s22 = ssub.s32 %s16, 2
      %s32 = sadd.s32 1, %s25
      %p33 = scmp.ge.s32.totalorder %s32, 1
      %s34 = scalar_select %p33, 0, %s32
      %s35 = sadd.s32 1, %s24
      %s36 = scalar_select %p33, %s35, %s24
      %p37 = scmp.ge.s32.totalorder %s36, 1
      %s38 = scalar_select %p37, 0, %s36
      %s39 = sadd.s32 1, %s23
      %s40 = scalar_select %p37, %s39, %s23
      %p41 = scmp.ge.s32.totalorder %s40, 2
      %s42 = scalar_select %p41, 0, %s40
      %s43 = ssub.s32 %s23, %s42
      %p44 = scmp.eq.s32.totalorder %s43, 0
      %s46 = sadd.s32 %s45, 1
      %s47 = scalar_select %p44, %s45, %s46
      %p50 = pneg %p44
      %p51 = scmp.eq.s32.totalorder %s16, 1
      %p52 = por %p50, %p51
      %p53 = scmp.ne.s32.totalorder %s45, %s48
      %p54 = scmp.eq.s32.totalorder %s16, 0
      %p55 = por %p53, %p54
      %p56 = scmp.ne.s32.totalorder %s45, %s48
      %p57 = scmp.eq.s32.totalorder %s21, 1
      %p58 = por %p56, %p57
      %p59 = scmp.ne.s32.totalorder %s48, %s49
      %p60 = scmp.eq.s32.totalorder %s21, 0
      %p61 = por %p59, %p60
      %p62 = scmp.ne.s32.totalorder %s48, %s49
      %p63 = scmp.eq.s32.totalorder %s22, 1
      %p64 = por %p62, %p63
      %p66 = scmp.ne.s32.totalorder %s49, %s65
      %p67 = scmp.eq.s32.totalorder %s22, 0
      %p68 = por %p66, %p67
      %s70 = sadd.s32 %s69, 1
      %p73 = scmp.eq.s32.totalorder %s16, 1
      %p74 = scmp.ne.s32.totalorder %s69, %s71
      %p75 = scmp.eq.s32.totalorder %s16, 0
      %p76 = por %p74, %p75
      %p77 = scmp.ne.s32.totalorder %s69, %s71
      %p78 = scmp.eq.s32.totalorder %s21, 1
      %p79 = por %p77, %p78
      %p80 = scmp.ne.s32.totalorder %s71, %s72
      %p81 = scmp.eq.s32.totalorder %s21, 0
      %p82 = por %p80, %p81
      %p83 = scmp.ne.s32.totalorder %s71, %s72
      %p84 = scmp.eq.s32.totalorder %s22, 1
      %p85 = por %p83, %p84
      %p87 = scmp.ne.s32.totalorder %s72, %s86
      %p88 = scmp.eq.s32.totalorder %s22, 0
      %p89 = por %p87, %p88
      %s91 = sadd.s32 %s90, 1
      %p94 = scmp.eq.s32.totalorder %s16, 1
      %p95 = scmp.ne.s32.totalorder %s90, %s92
      %p96 = scmp.eq.s32.totalorder %s16, 0
      %p97 = por %p95, %p96
      %p98 = scmp.ne.s32.totalorder %s90, %s92
      %p99 = scmp.eq.s32.totalorder %s21, 1
      %p100 = por %p98, %p99
      %p101 = scmp.ne.s32.totalorder %s92, %s93
      %p102 = scmp.eq.s32.totalorder %s21, 0
      %p103 = por %p101, %p102
      %p104 = scmp.ne.s32.totalorder %s92, %s93
      %p105 = scmp.eq.s32.totalorder %s22, 1
      %p106 = por %p104, %p105
      %p108 = scmp.ne.s32.totalorder %s93, %s107
      %p109 = scmp.eq.s32.totalorder %s22, 0
      %p110 = por %p108, %p109
      %s111 = ssub.s32 %s23, %s42
      %s112 = ssub.s32 %s24, %s38
      %s113 = sor.u32 %s111, %s112
      %s114 = ssub.s32 %s25, %s34
      %s115 = sor.u32 %s113, %s114
      %p116 = scmp.eq.s32.totalorder %s115, 0
      %s118 = sadd.s32 %s117, 1
      %s119 = scalar_select %p116, %s117, %s118
      %p122 = pneg %p116
      %p123 = scmp.eq.s32.totalorder %s16, 1
      %p124 = por %p122, %p123
      %p125 = scmp.ne.s32.totalorder %s117, %s120
      %p126 = scmp.eq.s32.totalorder %s16, 0
      %p127 = por %p125, %p126
      %p128 = scmp.ne.s32.totalorder %s117, %s120
      %p129 = scmp.eq.s32.totalorder %s21, 1
      %p130 = por %p128, %p129
      %p131 = scmp.ne.s32.totalorder %s120, %s121
      %p132 = scmp.eq.s32.totalorder %s21, 0
      %p133 = por %p131, %p132
      %p134 = scmp.ne.s32.totalorder %s120, %s121
      %p135 = scmp.eq.s32.totalorder %s22, 1
      %p136 = por %p134, %p135
      %p138 = scmp.ne.s32.totalorder %s121, %s137
      %p139 = scmp.eq.s32.totalorder %s22, 0
      %p140 = por %p138, %p139
      %p141 = scmp.le.s32.totalorder 1, %s16
      %p142 = scmp.lt.s32.totalorder %s16, 3
      %p143 = pnand %p141, %p142
      %p144 = pneg %p143
      // Predicated region
      $region9: #{tpu_custom_call.1} parent=5 // pred_check
        _
      $region10: #{tpu_custom_call.1} parent=5 // pred_check_branch
        %146 = sbr.rel (%p143) target = $region12
      $region11: #{tpu_custom_call.1} parent=5 // pred_region
        %s147 = ssub.s32 %s16, 1
        // Predicated region
        $region13: #{tpu_custom_call.1} parent=11 // pred_check
          %p148 = pneg %p82
        $region14: #{tpu_custom_call.1} parent=11 // pred_check_branch
          %150 = sbr.rel (%p148) target = $region16
        $region15: #{tpu_custom_call.1} parent=11 // pred_region
          %s152 = ssub.s32 1152, 1152
          %153 = vsyncadd [#allocation6], %s152
          %s154 = sshll.u32 [#allocation5], 4
          %s155 = int_to_ptr.vmem [resolvable:$true] %s154
          %160 = dma.hbm_to_vmem [thread:$0]  %s1, 1152, %s155, [#allocation6], 128, 128, 8
        $region16: #{tpu_custom_call.1} parent=11 // pred_fallthru
          _
        // Predicated region
        $region17: #{tpu_custom_call.1} parent=11 // pred_check
          %p161 = pneg %p103
        $region18: #{tpu_custom_call.1} parent=11 // pred_check_branch
          %163 = sbr.rel (%p161) target = $region20
        $region19: #{tpu_custom_call.1} parent=11 // pred_region
          %s165 = ssub.s32 16, 16
          %166 = vsyncadd [#allocation6], %s165
          %s168 = sshll.u32 [#allocation7], 4
          %s169 = int_to_ptr.vmem [resolvable:$true] %s168
          %171 = dma.hbm_to_vmem [thread:$0]  %s2, 16, %s169, [#allocation6]
        $region20: #{tpu_custom_call.1} parent=11 // pred_fallthru
          _
      $region12: #{tpu_custom_call.1} parent=5 // pred_fallthru
        _
      %p172 = scmp.lt.s32.totalorder %s16, 2
      // Predicated region
      $region21: #{tpu_custom_call.1} parent=5 // pred_check
        %p173 = pneg %p172
      $region22: #{tpu_custom_call.1} parent=5 // pred_check_branch
        %175 = sbr.rel (%p173) target = $region24
      $region23: #{tpu_custom_call.1} parent=5 // pred_region
        // Predicated region
        $region25: #{tpu_custom_call.1} parent=23 // pred_check
          %p176 = pneg %p55
        $region26: #{tpu_custom_call.1} parent=23 // pred_check_branch
          %178 = sbr.rel (%p176) target = $region28
        $region27: #{tpu_custom_call.1} parent=23 // pred_region
          %s179 = sand.u32 %s45, 1
          %s180 = scalar_lea.sflag [#allocation3], %s179
          %s181 = sand.u32 %s45, 1
          %s182 = smul.addr %s181, 432
          %s183 = scalar_lea.vmem [#allocation2], %s182
          %s185 = ssub.s32 6912, 6912
          %186 = vsyncadd %s180, %s185
          %s187 = smul.addr %s23, 54
          %s188 = smul.addr %s187, 128
          %s189 = scalar_lea.hbm %s0, %s188
          %s190 = sshll.u32 %s183, 4
          %s191 = int_to_ptr.vmem [resolvable:$true] %s190
          %196 = dma.hbm_to_vmem [thread:$0]  %s189, 6912, %s191, %s180, 128, 128, 8
        $region28: #{tpu_custom_call.1} parent=23 // pred_fallthru
          _
      $region24: #{tpu_custom_call.1} parent=5 // pred_fallthru
        _
      %p197 = scmp.le.s32.totalorder 1, %s16
      %p198 = scmp.lt.s32.totalorder %s16, 3
      %p199 = pnand %p197, %p198
      %p200 = pneg %p199
      // Predicated region
      $region29: #{tpu_custom_call.1} parent=5 // pred_check
        _
      $region30: #{tpu_custom_call.1} parent=5 // pred_check_branch
        %202 = sbr.rel (%p199) target = $region32
      $region31: #{tpu_custom_call.1} parent=5 // pred_region
        %s203 = ssub.s32 %s16, 1
        %s204 = sand.u32 %s48, 1
        %s205 = scalar_lea.sflag [#allocation3], %s204
        %s206 = sand.u32 %s48, 1
        %s207 = smul.addr %s206, 432
        %s208 = scalar_lea.vmem [#allocation2], %s207
        // Predicated region
        $region33: #{tpu_custom_call.1} parent=31 // pred_check
          %p209 = pneg %p61
        $region34: #{tpu_custom_call.1} parent=31 // pred_check_branch
          %211 = sbr.rel (%p209) target = $region36
        $region35: #{tpu_custom_call.1} parent=31 // pred_region
          %212 = dma.done %s205, 6912
        $region36: #{tpu_custom_call.1} parent=31 // pred_fallthru
          _
        // Predicated region
        $region37: #{tpu_custom_call.1} parent=31 // pred_check
          %p213 = pneg %p82
        $region38: #{tpu_custom_call.1} parent=31 // pred_check_branch
          %215 = sbr.rel (%p213) target = $region40
        $region39: #{tpu_custom_call.1} parent=31 // pred_region
          %216 = dma.done [#allocation6], 1152
        $region40: #{tpu_custom_call.1} parent=31 // pred_fallthru
          _
        // Predicated region
        $region41: #{tpu_custom_call.1} parent=31 // pred_check
          %p217 = pneg %p103
        $region42: #{tpu_custom_call.1} parent=31 // pred_check_branch
          %219 = sbr.rel (%p217) target = $region44
        $region43: #{tpu_custom_call.1} parent=31 // pred_region
          %220 = dma.done [#allocation6], 16
        $region44: #{tpu_custom_call.1} parent=31 // pred_fallthru
          _
        %s221 = sand.u32 %s48, 1
        %s222 = scalar_lea.sflag [#allocation3], %s221
        %s223 = sand.u32 %s48, 1
        %s224 = smul.addr %s223, 432
        %s225 = scalar_lea.vmem [#allocation2], %s224
        %p226 = pneg %p61
        %p227 = pneg %p58
        %p228 = pneg %p82
        %p229 = pneg %p79
        %p230 = pneg %p103
        %p231 = pneg %p100
        %p232 = pneg %p133
        %p233 = pneg %p130
        %s234 = sand.u32 %s120, 1
        %s235 = scalar_lea.sflag [#allocation4], %s234
        %s236 = sand.u32 %s120, 1
        %s237 = smul.addr %s236, 256
        %s238 = scalar_lea.vmem [#allocation8], %s237
        %s239 = smul.u32 16, %s27
        %s240 = smul.u32 %s27, 16
        %s241 = smul.u32 %s240, 24
        %s242 = scalar_lea.vmem %s208, %s241 [#allocation2]
        %v243 = vld [vmem:[%s242] sm:$0xff]
        %v244 = vld [vmem:[%s242 + $0x8] sm:$0xff]
        %v245 = vld [vmem:[%s242 + $0x18] sm:$0xff]
        %v246 = vld [vmem:[%s242 + $0x20] sm:$0xff]
        %v247 = vld [vmem:[%s242 + $0x30] sm:$0xff]
        %v248 = vld [vmem:[%s242 + $0x38] sm:$0xff]
        %v249 = vld [vmem:[%s242 + $0x48] sm:$0xff]
        %v250 = vld [vmem:[%s242 + $0x50] sm:$0xff]
        %v251 = vld [vmem:[%s242 + $0x60] sm:$0xff]
        %v252 = vld [vmem:[%s242 + $0x68] sm:$0xff]
        %v253 = vld [vmem:[%s242 + $0x78] sm:$0xff]
        %v254 = vld [vmem:[%s242 + $0x80] sm:$0xff]
        %v255 = vld [vmem:[%s242 + $0x90] sm:$0xff]
        %v256 = vld [vmem:[%s242 + $0x98] sm:$0xff]
        %v257 = vld [vmem:[%s242 + $0xa8] sm:$0xff]
        %v258 = vld [vmem:[%s242 + $0xb0] sm:$0xff]
        %v259 = vld [vmem:[%s242 + $0xc0] sm:$0xff]
        %v260 = vld [vmem:[%s242 + $0xc8] sm:$0xff]
        %v261 = vld [vmem:[%s242 + $0xd8] sm:$0xff]
        %v262 = vld [vmem:[%s242 + $0xe0] sm:$0xff]
        %v263 = vld [vmem:[%s242 + $0xf0] sm:$0xff]
        %v264 = vld [vmem:[%s242 + $0xf8] sm:$0xff]
        %v265 = vld [vmem:[%s242 + $0x108] sm:$0xff]
        %v266 = vld [vmem:[%s242 + $0x110] sm:$0xff]
        %v267 = vld [vmem:[%s242 + $0x120] sm:$0xff]
        %v268 = vld [vmem:[%s242 + $0x128] sm:$0xff]
        %v269 = vld [vmem:[%s242 + $0x138] sm:$0xff]
        %v270 = vld [vmem:[%s242 + $0x140] sm:$0xff]
        %v271 = vld [vmem:[%s242 + $0x150] sm:$0xff]
        %v272 = vld [vmem:[%s242 + $0x158] sm:$0xff]
        %v273 = vld [vmem:[%s242 + $0x168] sm:$0xff]
        %v274 = vld [vmem:[%s242 + $0x170] sm:$0xff]
        %v275 = vld [vmem:[#allocation5] sm:$0xff]
        %v276 = vld [vmem:[%s242 + $0x1] sm:$0xff]
        %v277 = vld [vmem:[%s242 + $0x9] sm:$0xff]
        %v278 = vld [vmem:[%s242 + $0x19] sm:$0xff]
        %v279 = vld [vmem:[%s242 + $0x21] sm:$0xff]
        %v280 = vld [vmem:[%s242 + $0x31] sm:$0xff]
        %v281 = vld [vmem:[%s242 + $0x39] sm:$0xff]
        %v282 = vld [vmem:[%s242 + $0x49] sm:$0xff]
        %v283 = vld [vmem:[%s242 + $0x51] sm:$0xff]
        %v284 = vld [vmem:[%s242 + $0x61] sm:$0xff]
        %v285 = vld [vmem:[%s242 + $0x69] sm:$0xff]
        %v286 = vld [vmem:[%s242 + $0x79] sm:$0xff]
        %v287 = vld [vmem:[%s242 + $0x81] sm:$0xff]
        %v288 = vld [vmem:[%s242 + $0x91] sm:$0xff]
        %v289 = vld [vmem:[%s242 + $0x99] sm:$0xff]
        %v290 = vld [vmem:[%s242 + $0xa9] sm:$0xff]
        %v291 = vld [vmem:[%s242 + $0xb1] sm:$0xff]
        %v292 = vld [vmem:[%s242 + $0xc1] sm:$0xff]
        %v293 = vld [vmem:[%s242 + $0xc9] sm:$0xff]
        %v294 = vld [vmem:[%s242 + $0xd9] sm:$0xff]
        %v295 = vld [vmem:[%s242 + $0xe1] sm:$0xff]
        %v296 = vld [vmem:[%s242 + $0xf1] sm:$0xff]
        %v297 = vld [vmem:[%s242 + $0xf9] sm:$0xff]
        %v298 = vld [vmem:[%s242 + $0x109] sm:$0xff]
        %v299 = vld [vmem:[%s242 + $0x111] sm:$0xff]
        %v300 = vld [vmem:[%s242 + $0x121] sm:$0xff]
        %v301 = vld [vmem:[%s242 + $0x129] sm:$0xff]
        %v302 = vld [vmem:[%s242 + $0x139] sm:$0xff]
        %v303 = vld [vmem:[%s242 + $0x141] sm:$0xff]
        %v304 = vld [vmem:[%s242 + $0x151] sm:$0xff]
        %v305 = vld [vmem:[%s242 + $0x159] sm:$0xff]
        %v306 = vld [vmem:[%s242 + $0x169] sm:$0xff]
        %v307 = vld [vmem:[%s242 + $0x171] sm:$0xff]
        %v308 = vld [vmem:[#allocation5 + $0x8] sm:$0xff]
        %vm309 = vcmask 64512
        %v311 = vsel %vm309, %v276, 0
        %v314 = vsel %vm309, %v277, 0
        %v317 = vsel %vm309, %v278, 0
        %v320 = vsel %vm309, %v279, 0
        %v323 = vsel %vm309, %v280, 0
        %v326 = vsel %vm309, %v281, 0
        %v329 = vsel %vm309, %v282, 0
        %v332 = vsel %vm309, %v283, 0
        %v335 = vsel %vm309, %v284, 0
        %v338 = vsel %vm309, %v285, 0
        %v341 = vsel %vm309, %v286, 0
        %v344 = vsel %vm309, %v287, 0
        %v347 = vsel %vm309, %v288, 0
        %v350 = vsel %vm309, %v289, 0
        %v353 = vsel %vm309, %v290, 0
        %v356 = vsel %vm309, %v291, 0
        %v359 = vsel %vm309, %v292, 0
        %v362 = vsel %vm309, %v293, 0
        %v365 = vsel %vm309, %v294, 0
        %v368 = vsel %vm309, %v295, 0
        %v371 = vsel %vm309, %v296, 0
        %v374 = vsel %vm309, %v297, 0
        %v377 = vsel %vm309, %v298, 0
        %v380 = vsel %vm309, %v299, 0
        %v383 = vsel %vm309, %v300, 0
        %v386 = vsel %vm309, %v301, 0
        %v389 = vsel %vm309, %v302, 0
        %v392 = vsel %vm309, %v303, 0
        %v395 = vsel %vm309, %v304, 0
        %v398 = vsel %vm309, %v305, 0
        %v401 = vsel %vm309, %v306, 0
        %v404 = vsel %vm309, %v307, 0
        %406 = vmatprep.subr.mxu0 0.0
        %407 = vmatpush1.msra.mxu0 %v308
        %408 = vmatprep.subr.mxu0 0.0
        %409 = vmatpush1.msra.mxu0 0.0
        %410 = vmatprep.subr.mxu0 0.0
        %411 = vmatpush1.msra.mxu0 0.0
        %412 = vmatprep.subr.mxu0 0.0
        %413 = vmatpush1.msra.mxu0 0.0
        %414 = vmatprep.subr.mxu0 0.0
        %415 = vmatpush1.msra.mxu0 0.0
        %416 = vmatprep.subr.mxu0 0.0
        %417 = vmatpush1.msra.mxu0 0.0
        %418 = vmatprep.subr.mxu0 0.0
        %419 = vmatpush1.msra.mxu0 0.0
        %420 = vmatprep.subr.mxu0 0.0
        %421 = vmatpush1.msra.mxu0 0.0
        %422 = vmatprep.subr.mxu0 0.0
        %423 = vmatpush1.msra.mxu0 0.0
        %424 = vmatprep.subr.mxu0 0.0
        %425 = vmatpush1.msra.mxu0 0.0
        %426 = vmatprep.subr.mxu0 0.0
        %427 = vmatpush1.msra.mxu0 0.0
        %428 = vmatprep.subr.mxu0 0.0
        %429 = vmatpush1.msra.mxu0 0.0
        %430 = vmatprep.subr.mxu0 0.0
        %431 = vmatpush1.msra.mxu0 0.0
        %432 = vmatprep.subr.mxu0 0.0
        %433 = vmatpush1.msra.mxu0 0.0
        %434 = vmatprep.subr.mxu0 0.0
        %435 = vmatpush1.msra.mxu0 0.0
        %436 = vmatprep.subr.mxu0 0.0
        %437 = vmatpush1.msra.mxu0 0.0
        %438 = vmatprep.subr.mxu0 0.0
        %439 = vmatpush1.msra.mxu0 0.0
        %440 = vmatprep.subr.mxu0 0.0
        %441 = vmatpush1.msra.mxu0 0.0
        %442 = vmatprep.subr.mxu0 0.0
        %443 = vmatpush1.msra.mxu0 0.0
        %444 = vmatprep.subr.mxu0 0.0
        %445 = vmatpush1.msra.mxu0 0.0
        %446 = vmatprep.subr.mxu0 0.0
        %447 = vmatpush1.msra.mxu0 0.0
        %448 = vmatprep.subr.mxu0 0.0
        %449 = vmatpush1.msra.mxu0 0.0
        %450 = vmatprep.subr.mxu0 0.0
        %451 = vmatpush1.msra.mxu0 0.0
        %452 = vmatprep.subr.mxu0 0.0
        %453 = vmatpush1.msra.mxu0 0.0
        %454 = vmatprep.subr.mxu0 0.0
        %455 = vmatpush1.msra.mxu0 0.0
        %456 = vmatprep.subr.mxu0 0.0
        %457 = vmatpush1.msra.mxu0 0.0
        %458 = vmatprep.subr.mxu0 0.0
        %459 = vmatpush1.msra.mxu0 0.0
        %460 = vmatprep.subr.mxu0 0.0
        %461 = vmatpush1.msra.mxu0 0.0
        %462 = vmatprep.subr.mxu0 0.0
        %463 = vmatpush1.msra.mxu0 0.0
        %464 = vmatprep.subr.mxu0 0.0
        %465 = vmatpush1.msra.mxu0 0.0
        %466 = vmatprep.subr.mxu0 0.0
        %467 = vmatpush1.msra.mxu0 0.0
        %468 = vmatprep.subr.mxu0 0.0
        %469 = vmatpush1.msra.mxu0 0.0
        %470 = vmatprep.mubr.f32.mxu0 0.0
        %471 = vmatmul.mubr.f32.gmra.mrb[0].mxu0 %v311
        %v472 = vpop.f32.mrb[0].mxu0
        %v473 = vadd.f32 0.0, %v472
        %v474 = vpop.f32.mrb[0].mxu0
        %475 = vmatprep.mubr.f32.mxu0 0.0
        %476 = vmatmul.mubr.f32.gmra.mrb[0].mxu0 %v314
        %v477 = vpop.f32.mrb[0].mxu0
        %v478 = vadd.f32 0.0, %v477
        %v479 = vpop.f32.mrb[0].mxu0
        %480 = vmatprep.mubr.f32.mxu0 0.0
        %481 = vmatmul.mubr.f32.gmra.mrb[0].mxu0 %v317
        %v482 = vpop.f32.mrb[0].mxu0
        %v483 = vadd.f32 0.0, %v482
        %v484 = vpop.f32.mrb[0].mxu0
        %485 = vmatprep.mubr.f32.mxu0 0.0
        %486 = vmatmul.mubr.f32.gmra.mrb[0].mxu0 %v320
        %v487 = vpop.f32.mrb[0].mxu0
        %v488 = vadd.f32 0.0, %v487
        %v489 = vpop.f32.mrb[0].mxu0
        %490 = vmatprep.mubr.f32.mxu0 0.0
        %491 = vmatmul.mubr.f32.gmra.mrb[0].mxu0 %v323
        %v492 = vpop.f32.mrb[0].mxu0
        %v493 = vadd.f32 0.0, %v492
        %v494 = vpop.f32.mrb[0].mxu0
        %495 = vmatprep.mubr.f32.mxu0 0.0
        %496 = vmatmul.mubr.f32.gmra.mrb[0].mxu0 %v326
        %v497 = vpop.f32.mrb[0].mxu0
        %v498 = vadd.f32 0.0, %v497
        %v499 = vpop.f32.mrb[0].mxu0
        %500 = vmatprep.mubr.f32.mxu0 0.0
        %501 = vmatmul.mubr.f32.gmra.mrb[0].mxu0 %v329
        %v502 = vpop.f32.mrb[0].mxu0
        %v503 = vadd.f32 0.0, %v502
        %v504 = vpop.f32.mrb[0].mxu0
        %505 = vmatprep.mubr.f32.mxu0 0.0
        %506 = vmatmul.mubr.f32.gmra.mrb[0].mxu0 %v332
        %v507 = vpop.f32.mrb[0].mxu0
        %v508 = vadd.f32 0.0, %v507
        %v509 = vpop.f32.mrb[0].mxu0
        %510 = vmatprep.mubr.f32.mxu0 0.0
        %511 = vmatmul.mubr.f32.gmra.mrb[0].mxu0 %v335
        %v512 = vpop.f32.mrb[0].mxu0
        %v513 = vadd.f32 0.0, %v512
        %v514 = vpop.f32.mrb[0].mxu0
        %515 = vmatprep.mubr.f32.mxu0 0.0
        %516 = vmatmul.mubr.f32.gmra.mrb[0].mxu0 %v338
        %v517 = vpop.f32.mrb[0].mxu0
        %v518 = vadd.f32 0.0, %v517
        %v519 = vpop.f32.mrb[0].mxu0
        %520 = vmatprep.mubr.f32.mxu0 0.0
        %521 = vmatmul.mubr.f32.gmra.mrb[0].mxu0 %v341
        %v522 = vpop.f32.mrb[0].mxu0
        %v523 = vadd.f32 0.0, %v522
        %v524 = vpop.f32.mrb[0].mxu0
        %525 = vmatprep.mubr.f32.mxu0 0.0
        %526 = vmatmul.mubr.f32.gmra.mrb[0].mxu0 %v344
        %v527 = vpop.f32.mrb[0].mxu0
        %v528 = vadd.f32 0.0, %v527
        %v529 = vpop.f32.mrb[0].mxu0
        %530 = vmatprep.mubr.f32.mxu0 0.0
        %531 = vmatmul.mubr.f32.gmra.mrb[0].mxu0 %v347
        %v532 = vpop.f32.mrb[0].mxu0
        %v533 = vadd.f32 0.0, %v532
        %v534 = vpop.f32.mrb[0].mxu0
        %535 = vmatprep.mubr.f32.mxu0 0.0
        %536 = vmatmul.mubr.f32.gmra.mrb[0].mxu0 %v350
        %v537 = vpop.f32.mrb[0].mxu0
        %v538 = vadd.f32 0.0, %v537
        %v539 = vpop.f32.mrb[0].mxu0
        %540 = vmatprep.mubr.f32.mxu0 0.0
        %541 = vmatmul.mubr.f32.gmra.mrb[0].mxu0 %v353
        %v542 = vpop.f32.mrb[0].mxu0
        %v543 = vadd.f32 0.0, %v542
        %v544 = vpop.f32.mrb[0].mxu0
        %545 = vmatprep.mubr.f32.mxu0 0.0
        %546 = vmatmul.mubr.f32.gmra.mrb[0].mxu0 %v356
        %v547 = vpop.f32.mrb[0].mxu0
        %v548 = vadd.f32 0.0, %v547
        %v549 = vpop.f32.mrb[0].mxu0
        %550 = vmatprep.mubr.f32.mxu0 0.0
        %551 = vmatmul.mubr.f32.gmra.mrb[0].mxu0 %v359
        %v552 = vpop.f32.mrb[0].mxu0
        %v553 = vadd.f32 0.0, %v552
        %v554 = vpop.f32.mrb[0].mxu0
        %555 = vmatprep.mubr.f32.mxu0 0.0
        %556 = vmatmul.mubr.f32.gmra.mrb[0].mxu0 %v362
        %v557 = vpop.f32.mrb[0].mxu0
        %v558 = vadd.f32 0.0, %v557
        %v559 = vpop.f32.mrb[0].mxu0
        %560 = vmatprep.mubr.f32.mxu0 0.0
        %561 = vmatmul.mubr.f32.gmra.mrb[0].mxu0 %v365
        %v562 = vpop.f32.mrb[0].mxu0
        %v563 = vadd.f32 0.0, %v562
        %v564 = vpop.f32.mrb[0].mxu0
        %565 = vmatprep.mubr.f32.mxu0 0.0
        %566 = vmatmul.mubr.f32.gmra.mrb[0].mxu0 %v368
        %v567 = vpop.f32.mrb[0].mxu0
        %v568 = vadd.f32 0.0, %v567
        %v569 = vpop.f32.mrb[0].mxu0
        %570 = vmatprep.mubr.f32.mxu0 0.0
        %571 = vmatmul.mubr.f32.gmra.mrb[0].mxu0 %v371
        %v572 = vpop.f32.mrb[0].mxu0
        %v573 = vadd.f32 0.0, %v572
        %v574 = vpop.f32.mrb[0].mxu0
        %575 = vmatprep.mubr.f32.mxu0 0.0
        %576 = vmatmul.mubr.f32.gmra.mrb[0].mxu0 %v374
        %v577 = vpop.f32.mrb[0].mxu0
        %v578 = vadd.f32 0.0, %v577
        %v579 = vpop.f32.mrb[0].mxu0
        %580 = vmatprep.mubr.f32.mxu0 0.0
        %581 = vmatmul.mubr.f32.gmra.mrb[0].mxu0 %v377
        %v582 = vpop.f32.mrb[0].mxu0
        %v583 = vadd.f32 0.0, %v582
        %v584 = vpop.f32.mrb[0].mxu0
        %585 = vmatprep.mubr.f32.mxu0 0.0
        %586 = vmatmul.mubr.f32.gmra.mrb[0].mxu0 %v380
        %v587 = vpop.f32.mrb[0].mxu0
        %v588 = vadd.f32 0.0, %v587
        %v589 = vpop.f32.mrb[0].mxu0
        %590 = vmatprep.mubr.f32.mxu0 0.0
        %591 = vmatmul.mubr.f32.gmra.mrb[0].mxu0 %v383
        %v592 = vpop.f32.mrb[0].mxu0
        %v593 = vadd.f32 0.0, %v592
        %v594 = vpop.f32.mrb[0].mxu0
        %595 = vmatprep.mubr.f32.mxu0 0.0
        %596 = vmatmul.mubr.f32.gmra.mrb[0].mxu0 %v386
        %v597 = vpop.f32.mrb[0].mxu0
        %v598 = vadd.f32 0.0, %v597
        %v599 = vpop.f32.mrb[0].mxu0
        %600 = vmatprep.mubr.f32.mxu0 0.0
        %601 = vmatmul.mubr.f32.gmra.mrb[0].mxu0 %v389
        %v602 = vpop.f32.mrb[0].mxu0
        %v603 = vadd.f32 0.0, %v602
        %v604 = vpop.f32.mrb[0].mxu0
        %605 = vmatprep.mubr.f32.mxu0 0.0
        %606 = vmatmul.mubr.f32.gmra.mrb[0].mxu0 %v392
        %v607 = vpop.f32.mrb[0].mxu0
        %v608 = vadd.f32 0.0, %v607
        %v609 = vpop.f32.mrb[0].mxu0
        %610 = vmatprep.mubr.f32.mxu0 0.0
        %611 = vmatmul.mubr.f32.gmra.mrb[0].mxu0 %v395
        %v612 = vpop.f32.mrb[0].mxu0
        %v613 = vadd.f32 0.0, %v612
        %v614 = vpop.f32.mrb[0].mxu0
        %615 = vmatprep.mubr.f32.mxu0 0.0
        %616 = vmatmul.mubr.f32.gmra.mrb[0].mxu0 %v398
        %v617 = vpop.f32.mrb[0].mxu0
        %v618 = vadd.f32 0.0, %v617
        %v619 = vpop.f32.mrb[0].mxu0
        %620 = vmatprep.mubr.f32.mxu0 0.0
        %621 = vmatmul.mubr.f32.gmra.mrb[0].mxu0 %v401
        %v622 = vpop.f32.mrb[0].mxu0
        %v623 = vadd.f32 0.0, %v622
        %v624 = vpop.f32.mrb[0].mxu0
        %625 = vmatprep.mubr.f32.mxu0 0.0
        %626 = vmatmul.mubr.f32.gmra.mrb[0].mxu0 %v404
        %v627 = vpop.f32.mrb[0].mxu0
        %v628 = vadd.f32 0.0, %v627
        %v629 = vpop.f32.mrb[0].mxu0
        %630 = vdwg.mxu0
        %v632 = vsel %vm309, %v243, 0
        %v635 = vsel %vm309, %v244, 0
        %v638 = vsel %vm309, %v245, 0
        %v641 = vsel %vm309, %v246, 0
        %v644 = vsel %vm309, %v247, 0
        %v647 = vsel %vm309, %v248, 0
        %v650 = vsel %vm309, %v249, 0
        %v653 = vsel %vm309, %v250, 0
        %v656 = vsel %vm309, %v251, 0
        %v659 = vsel %vm309, %v252, 0
        %v662 = vsel %vm309, %v253, 0
        %v665 = vsel %vm309, %v254, 0
        %v668 = vsel %vm309, %v255, 0
        %v671 = vsel %vm309, %v256, 0
        %v674 = vsel %vm309, %v257, 0
        %v677 = vsel %vm309, %v258, 0
        %v680 = vsel %vm309, %v259, 0
        %v683 = vsel %vm309, %v260, 0
        %v686 = vsel %vm309, %v261, 0
        %v689 = vsel %vm309, %v262, 0
        %v692 = vsel %vm309, %v263, 0
        %v695 = vsel %vm309, %v264, 0
        %v698 = vsel %vm309, %v265, 0
        %v701 = vsel %vm309, %v266, 0
        %v704 = vsel %vm309, %v267, 0
        %v707 = vsel %vm309, %v268, 0
        %v710 = vsel %vm309, %v269, 0
        %v713 = vsel %vm309, %v270, 0
        %v716 = vsel %vm309, %v271, 0
        %v719 = vsel %vm309, %v272, 0
        %v722 = vsel %vm309, %v273, 0
        %v725 = vsel %vm309, %v274, 0
        %727 = vmatprep.subr.mxu0 0.0
        %728 = vmatpush1.msra.mxu0 %v275
        %729 = vmatprep.subr.mxu0 0.0
        %730 = vmatpush1.msra.mxu0 0.0
        %731 = vmatprep.subr.mxu0 0.0
        %732 = vmatpush1.msra.mxu0 0.0
        %733 = vmatprep.subr.mxu0 0.0
        %734 = vmatpush1.msra.mxu0 0.0
        %735 = vmatprep.subr.mxu0 0.0
        %736 = vmatpush1.msra.mxu0 0.0
        %737 = vmatprep.subr.mxu0 0.0
        %738 = vmatpush1.msra.mxu0 0.0
        %739 = vmatprep.subr.mxu0 0.0
        %740 = vmatpush1.msra.mxu0 0.0
        %741 = vmatprep.subr.mxu0 0.0
        %742 = vmatpush1.msra.mxu0 0.0
        %743 = vmatprep.subr.mxu0 0.0
        %744 = vmatpush1.msra.mxu0 0.0
        %745 = vmatprep.subr.mxu0 0.0
        %746 = vmatpush1.msra.mxu0 0.0
        %747 = vmatprep.subr.mxu0 0.0
        %748 = vmatpush1.msra.mxu0 0.0
        %749 = vmatprep.subr.mxu0 0.0
        %750 = vmatpush1.msra.mxu0 0.0
        %751 = vmatprep.subr.mxu0 0.0
        %752 = vmatpush1.msra.mxu0 0.0
        %753 = vmatprep.subr.mxu0 0.0
        %754 = vmatpush1.msra.mxu0 0.0
        %755 = vmatprep.subr.mxu0 0.0
        %756 = vmatpush1.msra.mxu0 0.0
        %757 = vmatprep.subr.mxu0 0.0
        %758 = vmatpush1.msra.mxu0 0.0
        %759 = vmatprep.subr.mxu0 0.0
        %760 = vmatpush1.msra.mxu0 0.0
        %761 = vmatprep.subr.mxu0 0.0
        %762 = vmatpush1.msra.mxu0 0.0
        %763 = vmatprep.subr.mxu0 0.0
        %764 = vmatpush1.msra.mxu0 0.0
        %765 = vmatprep.subr.mxu0 0.0
        %766 = vmatpush1.msra.mxu0 0.0
        %767 = vmatprep.subr.mxu0 0.0
        %768 = vmatpush1.msra.mxu0 0.0
        %769 = vmatprep.subr.mxu0 0.0
        %770 = vmatpush1.msra.mxu0 0.0
        %771 = vmatprep.subr.mxu0 0.0
        %772 = vmatpush1.msra.mxu0 0.0
        %773 = vmatprep.subr.mxu0 0.0
        %774 = vmatpush1.msra.mxu0 0.0
        %775 = vmatprep.subr.mxu0 0.0
        %776 = vmatpush1.msra.mxu0 0.0
        %777 = vmatprep.subr.mxu0 0.0
        %778 = vmatpush1.msra.mxu0 0.0
        %779 = vmatprep.subr.mxu0 0.0
        %780 = vmatpush1.msra.mxu0 0.0
        %781 = vmatprep.subr.mxu0 0.0
        %782 = vmatpush1.msra.mxu0 0.0
        %783 = vmatprep.subr.mxu0 0.0
        %784 = vmatpush1.msra.mxu0 0.0
        %785 = vmatprep.subr.mxu0 0.0
        %786 = vmatpush1.msra.mxu0 0.0
        %787 = vmatprep.subr.mxu0 0.0
        %788 = vmatpush1.msra.mxu0 0.0
        %789 = vmatprep.subr.mxu0 0.0
        %790 = vmatpush1.msra.mxu0 0.0
        %791 = vmatprep.mubr.f32.mxu0 0.0
        %792 = vmatmul.mubr.f32.gmra.mrb[0].mxu0 %v632
        %v793 = vpop.f32.mrb[0].mxu0
        %v794 = vadd.f32 %v473, %v793
        %v795 = vpop.f32.mrb[0].mxu0
        %796 = vmatprep.mubr.f32.mxu0 0.0
        %797 = vmatmul.mubr.f32.gmra.mrb[0].mxu0 %v635
        %v798 = vpop.f32.mrb[0].mxu0
        %v799 = vadd.f32 %v478, %v798
        %v800 = vpop.f32.mrb[0].mxu0
        %801 = vmatprep.mubr.f32.mxu0 0.0
        %802 = vmatmul.mubr.f32.gmra.mrb[0].mxu0 %v638
        %v803 = vpop.f32.mrb[0].mxu0
        %v804 = vadd.f32 %v483, %v803
        %v805 = vpop.f32.mrb[0].mxu0
        %806 = vmatprep.mubr.f32.mxu0 0.0
        %807 = vmatmul.mubr.f32.gmra.mrb[0].mxu0 %v641
        %v808 = vpop.f32.mrb[0].mxu0
        %v809 = vadd.f32 %v488, %v808
        %v810 = vpop.f32.mrb[0].mxu0
        %811 = vmatprep.mubr.f32.mxu0 0.0
        %812 = vmatmul.mubr.f32.gmra.mrb[0].mxu0 %v644
        %v813 = vpop.f32.mrb[0].mxu0
        %v814 = vadd.f32 %v493, %v813
        %v815 = vpop.f32.mrb[0].mxu0
        %816 = vmatprep.mubr.f32.mxu0 0.0
        %817 = vmatmul.mubr.f32.gmra.mrb[0].mxu0 %v647
        %v818 = vpop.f32.mrb[0].mxu0
        %v819 = vadd.f32 %v498, %v818
        %v820 = vpop.f32.mrb[0].mxu0
        %821 = vmatprep.mubr.f32.mxu0 0.0
        %822 = vmatmul.mubr.f32.gmra.mrb[0].mxu0 %v650
        %v823 = vpop.f32.mrb[0].mxu0
        %v824 = vadd.f32 %v503, %v823
        %v825 = vpop.f32.mrb[0].mxu0
        %826 = vmatprep.mubr.f32.mxu0 0.0
        %827 = vmatmul.mubr.f32.gmra.mrb[0].mxu0 %v653
        %v828 = vpop.f32.mrb[0].mxu0
        %v829 = vadd.f32 %v508, %v828
        %v830 = vpop.f32.mrb[0].mxu0
        %831 = vmatprep.mubr.f32.mxu0 0.0
        %832 = vmatmul.mubr.f32.gmra.mrb[0].mxu0 %v656
        %v833 = vpop.f32.mrb[0].mxu0
        %v834 = vadd.f32 %v513, %v833
        %v835 = vpop.f32.mrb[0].mxu0
        %836 = vmatprep.mubr.f32.mxu0 0.0
        %837 = vmatmul.mubr.f32.gmra.mrb[0].mxu0 %v659
        %v838 = vpop.f32.mrb[0].mxu0
        %v839 = vadd.f32 %v518, %v838
        %v840 = vpop.f32.mrb[0].mxu0
        %841 = vmatprep.mubr.f32.mxu0 0.0
        %842 = vmatmul.mubr.f32.gmra.mrb[0].mxu0 %v662
        %v843 = vpop.f32.mrb[0].mxu0
        %v844 = vadd.f32 %v523, %v843
        %v845 = vpop.f32.mrb[0].mxu0
        %846 = vmatprep.mubr.f32.mxu0 0.0
        %847 = vmatmul.mubr.f32.gmra.mrb[0].mxu0 %v665
        %v848 = vpop.f32.mrb[0].mxu0
        %v849 = vadd.f32 %v528, %v848
        %v850 = vpop.f32.mrb[0].mxu0
        %851 = vmatprep.mubr.f32.mxu0 0.0
        %852 = vmatmul.mubr.f32.gmra.mrb[0].mxu0 %v668
        %v853 = vpop.f32.mrb[0].mxu0
        %v854 = vadd.f32 %v533, %v853
        %v855 = vpop.f32.mrb[0].mxu0
        %856 = vmatprep.mubr.f32.mxu0 0.0
        %857 = vmatmul.mubr.f32.gmra.mrb[0].mxu0 %v671
        %v858 = vpop.f32.mrb[0].mxu0
        %v859 = vadd.f32 %v538, %v858
        %v860 = vpop.f32.mrb[0].mxu0
        %861 = vmatprep.mubr.f32.mxu0 0.0
        %862 = vmatmul.mubr.f32.gmra.mrb[0].mxu0 %v674
        %v863 = vpop.f32.mrb[0].mxu0
        %v864 = vadd.f32 %v543, %v863
        %v865 = vpop.f32.mrb[0].mxu0
        %866 = vmatprep.mubr.f32.mxu0 0.0
        %867 = vmatmul.mubr.f32.gmra.mrb[0].mxu0 %v677
        %v868 = vpop.f32.mrb[0].mxu0
        %v869 = vadd.f32 %v548, %v868
        %v870 = vpop.f32.mrb[0].mxu0
        %871 = vmatprep.mubr.f32.mxu0 0.0
        %872 = vmatmul.mubr.f32.gmra.mrb[0].mxu0 %v680
        %v873 = vpop.f32.mrb[0].mxu0
        %v874 = vadd.f32 %v553, %v873
        %v875 = vpop.f32.mrb[0].mxu0
        %876 = vmatprep.mubr.f32.mxu0 0.0
        %877 = vmatmul.mubr.f32.gmra.mrb[0].mxu0 %v683
        %v878 = vpop.f32.mrb[0].mxu0
        %v879 = vadd.f32 %v558, %v878
        %v880 = vpop.f32.mrb[0].mxu0
        %881 = vmatprep.mubr.f32.mxu0 0.0
        %882 = vmatmul.mubr.f32.gmra.mrb[0].mxu0 %v686
        %v883 = vpop.f32.mrb[0].mxu0
        %v884 = vadd.f32 %v563, %v883
        %v885 = vpop.f32.mrb[0].mxu0
        %886 = vmatprep.mubr.f32.mxu0 0.0
        %887 = vmatmul.mubr.f32.gmra.mrb[0].mxu0 %v689
        %v888 = vpop.f32.mrb[0].mxu0
        %v889 = vadd.f32 %v568, %v888
        %v890 = vpop.f32.mrb[0].mxu0
        %891 = vmatprep.mubr.f32.mxu0 0.0
        %892 = vmatmul.mubr.f32.gmra.mrb[0].mxu0 %v692
        %v893 = vpop.f32.mrb[0].mxu0
        %v894 = vadd.f32 %v573, %v893
        %v895 = vpop.f32.mrb[0].mxu0
        %896 = vmatprep.mubr.f32.mxu0 0.0
        %897 = vmatmul.mubr.f32.gmra.mrb[0].mxu0 %v695
        %v898 = vpop.f32.mrb[0].mxu0
        %v899 = vadd.f32 %v578, %v898
        %v900 = vpop.f32.mrb[0].mxu0
        %901 = vmatprep.mubr.f32.mxu0 0.0
        %902 = vmatmul.mubr.f32.gmra.mrb[0].mxu0 %v698
        %v903 = vpop.f32.mrb[0].mxu0
        %v904 = vadd.f32 %v583, %v903
        %v905 = vpop.f32.mrb[0].mxu0
        %906 = vmatprep.mubr.f32.mxu0 0.0
        %907 = vmatmul.mubr.f32.gmra.mrb[0].mxu0 %v701
        %v908 = vpop.f32.mrb[0].mxu0
        %v909 = vadd.f32 %v588, %v908
        %v910 = vpop.f32.mrb[0].mxu0
        %911 = vmatprep.mubr.f32.mxu0 0.0
        %912 = vmatmul.mubr.f32.gmra.mrb[0].mxu0 %v704
        %v913 = vpop.f32.mrb[0].mxu0
        %v914 = vadd.f32 %v593, %v913
        %v915 = vpop.f32.mrb[0].mxu0
        %916 = vmatprep.mubr.f32.mxu0 0.0
        %917 = vmatmul.mubr.f32.gmra.mrb[0].mxu0 %v707
        %v918 = vpop.f32.mrb[0].mxu0
        %v919 = vadd.f32 %v598, %v918
        %v920 = vpop.f32.mrb[0].mxu0
        %921 = vmatprep.mubr.f32.mxu0 0.0
        %922 = vmatmul.mubr.f32.gmra.mrb[0].mxu0 %v710
        %v923 = vpop.f32.mrb[0].mxu0
        %v924 = vadd.f32 %v603, %v923
        %v925 = vpop.f32.mrb[0].mxu0
        %926 = vmatprep.mubr.f32.mxu0 0.0
        %927 = vmatmul.mubr.f32.gmra.mrb[0].mxu0 %v713
        %v928 = vpop.f32.mrb[0].mxu0
        %v929 = vadd.f32 %v608, %v928
        %v930 = vpop.f32.mrb[0].mxu0
        %931 = vmatprep.mubr.f32.mxu0 0.0
        %932 = vmatmul.mubr.f32.gmra.mrb[0].mxu0 %v716
        %v933 = vpop.f32.mrb[0].mxu0
        %v934 = vadd.f32 %v613, %v933
        %v935 = vpop.f32.mrb[0].mxu0
        %936 = vmatprep.mubr.f32.mxu0 0.0
        %937 = vmatmul.mubr.f32.gmra.mrb[0].mxu0 %v719
        %v938 = vpop.f32.mrb[0].mxu0
        %v939 = vadd.f32 %v618, %v938
        %v940 = vpop.f32.mrb[0].mxu0
        %941 = vmatprep.mubr.f32.mxu0 0.0
        %942 = vmatmul.mubr.f32.gmra.mrb[0].mxu0 %v722
        %v943 = vpop.f32.mrb[0].mxu0
        %v944 = vadd.f32 %v623, %v943
        %v945 = vpop.f32.mrb[0].mxu0
        %946 = vmatprep.mubr.f32.mxu0 0.0
        %947 = vmatmul.mubr.f32.gmra.mrb[0].mxu0 %v725
        %v948 = vpop.f32.mrb[0].mxu0
        %v949 = vadd.f32 %v628, %v948
        %v950 = vpop.f32.mrb[0].mxu0
        %951 = vdwg.mxu0
        %v952 = vld [vmem:[%s242 + $0x2] sm:$0xff]
        %v953 = vld [vmem:[%s242 + $0xa] sm:$0xff]
        %v954 = vld [vmem:[%s242 + $0x1a] sm:$0xff]
        %v955 = vld [vmem:[%s242 + $0x22] sm:$0xff]
        %v956 = vld [vmem:[%s242 + $0x32] sm:$0xff]
        %v957 = vld [vmem:[%s242 + $0x3a] sm:$0xff]
        %v958 = vld [vmem:[%s242 + $0x4a] sm:$0xff]
        %v959 = vld [vmem:[%s242 + $0x52] sm:$0xff]
        %v960 = vld [vmem:[%s242 + $0x62] sm:$0xff]
        %v961 = vld [vmem:[%s242 + $0x6a] sm:$0xff]
        %v962 = vld [vmem:[%s242 + $0x7a] sm:$0xff]
        %v963 = vld [vmem:[%s242 + $0x82] sm:$0xff]
        %v964 = vld [vmem:[%s242 + $0x92] sm:$0xff]
        %v965 = vld [vmem:[%s242 + $0x9a] sm:$0xff]
        %v966 = vld [vmem:[%s242 + $0xaa] sm:$0xff]
        %v967 = vld [vmem:[%s242 + $0xb2] sm:$0xff]
        %v968 = vld [vmem:[%s242 + $0xc2] sm:$0xff]
        %v969 = vld [vmem:[%s242 + $0xca] sm:$0xff]
        %v970 = vld [vmem:[%s242 + $0xda] sm:$0xff]
        %v971 = vld [vmem:[%s242 + $0xe2] sm:$0xff]
        %v972 = vld [vmem:[%s242 + $0xf2] sm:$0xff]
        %v973 = vld [vmem:[%s242 + $0xfa] sm:$0xff]
        %v974 = vld [vmem:[%s242 + $0x10a] sm:$0xff]
        %v975 = vld [vmem:[%s242 + $0x112] sm:$0xff]
        %v976 = vld [vmem:[%s242 + $0x122] sm:$0xff]
        %v977 = vld [vmem:[%s242 + $0x12a] sm:$0xff]
        %v978 = vld [vmem:[%s242 + $0x13a] sm:$0xff]
        %v979 = vld [vmem:[%s242 + $0x142] sm:$0xff]
        %v980 = vld [vmem:[%s242 + $0x152] sm:$0xff]
        %v981 = vld [vmem:[%s242 + $0x15a] sm:$0xff]
        %v982 = vld [vmem:[%s242 + $0x16a] sm:$0xff]
        %v983 = vld [vmem:[%s242 + $0x172] sm:$0xff]
        %v984 = vld [vmem:[#allocation5 + $0x10] sm:$0xff]
        %v986 = vsel %vm309, %v952, 0
        %v989 = vsel %vm309, %v953, 0
        %v992 = vsel %vm309, %v954, 0
        %v995 = vsel %vm309, %v955, 0
        %v998 = vsel %vm309, %v956, 0
        %v1001 = vsel %vm309, %v957, 0
        %v1004 = vsel %vm309, %v958, 0
        %v1007 = vsel %vm309, %v959, 0
        %v1010 = vsel %vm309, %v960, 0
        %v1013 = vsel %vm309, %v961, 0
        %v1016 = vsel %vm309, %v962, 0
        %v1019 = vsel %vm309, %v963, 0
        %v1022 = vsel %vm309, %v964, 0
        %v1025 = vsel %vm309, %v965, 0
        %v1028 = vsel %vm309, %v966, 0
        %v1031 = vsel %vm309, %v967, 0
        %v1034 = vsel %vm309, %v968, 0
        %v1037 = vsel %vm309, %v969, 0
        %v1040 = vsel %vm309, %v970, 0
        %v1043 = vsel %vm309, %v971, 0
        %v1046 = vsel %vm309, %v972, 0
        %v1049 = vsel %vm309, %v973, 0
        %v1052 = vsel %vm309, %v974, 0
        %v1055 = vsel %vm309, %v975, 0
        %v1058 = vsel %vm309, %v976, 0
        %v1061 = vsel %vm309, %v977, 0
        %v1064 = vsel %vm309, %v978, 0
        %v1067 = vsel %vm309, %v979, 0
        %v1070 = vsel %vm309, %v980, 0
        %v1073 = vsel %vm309, %v981, 0
        %v1076 = vsel %vm309, %v982, 0
        %v1079 = vsel %vm309, %v983, 0
        %1081 = vmatprep.subr.mxu0 0.0
        %1082 = vmatpush1.msra.mxu0 %v984
        %1083 = vmatprep.subr.mxu0 0.0
        %1084 = vmatpush1.msra.mxu0 0.0
        %1085 = vmatprep.subr.mxu0 0.0
        %1086 = vmatpush1.msra.mxu0 0.0
        %1087 = vmatprep.subr.mxu0 0.0
        %1088 = vmatpush1.msra.mxu0 0.0
        %1089 = vmatprep.subr.mxu0 0.0
        %1090 = vmatpush1.msra.mxu0 0.0
        %1091 = vmatprep.subr.mxu0 0.0
        %1092 = vmatpush1.msra.mxu0 0.0
        %1093 = vmatprep.subr.mxu0 0.0
        %1094 = vmatpush1.msra.mxu0 0.0
        %1095 = vmatprep.subr.mxu0 0.0
        %1096 = vmatpush1.msra.mxu0 0.0
        %1097 = vmatprep.subr.mxu0 0.0
        %1098 = vmatpush1.msra.mxu0 0.0
        %1099 = vmatprep.subr.mxu0 0.0
        %1100 = vmatpush1.msra.mxu0 0.0
        %1101 = vmatprep.subr.mxu0 0.0
        %1102 = vmatpush1.msra.mxu0 0.0
        %1103 = vmatprep.subr.mxu0 0.0
        %1104 = vmatpush1.msra.mxu0 0.0
        %1105 = vmatprep.subr.mxu0 0.0
        %1106 = vmatpush1.msra.mxu0 0.0
        %1107 = vmatprep.subr.mxu0 0.0
        %1108 = vmatpush1.msra.mxu0 0.0
        %1109 = vmatprep.subr.mxu0 0.0
        %1110 = vmatpush1.msra.mxu0 0.0
        %1111 = vmatprep.subr.mxu0 0.0
        %1112 = vmatpush1.msra.mxu0 0.0
        %1113 = vmatprep.subr.mxu0 0.0
        %1114 = vmatpush1.msra.mxu0 0.0
        %1115 = vmatprep.subr.mxu0 0.0
        %1116 = vmatpush1.msra.mxu0 0.0
        %1117 = vmatprep.subr.mxu0 0.0
        %1118 = vmatpush1.msra.mxu0 0.0
        %1119 = vmatprep.subr.mxu0 0.0
        %1120 = vmatpush1.msra.mxu0 0.0
        %1121 = vmatprep.subr.mxu0 0.0
        %1122 = vmatpush1.msra.mxu0 0.0
        %1123 = vmatprep.subr.mxu0 0.0
        %1124 = vmatpush1.msra.mxu0 0.0
        %1125 = vmatprep.subr.mxu0 0.0
        %1126 = vmatpush1.msra.mxu0 0.0
        %1127 = vmatprep.subr.mxu0 0.0
        %1128 = vmatpush1.msra.mxu0 0.0
        %1129 = vmatprep.subr.mxu0 0.0
        %1130 = vmatpush1.msra.mxu0 0.0
        %1131 = vmatprep.subr.mxu0 0.0
        %1132 = vmatpush1.msra.mxu0 0.0
        %1133 = vmatprep.subr.mxu0 0.0
        %1134 = vmatpush1.msra.mxu0 0.0
        %1135 = vmatprep.subr.mxu0 0.0
        %1136 = vmatpush1.msra.mxu0 0.0
        %1137 = vmatprep.subr.mxu0 0.0
        %1138 = vmatpush1.msra.mxu0 0.0
        %1139 = vmatprep.subr.mxu0 0.0
        %1140 = vmatpush1.msra.mxu0 0.0
        %1141 = vmatprep.subr.mxu0 0.0
        %1142 = vmatpush1.msra.mxu0 0.0
        %1143 = vmatprep.subr.mxu0 0.0
        %1144 = vmatpush1.msra.mxu0 0.0
        %1145 = vmatprep.mubr.f32.mxu0 0.0
        %1146 = vmatmul.mubr.f32.gmra.mrb[0].mxu0 %v986
        %v1147 = vpop.f32.mrb[0].mxu0
        %v1148 = vadd.f32 0.0, %v1147
        %v1149 = vpop.f32.mrb[0].mxu0
        %1150 = vmatprep.mubr.f32.mxu0 0.0
        %1151 = vmatmul.mubr.f32.gmra.mrb[0].mxu0 %v989
        %v1152 = vpop.f32.mrb[0].mxu0
        %v1153 = vadd.f32 0.0, %v1152
        %v1154 = vpop.f32.mrb[0].mxu0
        %1155 = vmatprep.mubr.f32.mxu0 0.0
        %1156 = vmatmul.mubr.f32.gmra.mrb[0].mxu0 %v992
        %v1157 = vpop.f32.mrb[0].mxu0
        %v1158 = vadd.f32 0.0, %v1157
        %v1159 = vpop.f32.mrb[0].mxu0
        %1160 = vmatprep.mubr.f32.mxu0 0.0
        %1161 = vmatmul.mubr.f32.gmra.mrb[0].mxu0 %v995
        %v1162 = vpop.f32.mrb[0].mxu0
        %v1163 = vadd.f32 0.0, %v1162
        %v1164 = vpop.f32.mrb[0].mxu0
        %1165 = vmatprep.mubr.f32.mxu0 0.0
        %1166 = vmatmul.mubr.f32.gmra.mrb[0].mxu0 %v998
        %v1167 = vpop.f32.mrb[0].mxu0
        %v1168 = vadd.f32 0.0, %v1167
        %v1169 = vpop.f32.mrb[0].mxu0
        %1170 = vmatprep.mubr.f32.mxu0 0.0
        %1171 = vmatmul.mubr.f32.gmra.mrb[0].mxu0 %v1001
        %v1172 = vpop.f32.mrb[0].mxu0
        %v1173 = vadd.f32 0.0, %v1172
        %v1174 = vpop.f32.mrb[0].mxu0
        %1175 = vmatprep.mubr.f32.mxu0 0.0
        %1176 = vmatmul.mubr.f32.gmra.mrb[0].mxu0 %v1004
        %v1177 = vpop.f32.mrb[0].mxu0
        %v1178 = vadd.f32 0.0, %v1177
        %v1179 = vpop.f32.mrb[0].mxu0
        %1180 = vmatprep.mubr.f32.mxu0 0.0
        %1181 = vmatmul.mubr.f32.gmra.mrb[0].mxu0 %v1007
        %v1182 = vpop.f32.mrb[0].mxu0
        %v1183 = vadd.f32 0.0, %v1182
        %v1184 = vpop.f32.mrb[0].mxu0
        %1185 = vmatprep.mubr.f32.mxu0 0.0
        %1186 = vmatmul.mubr.f32.gmra.mrb[0].mxu0 %v1010
        %v1187 = vpop.f32.mrb[0].mxu0
        %v1188 = vadd.f32 0.0, %v1187
        %v1189 = vpop.f32.mrb[0].mxu0
        %1190 = vmatprep.mubr.f32.mxu0 0.0
        %1191 = vmatmul.mubr.f32.gmra.mrb[0].mxu0 %v1013
        %v1192 = vpop.f32.mrb[0].mxu0
        %v1193 = vadd.f32 0.0, %v1192
        %v1194 = vpop.f32.mrb[0].mxu0
        %1195 = vmatprep.mubr.f32.mxu0 0.0
        %1196 = vmatmul.mubr.f32.gmra.mrb[0].mxu0 %v1016
        %v1197 = vpop.f32.mrb[0].mxu0
        %v1198 = vadd.f32 0.0, %v1197
        %v1199 = vpop.f32.mrb[0].mxu0
        %1200 = vmatprep.mubr.f32.mxu0 0.0
        %1201 = vmatmul.mubr.f32.gmra.mrb[0].mxu0 %v1019
        %v1202 = vpop.f32.mrb[0].mxu0
        %v1203 = vadd.f32 0.0, %v1202
        %v1204 = vpop.f32.mrb[0].mxu0
        %1205 = vmatprep.mubr.f32.mxu0 0.0
        %1206 = vmatmul.mubr.f32.gmra.mrb[0].mxu0 %v1022
        %v1207 = vpop.f32.mrb[0].mxu0
        %v1208 = vadd.f32 0.0, %v1207
        %v1209 = vpop.f32.mrb[0].mxu0
        %1210 = vmatprep.mubr.f32.mxu0 0.0
        %1211 = vmatmul.mubr.f32.gmra.mrb[0].mxu0 %v1025
        %v1212 = vpop.f32.mrb[0].mxu0
        %v1213 = vadd.f32 0.0, %v1212
        %v1214 = vpop.f32.mrb[0].mxu0
        %1215 = vmatprep.mubr.f32.mxu0 0.0
        %1216 = vmatmul.mubr.f32.gmra.mrb[0].mxu0 %v1028
        %v1217 = vpop.f32.mrb[0].mxu0
        %v1218 = vadd.f32 0.0, %v1217
        %v1219 = vpop.f32.mrb[0].mxu0
        %1220 = vmatprep.mubr.f32.mxu0 0.0
        %1221 = vmatmul.mubr.f32.gmra.mrb[0].mxu0 %v1031
        %v1222 = vpop.f32.mrb[0].mxu0
        %v1223 = vadd.f32 0.0, %v1222
        %v1224 = vpop.f32.mrb[0].mxu0
        %1225 = vmatprep.mubr.f32.mxu0 0.0
        %1226 = vmatmul.mubr.f32.gmra.mrb[0].mxu0 %v1034
        %v1227 = vpop.f32.mrb[0].mxu0
        %v1228 = vadd.f32 0.0, %v1227
        %v1229 = vpop.f32.mrb[0].mxu0
        %1230 = vmatprep.mubr.f32.mxu0 0.0
        %1231 = vmatmul.mubr.f32.gmra.mrb[0].mxu0 %v1037
        %v1232 = vpop.f32.mrb[0].mxu0
        %v1233 = vadd.f32 0.0, %v1232
        %v1234 = vpop.f32.mrb[0].mxu0
        %1235 = vmatprep.mubr.f32.mxu0 0.0
        %1236 = vmatmul.mubr.f32.gmra.mrb[0].mxu0 %v1040
        %v1237 = vpop.f32.mrb[0].mxu0
        %v1238 = vadd.f32 0.0, %v1237
        %v1239 = vpop.f32.mrb[0].mxu0
        %1240 = vmatprep.mubr.f32.mxu0 0.0
        %1241 = vmatmul.mubr.f32.gmra.mrb[0].mxu0 %v1043
        %v1242 = vpop.f32.mrb[0].mxu0
        %v1243 = vadd.f32 0.0, %v1242
        %v1244 = vpop.f32.mrb[0].mxu0
        %1245 = vmatprep.mubr.f32.mxu0 0.0
        %1246 = vmatmul.mubr.f32.gmra.mrb[0].mxu0 %v1046
        %v1247 = vpop.f32.mrb[0].mxu0
        %v1248 = vadd.f32 0.0, %v1247
        %v1249 = vpop.f32.mrb[0].mxu0
        %1250 = vmatprep.mubr.f32.mxu0 0.0
        %1251 = vmatmul.mubr.f32.gmra.mrb[0].mxu0 %v1049
        %v1252 = vpop.f32.mrb[0].mxu0
        %v1253 = vadd.f32 0.0, %v1252
        %v1254 = vpop.f32.mrb[0].mxu0
        %1255 = vmatprep.mubr.f32.mxu0 0.0
        %1256 = vmatmul.mubr.f32.gmra.mrb[0].mxu0 %v1052
        %v1257 = vpop.f32.mrb[0].mxu0
        %v1258 = vadd.f32 0.0, %v1257
        %v1259 = vpop.f32.mrb[0].mxu0
        %1260 = vmatprep.mubr.f32.mxu0 0.0
        %1261 = vmatmul.mubr.f32.gmra.mrb[0].mxu0 %v1055
        %v1262 = vpop.f32.mrb[0].mxu0
        %v1263 = vadd.f32 0.0, %v1262
        %v1264 = vpop.f32.mrb[0].mxu0
        %1265 = vmatprep.mubr.f32.mxu0 0.0
        %1266 = vmatmul.mubr.f32.gmra.mrb[0].mxu0 %v1058
        %v1267 = vpop.f32.mrb[0].mxu0
        %v1268 = vadd.f32 0.0, %v1267
        %v1269 = vpop.f32.mrb[0].mxu0
        %1270 = vmatprep.mubr.f32.mxu0 0.0
        %1271 = vmatmul.mubr.f32.gmra.mrb[0].mxu0 %v1061
        %v1272 = vpop.f32.mrb[0].mxu0
        %v1273 = vadd.f32 0.0, %v1272
        %v1274 = vpop.f32.mrb[0].mxu0
        %1275 = vmatprep.mubr.f32.mxu0 0.0
        %1276 = vmatmul.mubr.f32.gmra.mrb[0].mxu0 %v1064
        %v1277 = vpop.f32.mrb[0].mxu0
        %v1278 = vadd.f32 0.0, %v1277
        %v1279 = vpop.f32.mrb[0].mxu0
        %1280 = vmatprep.mubr.f32.mxu0 0.0
        %1281 = vmatmul.mubr.f32.gmra.mrb[0].mxu0 %v1067
        %v1282 = vpop.f32.mrb[0].mxu0
        %v1283 = vadd.f32 0.0, %v1282
        %v1284 = vpop.f32.mrb[0].mxu0
        %1285 = vmatprep.mubr.f32.mxu0 0.0
        %1286 = vmatmul.mubr.f32.gmra.mrb[0].mxu0 %v1070
        %v1287 = vpop.f32.mrb[0].mxu0
        %v1288 = vadd.f32 0.0, %v1287
        %v1289 = vpop.f32.mrb[0].mxu0
        %1290 = vmatprep.mubr.f32.mxu0 0.0
        %1291 = vmatmul.mubr.f32.gmra.mrb[0].mxu0 %v1073
        %v1292 = vpop.f32.mrb[0].mxu0
        %v1293 = vadd.f32 0.0, %v1292
        %v1294 = vpop.f32.mrb[0].mxu0
        %1295 = vmatprep.mubr.f32.mxu0 0.0
        %1296 = vmatmul.mubr.f32.gmra.mrb[0].mxu0 %v1076
        %v1297 = vpop.f32.mrb[0].mxu0
        %v1298 = vadd.f32 0.0, %v1297
        %v1299 = vpop.f32.mrb[0].mxu0
        %1300 = vmatprep.mubr.f32.mxu0 0.0
        %1301 = vmatmul.mubr.f32.gmra.mrb[0].mxu0 %v1079
        %v1302 = vpop.f32.mrb[0].mxu0
        %v1303 = vadd.f32 0.0, %v1302
        %v1304 = vpop.f32.mrb[0].mxu0
        %1305 = vdwg.mxu0
        %v1306 = vadd.f32 %v794, %v1148
        %v1307 = vadd.f32 %v799, %v1153
        %v1308 = vadd.f32 %v804, %v1158
        %v1309 = vadd.f32 %v809, %v1163
        %v1310 = vadd.f32 %v814, %v1168
        %v1311 = vadd.f32 %v819, %v1173
        %v1312 = vadd.f32 %v824, %v1178
        %v1313 = vadd.f32 %v829, %v1183
        %v1314 = vadd.f32 %v834, %v1188
        %v1315 = vadd.f32 %v839, %v1193
        %v1316 = vadd.f32 %v844, %v1198
        %v1317 = vadd.f32 %v849, %v1203
        %v1318 = vadd.f32 %v854, %v1208
        %v1319 = vadd.f32 %v859, %v1213
        %v1320 = vadd.f32 %v864, %v1218
        %v1321 = vadd.f32 %v869, %v1223
        %v1322 = vadd.f32 %v874, %v1228
        %v1323 = vadd.f32 %v879, %v1233
        %v1324 = vadd.f32 %v884, %v1238
        %v1325 = vadd.f32 %v889, %v1243
        %v1326 = vadd.f32 %v894, %v1248
        %v1327 = vadd.f32 %v899, %v1253
        %v1328 = vadd.f32 %v904, %v1258
        %v1329 = vadd.f32 %v909, %v1263
        %v1330 = vadd.f32 %v914, %v1268
        %v1331 = vadd.f32 %v919, %v1273
        %v1332 = vadd.f32 %v924, %v1278
        %v1333 = vadd.f32 %v929, %v1283
        %v1334 = vadd.f32 %v934, %v1288
        %v1335 = vadd.f32 %v939, %v1293
        %v1336 = vadd.f32 %v944, %v1298
        %v1337 = vadd.f32 %v949, %v1303
        %s1338 = sadd.s32 %s240, 1
        %s1339 = smul.u32 %s1338, 24
        %s1340 = scalar_lea.vmem %s208, %s1339 [#allocation2]
        %v1341 = vld [vmem:[%s1340] sm:$0xff]
        %v1342 = vld [vmem:[%s1340 + $0x8] sm:$0xff]
        %v1343 = vld [vmem:[%s1340 + $0x18] sm:$0xff]
        %v1344 = vld [vmem:[%s1340 + $0x20] sm:$0xff]
        %v1345 = vld [vmem:[%s1340 + $0x30] sm:$0xff]
        %v1346 = vld [vmem:[%s1340 + $0x38] sm:$0xff]
        %v1347 = vld [vmem:[%s1340 + $0x48] sm:$0xff]
        %v1348 = vld [vmem:[%s1340 + $0x50] sm:$0xff]
        %v1349 = vld [vmem:[%s1340 + $0x60] sm:$0xff]
        %v1350 = vld [vmem:[%s1340 + $0x68] sm:$0xff]
        %v1351 = vld [vmem:[%s1340 + $0x78] sm:$0xff]
        %v1352 = vld [vmem:[%s1340 + $0x80] sm:$0xff]
        %v1353 = vld [vmem:[%s1340 + $0x90] sm:$0xff]
        %v1354 = vld [vmem:[%s1340 + $0x98] sm:$0xff]
        %v1355 = vld [vmem:[%s1340 + $0xa8] sm:$0xff]
        %v1356 = vld [vmem:[%s1340 + $0xb0] sm:$0xff]
        %v1357 = vld [vmem:[%s1340 + $0xc0] sm:$0xff]
        %v1358 = vld [vmem:[%s1340 + $0xc8] sm:$0xff]
        %v1359 = vld [vmem:[%s1340 + $0xd8] sm:$0xff]
        %v1360 = vld [vmem:[%s1340 + $0xe0] sm:$0xff]
        %v1361 = vld [vmem:[%s1340 + $0xf0] sm:$0xff]
        %v1362 = vld [vmem:[%s1340 + $0xf8] sm:$0xff]
        %v1363 = vld [vmem:[%s1340 + $0x108] sm:$0xff]
        %v1364 = vld [vmem:[%s1340 + $0x110] sm:$0xff]
        %v1365 = vld [vmem:[%s1340 + $0x120] sm:$0xff]
        %v1366 = vld [vmem:[%s1340 + $0x128] sm:$0xff]
        %v1367 = vld [vmem:[%s1340 + $0x138] sm:$0xff]
        %v1368 = vld [vmem:[%s1340 + $0x140] sm:$0xff]
        %v1369 = vld [vmem:[%s1340 + $0x150] sm:$0xff]
        %v1370 = vld [vmem:[%s1340 + $0x158] sm:$0xff]
        %v1371 = vld [vmem:[%s1340 + $0x168] sm:$0xff]
        %v1372 = vld [vmem:[%s1340 + $0x170] sm:$0xff]
        %v1373 = vld [vmem:[#allocation5 + $0x18] sm:$0xff]
        %v1375 = vsel %vm309, %v1341, 0
        %v1378 = vsel %vm309, %v1342, 0
        %v1381 = vsel %vm309, %v1343, 0
        %v1384 = vsel %vm309, %v1344, 0
        %v1387 = vsel %vm309, %v1345, 0
        %v1390 = vsel %vm309, %v1346, 0
        %v1393 = vsel %vm309, %v1347, 0
        %v1396 = vsel %vm309, %v1348, 0
        %v1399 = vsel %vm309, %v1349, 0
        %v1402 = vsel %vm309, %v1350, 0
        %v1405 = vsel %vm309, %v1351, 0
        %v1408 = vsel %vm309, %v1352, 0
        %v1411 = vsel %vm309, %v1353, 0
        %v1414 = vsel %vm309, %v1354, 0
        %v1417 = vsel %vm309, %v1355, 0
        %v1420 = vsel %vm309, %v1356, 0
        %v1423 = vsel %vm309, %v1357, 0
        %v1426 = vsel %vm309, %v1358, 0
        %v1429 = vsel %vm309, %v1359, 0
        %v1432 = vsel %vm309, %v1360, 0
        %v1435 = vsel %vm309, %v1361, 0
        %v1438 = vsel %vm309, %v1362, 0
        %v1441 = vsel %vm309, %v1363, 0
        %v1444 = vsel %vm309, %v1364, 0
        %v1447 = vsel %vm309, %v1365, 0
        %v1450 = vsel %vm309, %v1366, 0
        %v1453 = vsel %vm309, %v1367, 0
        %v1456 = vsel %vm309, %v1368, 0
        %v1459 = vsel %vm309, %v1369, 0
        %v1462 = vsel %vm309, %v1370, 0
        %v1465 = vsel %vm309, %v1371, 0
        %v1468 = vsel %vm309, %v1372, 0
        %1470 = vmatprep.subr.mxu0 0.0
        %1471 = vmatpush1.msra.mxu0 %v1373
        %1472 = vmatprep.subr.mxu0 0.0
        %1473 = vmatpush1.msra.mxu0 0.0
        %1474 = vmatprep.subr.mxu0 0.0
        %1475 = vmatpush1.msra.mxu0 0.0
        %1476 = vmatprep.subr.mxu0 0.0
        %1477 = vmatpush1.msra.mxu0 0.0
        %1478 = vmatprep.subr.mxu0 0.0
        %1479 = vmatpush1.msra.mxu0 0.0
        %1480 = vmatprep.subr.mxu0 0.0
        %1481 = vmatpush1.msra.mxu0 0.0
        %1482 = vmatprep.subr.mxu0 0.0
        %1483 = vmatpush1.msra.mxu0 0.0
        %1484 = vmatprep.subr.mxu0 0.0
        %1485 = vmatpush1.msra.mxu0 0.0
        %1486 = vmatprep.subr.mxu0 0.0
        %1487 = vmatpush1.msra.mxu0 0.0
        %1488 = vmatprep.subr.mxu0 0.0
        %1489 = vmatpush1.msra.mxu0 0.0
        %1490 = vmatprep.subr.mxu0 0.0
        %1491 = vmatpush1.msra.mxu0 0.0
        %1492 = vmatprep.subr.mxu0 0.0
        %1493 = vmatpush1.msra.mxu0 0.0
        %1494 = vmatprep.subr.mxu0 0.0
        %1495 = vmatpush1.msra.mxu0 0.0
        %1496 = vmatprep.subr.mxu0 0.0
        %1497 = vmatpush1.msra.mxu0 0.0
        %1498 = vmatprep.subr.mxu0 0.0
        %1499 = vmatpush1.msra.mxu0 0.0
        %1500 = vmatprep.subr.mxu0 0.0
        %1501 = vmatpush1.msra.mxu0 0.0
        %1502 = vmatprep.subr.mxu0 0.0
        %1503 = vmatpush1.msra.mxu0 0.0
        %1504 = vmatprep.subr.mxu0 0.0
        %1505 = vmatpush1.msra.mxu0 0.0
        %1506 = vmatprep.subr.mxu0 0.0
        %1507 = vmatpush1.msra.mxu0 0.0
        %1508 = vmatprep.subr.mxu0 0.0
        %1509 = vmatpush1.msra.mxu0 0.0
        %1510 = vmatprep.subr.mxu0 0.0
        %1511 = vmatpush1.msra.mxu0 0.0
        %1512 = vmatprep.subr.mxu0 0.0
        %1513 = vmatpush1.msra.mxu0 0.0
        %1514 = vmatprep.subr.mxu0 0.0
        %1515 = vmatpush1.msra.mxu0 0.0
        %1516 = vmatprep.subr.mxu0 0.0
        %1517 = vmatpush1.msra.mxu0 0.0
        %1518 = vmatprep.subr.mxu0 0.0
        %1519 = vmatpush1.msra.mxu0 0.0
        %1520 = vmatprep.subr.mxu0 0.0
        %1521 = vmatpush1.msra.mxu0 0.0
        %1522 = vmatprep.subr.mxu0 0.0
        %1523 = vmatpush1.msra.mxu0 0.0
        %1524 = vmatprep.subr.mxu0 0.0
        %1525 = vmatpush1.msra.mxu0 0.0
        %1526 = vmatprep.subr.mxu0 0.0
        %1527 = vmatpush1.msra.mxu0 0.0
        %1528 = vmatprep.subr.mxu0 0.0
        %1529 = vmatpush1.msra.mxu0 0.0
        %1530 = vmatprep.subr.mxu0 0.0
        %1531 = vmatpush1.msra.mxu0 0.0
        %1532 = vmatprep.subr.mxu0 0.0
        %1533 = vmatpush1.msra.mxu0 0.0
        %1534 = vmatprep.mubr.f32.mxu0 0.0
        %1535 = vmatmul.mubr.f32.gmra.mrb[0].mxu0 %v1375
        %v1536 = vpop.f32.mrb[0].mxu0
        %v1537 = vadd.f32 0.0, %v1536
        %v1538 = vpop.f32.mrb[0].mxu0
        %1539 = vmatprep.mubr.f32.mxu0 0.0
        %1540 = vmatmul.mubr.f32.gmra.mrb[0].mxu0 %v1378
        %v1541 = vpop.f32.mrb[0].mxu0
        %v1542 = vadd.f32 0.0, %v1541
        %v1543 = vpop.f32.mrb[0].mxu0
        %1544 = vmatprep.mubr.f32.mxu0 0.0
        %1545 = vmatmul.mubr.f32.gmra.mrb[0].mxu0 %v1381
        %v1546 = vpop.f32.mrb[0].mxu0
        %v1547 = vadd.f32 0.0, %v1546
        %v1548 = vpop.f32.mrb[0].mxu0
        %1549 = vmatprep.mubr.f32.mxu0 0.0
        %1550 = vmatmul.mubr.f32.gmra.mrb[0].mxu0 %v1384
        %v1551 = vpop.f32.mrb[0].mxu0
        %v1552 = vadd.f32 0.0, %v1551
        %v1553 = vpop.f32.mrb[0].mxu0
        %1554 = vmatprep.mubr.f32.mxu0 0.0
        %1555 = vmatmul.mubr.f32.gmra.mrb[0].mxu0 %v1387
        %v1556 = vpop.f32.mrb[0].mxu0
        %v1557 = vadd.f32 0.0, %v1556
        %v1558 = vpop.f32.mrb[0].mxu0
        %1559 = vmatprep.mubr.f32.mxu0 0.0
        %1560 = vmatmul.mubr.f32.gmra.mrb[0].mxu0 %v1390
        %v1561 = vpop.f32.mrb[0].mxu0
        %v1562 = vadd.f32 0.0, %v1561
        %v1563 = vpop.f32.mrb[0].mxu0
        %1564 = vmatprep.mubr.f32.mxu0 0.0
        %1565 = vmatmul.mubr.f32.gmra.mrb[0].mxu0 %v1393
        %v1566 = vpop.f32.mrb[0].mxu0
        %v1567 = vadd.f32 0.0, %v1566
        %v1568 = vpop.f32.mrb[0].mxu0
        %1569 = vmatprep.mubr.f32.mxu0 0.0
        %1570 = vmatmul.mubr.f32.gmra.mrb[0].mxu0 %v1396
        %v1571 = vpop.f32.mrb[0].mxu0
        %v1572 = vadd.f32 0.0, %v1571
        %v1573 = vpop.f32.mrb[0].mxu0
        %1574 = vmatprep.mubr.f32.mxu0 0.0
        %1575 = vmatmul.mubr.f32.gmra.mrb[0].mxu0 %v1399
        %v1576 = vpop.f32.mrb[0].mxu0
        %v1577 = vadd.f32 0.0, %v1576
        %v1578 = vpop.f32.mrb[0].mxu0
        %1579 = vmatprep.mubr.f32.mxu0 0.0
        %1580 = vmatmul.mubr.f32.gmra.mrb[0].mxu0 %v1402
        %v1581 = vpop.f32.mrb[0].mxu0
        %v1582 = vadd.f32 0.0, %v1581
        %v1583 = vpop.f32.mrb[0].mxu0
        %1584 = vmatprep.mubr.f32.mxu0 0.0
        %1585 = vmatmul.mubr.f32.gmra.mrb[0].mxu0 %v1405
        %v1586 = vpop.f32.mrb[0].mxu0
        %v1587 = vadd.f32 0.0, %v1586
        %v1588 = vpop.f32.mrb[0].mxu0
        %1589 = vmatprep.mubr.f32.mxu0 0.0
        %1590 = vmatmul.mubr.f32.gmra.mrb[0].mxu0 %v1408
        %v1591 = vpop.f32.mrb[0].mxu0
        %v1592 = vadd.f32 0.0, %v1591
        %v1593 = vpop.f32.mrb[0].mxu0
        %1594 = vmatprep.mubr.f32.mxu0 0.0
        %1595 = vmatmul.mubr.f32.gmra.mrb[0].mxu0 %v1411
        %v1596 = vpop.f32.mrb[0].mxu0
        %v1597 = vadd.f32 0.0, %v1596
        %v1598 = vpop.f32.mrb[0].mxu0
        %1599 = vmatprep.mubr.f32.mxu0 0.0
        %1600 = vmatmul.mubr.f32.gmra.mrb[0].mxu0 %v1414
        %v1601 = vpop.f32.mrb[0].mxu0
        %v1602 = vadd.f32 0.0, %v1601
        %v1603 = vpop.f32.mrb[0].mxu0
        %1604 = vmatprep.mubr.f32.mxu0 0.0
        %1605 = vmatmul.mubr.f32.gmra.mrb[0].mxu0 %v1417
        %v1606 = vpop.f32.mrb[0].mxu0
        %v1607 = vadd.f32 0.0, %v1606
        %v1608 = vpop.f32.mrb[0].mxu0
        %1609 = vmatprep.mubr.f32.mxu0 0.0
        %1610 = vmatmul.mubr.f32.gmra.mrb[0].mxu0 %v1420
        %v1611 = vpop.f32.mrb[0].mxu0
        %v1612 = vadd.f32 0.0, %v1611
        %v1613 = vpop.f32.mrb[0].mxu0
        %1614 = vmatprep.mubr.f32.mxu0 0.0
        %1615 = vmatmul.mubr.f32.gmra.mrb[0].mxu0 %v1423
        %v1616 = vpop.f32.mrb[0].mxu0
        %v1617 = vadd.f32 0.0, %v1616
        %v1618 = vpop.f32.mrb[0].mxu0
        %1619 = vmatprep.mubr.f32.mxu0 0.0
        %1620 = vmatmul.mubr.f32.gmra.mrb[0].mxu0 %v1426
        %v1621 = vpop.f32.mrb[0].mxu0
        %v1622 = vadd.f32 0.0, %v1621
        %v1623 = vpop.f32.mrb[0].mxu0
        %1624 = vmatprep.mubr.f32.mxu0 0.0
        %1625 = vmatmul.mubr.f32.gmra.mrb[0].mxu0 %v1429
        %v1626 = vpop.f32.mrb[0].mxu0
        %v1627 = vadd.f32 0.0, %v1626
        %v1628 = vpop.f32.mrb[0].mxu0
        %1629 = vmatprep.mubr.f32.mxu0 0.0
        %1630 = vmatmul.mubr.f32.gmra.mrb[0].mxu0 %v1432
        %v1631 = vpop.f32.mrb[0].mxu0
        %v1632 = vadd.f32 0.0, %v1631
        %v1633 = vpop.f32.mrb[0].mxu0
        %1634 = vmatprep.mubr.f32.mxu0 0.0
        %1635 = vmatmul.mubr.f32.gmra.mrb[0].mxu0 %v1435
        %v1636 = vpop.f32.mrb[0].mxu0
        %v1637 = vadd.f32 0.0, %v1636
        %v1638 = vpop.f32.mrb[0].mxu0
        %1639 = vmatprep.mubr.f32.mxu0 0.0
        %1640 = vmatmul.mubr.f32.gmra.mrb[0].mxu0 %v1438
        %v1641 = vpop.f32.mrb[0].mxu0
        %v1642 = vadd.f32 0.0, %v1641
        %v1643 = vpop.f32.mrb[0].mxu0
        %1644 = vmatprep.mubr.f32.mxu0 0.0
        %1645 = vmatmul.mubr.f32.gmra.mrb[0].mxu0 %v1441
        %v1646 = vpop.f32.mrb[0].mxu0
        %v1647 = vadd.f32 0.0, %v1646
        %v1648 = vpop.f32.mrb[0].mxu0
        %1649 = vmatprep.mubr.f32.mxu0 0.0
        %1650 = vmatmul.mubr.f32.gmra.mrb[0].mxu0 %v1444
        %v1651 = vpop.f32.mrb[0].mxu0
        %v1652 = vadd.f32 0.0, %v1651
        %v1653 = vpop.f32.mrb[0].mxu0
        %1654 = vmatprep.mubr.f32.mxu0 0.0
        %1655 = vmatmul.mubr.f32.gmra.mrb[0].mxu0 %v1447
        %v1656 = vpop.f32.mrb[0].mxu0
        %v1657 = vadd.f32 0.0, %v1656
        %v1658 = vpop.f32.mrb[0].mxu0
        %1659 = vmatprep.mubr.f32.mxu0 0.0
        %1660 = vmatmul.mubr.f32.gmra.mrb[0].mxu0 %v1450
        %v1661 = vpop.f32.mrb[0].mxu0
        %v1662 = vadd.f32 0.0, %v1661
        %v1663 = vpop.f32.mrb[0].mxu0
        %1664 = vmatprep.mubr.f32.mxu0 0.0
        %1665 = vmatmul.mubr.f32.gmra.mrb[0].mxu0 %v1453
        %v1666 = vpop.f32.mrb[0].mxu0
        %v1667 = vadd.f32 0.0, %v1666
        %v1668 = vpop.f32.mrb[0].mxu0
        %1669 = vmatprep.mubr.f32.mxu0 0.0
        %1670 = vmatmul.mubr.f32.gmra.mrb[0].mxu0 %v1456
        %v1671 = vpop.f32.mrb[0].mxu0
        %v1672 = vadd.f32 0.0, %v1671
        %v1673 = vpop.f32.mrb[0].mxu0
        %1674 = vmatprep.mubr.f32.mxu0 0.0
        %1675 = vmatmul.mubr.f32.gmra.mrb[0].mxu0 %v1459
        %v1676 = vpop.f32.mrb[0].mxu0
        %v1677 = vadd.f32 0.0, %v1676
        %v1678 = vpop.f32.mrb[0].mxu0
        %1679 = vmatprep.mubr.f32.mxu0 0.0
        %1680 = vmatmul.mubr.f32.gmra.mrb[0].mxu0 %v1462
        %v1681 = vpop.f32.mrb[0].mxu0
        %v1682 = vadd.f32 0.0, %v1681
        %v1683 = vpop.f32.mrb[0].mxu0
        %1684 = vmatprep.mubr.f32.mxu0 0.0
        %1685 = vmatmul.mubr.f32.gmra.mrb[0].mxu0 %v1465
        %v1686 = vpop.f32.mrb[0].mxu0
        %v1687 = vadd.f32 0.0, %v1686
        %v1688 = vpop.f32.mrb[0].mxu0
        %1689 = vmatprep.mubr.f32.mxu0 0.0
        %1690 = vmatmul.mubr.f32.gmra.mrb[0].mxu0 %v1468
        %v1691 = vpop.f32.mrb[0].mxu0
        %v1692 = vadd.f32 0.0, %v1691
        %v1693 = vpop.f32.mrb[0].mxu0
        %1694 = vdwg.mxu0
        %v1695 = vadd.f32 %v1306, %v1537
        %v1696 = vadd.f32 %v1307, %v1542
        %v1697 = vadd.f32 %v1308, %v1547
        %v1698 = vadd.f32 %v1309, %v1552
        %v1699 = vadd.f32 %v1310, %v1557
        %v1700 = vadd.f32 %v1311, %v1562
        %v1701 = vadd.f32 %v1312, %v1567
        %v1702 = vadd.f32 %v1313, %v1572
        %v1703 = vadd.f32 %v1314, %v1577
        %v1704 = vadd.f32 %v1315, %v1582
        %v1705 = vadd.f32 %v1316, %v1587
        %v1706 = vadd.f32 %v1317, %v1592
        %v1707 = vadd.f32 %v1318, %v1597
        %v1708 = vadd.f32 %v1319, %v1602
        %v1709 = vadd.f32 %v1320, %v1607
        %v1710 = vadd.f32 %v1321, %v1612
        %v1711 = vadd.f32 %v1322, %v1617
        %v1712 = vadd.f32 %v1323, %v1622
        %v1713 = vadd.f32 %v1324, %v1627
        %v1714 = vadd.f32 %v1325, %v1632
        %v1715 = vadd.f32 %v1326, %v1637
        %v1716 = vadd.f32 %v1327, %v1642
        %v1717 = vadd.f32 %v1328, %v1647
        %v1718 = vadd.f32 %v1329, %v1652
        %v1719 = vadd.f32 %v1330, %v1657
        %v1720 = vadd.f32 %v1331, %v1662
        %v1721 = vadd.f32 %v1332, %v1667
        %v1722 = vadd.f32 %v1333, %v1672
        %v1723 = vadd.f32 %v1334, %v1677
        %v1724 = vadd.f32 %v1335, %v1682
        %v1725 = vadd.f32 %v1336, %v1687
        %v1726 = vadd.f32 %v1337, %v1692
        %v1727 = vld [vmem:[%s1340 + $0x1] sm:$0xff]
        %v1728 = vld [vmem:[%s1340 + $0x9] sm:$0xff]
        %v1729 = vld [vmem:[%s1340 + $0x19] sm:$0xff]
        %v1730 = vld [vmem:[%s1340 + $0x21] sm:$0xff]
        %v1731 = vld [vmem:[%s1340 + $0x31] sm:$0xff]
        %v1732 = vld [vmem:[%s1340 + $0x39] sm:$0xff]
        %v1733 = vld [vmem:[%s1340 + $0x49] sm:$0xff]
        %v1734 = vld [vmem:[%s1340 + $0x51] sm:$0xff]
        %v1735 = vld [vmem:[%s1340 + $0x61] sm:$0xff]
        %v1736 = vld [vmem:[%s1340 + $0x69] sm:$0xff]
        %v1737 = vld [vmem:[%s1340 + $0x79] sm:$0xff]
        %v1738 = vld [vmem:[%s1340 + $0x81] sm:$0xff]
        %v1739 = vld [vmem:[%s1340 + $0x91] sm:$0xff]
        %v1740 = vld [vmem:[%s1340 + $0x99] sm:$0xff]
        %v1741 = vld [vmem:[%s1340 + $0xa9] sm:$0xff]
        %v1742 = vld [vmem:[%s1340 + $0xb1] sm:$0xff]
        %v1743 = vld [vmem:[%s1340 + $0xc1] sm:$0xff]
        %v1744 = vld [vmem:[%s1340 + $0xc9] sm:$0xff]
        %v1745 = vld [vmem:[%s1340 + $0xd9] sm:$0xff]
        %v1746 = vld [vmem:[%s1340 + $0xe1] sm:$0xff]
        %v1747 = vld [vmem:[%s1340 + $0xf1] sm:$0xff]
        %v1748 = vld [vmem:[%s1340 + $0xf9] sm:$0xff]
        %v1749 = vld [vmem:[%s1340 + $0x109] sm:$0xff]
        %v1750 = vld [vmem:[%s1340 + $0x111] sm:$0xff]
        %v1751 = vld [vmem:[%s1340 + $0x121] sm:$0xff]
        %v1752 = vld [vmem:[%s1340 + $0x129] sm:$0xff]
        %v1753 = vld [vmem:[%s1340 + $0x139] sm:$0xff]
        %v1754 = vld [vmem:[%s1340 + $0x141] sm:$0xff]
        %v1755 = vld [vmem:[%s1340 + $0x151] sm:$0xff]
        %v1756 = vld [vmem:[%s1340 + $0x159] sm:$0xff]
        %v1757 = vld [vmem:[%s1340 + $0x169] sm:$0xff]
        %v1758 = vld [vmem:[%s1340 + $0x171] sm:$0xff]
        %v1759 = vld [vmem:[#allocation5 + $0x20] sm:$0xff]
        %v1761 = vsel %vm309, %v1727, 0
        %v1764 = vsel %vm309, %v1728, 0
        %v1767 = vsel %vm309, %v1729, 0
        %v1770 = vsel %vm309, %v1730, 0
        %v1773 = vsel %vm309, %v1731, 0
        %v1776 = vsel %vm309, %v1732, 0
        %v1779 = vsel %vm309, %v1733, 0
        %v1782 = vsel %vm309, %v1734, 0
        %v1785 = vsel %vm309, %v1735, 0
        %v1788 = vsel %vm309, %v1736, 0
        %v1791 = vsel %vm309, %v1737, 0
        %v1794 = vsel %vm309, %v1738, 0
        %v1797 = vsel %vm309, %v1739, 0
        %v1800 = vsel %vm309, %v1740, 0
        %v1803 = vsel %vm309, %v1741, 0
        %v1806 = vsel %vm309, %v1742, 0
        %v1809 = vsel %vm309, %v1743, 0
        %v1812 = vsel %vm309, %v1744, 0
        %v1815 = vsel %vm309, %v1745, 0
        %v1818 = vsel %vm309, %v1746, 0
        %v1821 = vsel %vm309, %v1747, 0
        %v1824 = vsel %vm309, %v1748, 0
        %v1827 = vsel %vm309, %v1749, 0
        %v1830 = vsel %vm309, %v1750, 0
        %v1833 = vsel %vm309, %v1751, 0
        %v1836 = vsel %vm309, %v1752, 0
        %v1839 = vsel %vm309, %v1753, 0
        %v1842 = vsel %vm309, %v1754, 0
        %v1845 = vsel %vm309, %v1755, 0
        %v1848 = vsel %vm309, %v1756, 0
        %v1851 = vsel %vm309, %v1757, 0
        %v1854 = vsel %vm309, %v1758, 0
        %1856 = vmatprep.subr.mxu0 0.0
        %1857 = vmatpush1.msra.mxu0 %v1759
        %1858 = vmatprep.subr.mxu0 0.0
        %1859 = vmatpush1.msra.mxu0 0.0
        %1860 = vmatprep.subr.mxu0 0.0
        %1861 = vmatpush1.msra.mxu0 0.0
        %1862 = vmatprep.subr.mxu0 0.0
        %1863 = vmatpush1.msra.mxu0 0.0
        %1864 = vmatprep.subr.mxu0 0.0
        %1865 = vmatpush1.msra.mxu0 0.0
        %1866 = vmatprep.subr.mxu0 0.0
        %1867 = vmatpush1.msra.mxu0 0.0
        %1868 = vmatprep.subr.mxu0 0.0
        %1869 = vmatpush1.msra.mxu0 0.0
        %1870 = vmatprep.subr.mxu0 0.0
        %1871 = vmatpush1.msra.mxu0 0.0
        %1872 = vmatprep.subr.mxu0 0.0
        %1873 = vmatpush1.msra.mxu0 0.0
        %1874 = vmatprep.subr.mxu0 0.0
        %1875 = vmatpush1.msra.mxu0 0.0
        %1876 = vmatprep.subr.mxu0 0.0
        %1877 = vmatpush1.msra.mxu0 0.0
        %1878 = vmatprep.subr.mxu0 0.0
        %1879 = vmatpush1.msra.mxu0 0.0
        %1880 = vmatprep.subr.mxu0 0.0
        %1881 = vmatpush1.msra.mxu0 0.0
        %1882 = vmatprep.subr.mxu0 0.0
        %1883 = vmatpush1.msra.mxu0 0.0
        %1884 = vmatprep.subr.mxu0 0.0
        %1885 = vmatpush1.msra.mxu0 0.0
        %1886 = vmatprep.subr.mxu0 0.0
        %1887 = vmatpush1.msra.mxu0 0.0
        %1888 = vmatprep.subr.mxu0 0.0
        %1889 = vmatpush1.msra.mxu0 0.0
        %1890 = vmatprep.subr.mxu0 0.0
        %1891 = vmatpush1.msra.mxu0 0.0
        %1892 = vmatprep.subr.mxu0 0.0
        %1893 = vmatpush1.msra.mxu0 0.0
        %1894 = vmatprep.subr.mxu0 0.0
        %1895 = vmatpush1.msra.mxu0 0.0
        %1896 = vmatprep.subr.mxu0 0.0
        %1897 = vmatpush1.msra.mxu0 0.0
        %1898 = vmatprep.subr.mxu0 0.0
        %1899 = vmatpush1.msra.mxu0 0.0
        %1900 = vmatprep.subr.mxu0 0.0
        %1901 = vmatpush1.msra.mxu0 0.0
        %1902 = vmatprep.subr.mxu0 0.0
        %1903 = vmatpush1.msra.mxu0 0.0
        %1904 = vmatprep.subr.mxu0 0.0
        %1905 = vmatpush1.msra.mxu0 0.0
        %1906 = vmatprep.subr.mxu0 0.0
        %1907 = vmatpush1.msra.mxu0 0.0
        %1908 = vmatprep.subr.mxu0 0.0
        %1909 = vmatpush1.msra.mxu0 0.0
        %1910 = vmatprep.subr.mxu0 0.0
        %1911 = vmatpush1.msra.mxu0 0.0
        %1912 = vmatprep.subr.mxu0 0.0
        %1913 = vmatpush1.msra.mxu0 0.0
        %1914 = vmatprep.subr.mxu0 0.0
        %1915 = vmatpush1.msra.mxu0 0.0
        %1916 = vmatprep.subr.mxu0 0.0
        %1917 = vmatpush1.msra.mxu0 0.0
        %1918 = vmatprep.subr.mxu0 0.0
        %1919 = vmatpush1.msra.mxu0 0.0
        %1920 = vmatprep.mubr.f32.mxu0 0.0
        %1921 = vmatmul.mubr.f32.gmra.mrb[0].mxu0 %v1761
        %v1922 = vpop.f32.mrb[0].mxu0
        %v1923 = vadd.f32 0.0, %v1922
        %v1924 = vpop.f32.mrb[0].mxu0
        %1925 = vmatprep.mubr.f32.mxu0 0.0
        %1926 = vmatmul.mubr.f32.gmra.mrb[0].mxu0 %v1764
        %v1927 = vpop.f32.mrb[0].mxu0
        %v1928 = vadd.f32 0.0, %v1927
        %v1929 = vpop.f32.mrb[0].mxu0
        %1930 = vmatprep.mubr.f32.mxu0 0.0
        %1931 = vmatmul.mubr.f32.gmra.mrb[0].mxu0 %v1767
        %v1932 = vpop.f32.mrb[0].mxu0
        %v1933 = vadd.f32 0.0, %v1932
        %v1934 = vpop.f32.mrb[0].mxu0
        %1935 = vmatprep.mubr.f32.mxu0 0.0
        %1936 = vmatmul.mubr.f32.gmra.mrb[0].mxu0 %v1770
        %v1937 = vpop.f32.mrb[0].mxu0
        %v1938 = vadd.f32 0.0, %v1937
        %v1939 = vpop.f32.mrb[0].mxu0
        %1940 = vmatprep.mubr.f32.mxu0 0.0
        %1941 = vmatmul.mubr.f32.gmra.mrb[0].mxu0 %v1773
        %v1942 = vpop.f32.mrb[0].mxu0
        %v1943 = vadd.f32 0.0, %v1942
        %v1944 = vpop.f32.mrb[0].mxu0
        %1945 = vmatprep.mubr.f32.mxu0 0.0
        %1946 = vmatmul.mubr.f32.gmra.mrb[0].mxu0 %v1776
        %v1947 = vpop.f32.mrb[0].mxu0
        %v1948 = vadd.f32 0.0, %v1947
        %v1949 = vpop.f32.mrb[0].mxu0
        %1950 = vmatprep.mubr.f32.mxu0 0.0
        %1951 = vmatmul.mubr.f32.gmra.mrb[0].mxu0 %v1779
        %v1952 = vpop.f32.mrb[0].mxu0
        %v1953 = vadd.f32 0.0, %v1952
        %v1954 = vpop.f32.mrb[0].mxu0
        %1955 = vmatprep.mubr.f32.mxu0 0.0
        %1956 = vmatmul.mubr.f32.gmra.mrb[0].mxu0 %v1782
        %v1957 = vpop.f32.mrb[0].mxu0
        %v1958 = vadd.f32 0.0, %v1957
        %v1959 = vpop.f32.mrb[0].mxu0
        %1960 = vmatprep.mubr.f32.mxu0 0.0
        %1961 = vmatmul.mubr.f32.gmra.mrb[0].mxu0 %v1785
        %v1962 = vpop.f32.mrb[0].mxu0
        %v1963 = vadd.f32 0.0, %v1962
        %v1964 = vpop.f32.mrb[0].mxu0
        %1965 = vmatprep.mubr.f32.mxu0 0.0
        %1966 = vmatmul.mubr.f32.gmra.mrb[0].mxu0 %v1788
        %v1967 = vpop.f32.mrb[0].mxu0
        %v1968 = vadd.f32 0.0, %v1967
        %v1969 = vpop.f32.mrb[0].mxu0
        %1970 = vmatprep.mubr.f32.mxu0 0.0
        %1971 = vmatmul.mubr.f32.gmra.mrb[0].mxu0 %v1791
        %v1972 = vpop.f32.mrb[0].mxu0
        %v1973 = vadd.f32 0.0, %v1972
        %v1974 = vpop.f32.mrb[0].mxu0
        %1975 = vmatprep.mubr.f32.mxu0 0.0
        %1976 = vmatmul.mubr.f32.gmra.mrb[0].mxu0 %v1794
        %v1977 = vpop.f32.mrb[0].mxu0
        %v1978 = vadd.f32 0.0, %v1977
        %v1979 = vpop.f32.mrb[0].mxu0
        %1980 = vmatprep.mubr.f32.mxu0 0.0
        %1981 = vmatmul.mubr.f32.gmra.mrb[0].mxu0 %v1797
        %v1982 = vpop.f32.mrb[0].mxu0
        %v1983 = vadd.f32 0.0, %v1982
        %v1984 = vpop.f32.mrb[0].mxu0
        %1985 = vmatprep.mubr.f32.mxu0 0.0
        %1986 = vmatmul.mubr.f32.gmra.mrb[0].mxu0 %v1800
        %v1987 = vpop.f32.mrb[0].mxu0
        %v1988 = vadd.f32 0.0, %v1987
        %v1989 = vpop.f32.mrb[0].mxu0
        %1990 = vmatprep.mubr.f32.mxu0 0.0
        %1991 = vmatmul.mubr.f32.gmra.mrb[0].mxu0 %v1803
        %v1992 = vpop.f32.mrb[0].mxu0
        %v1993 = vadd.f32 0.0, %v1992
        %v1994 = vpop.f32.mrb[0].mxu0
        %1995 = vmatprep.mubr.f32.mxu0 0.0
        %1996 = vmatmul.mubr.f32.gmra.mrb[0].mxu0 %v1806
        %v1997 = vpop.f32.mrb[0].mxu0
        %v1998 = vadd.f32 0.0, %v1997
        %v1999 = vpop.f32.mrb[0].mxu0
        %2000 = vmatprep.mubr.f32.mxu0 0.0
        %2001 = vmatmul.mubr.f32.gmra.mrb[0].mxu0 %v1809
        %v2002 = vpop.f32.mrb[0].mxu0
        %v2003 = vadd.f32 0.0, %v2002
        %v2004 = vpop.f32.mrb[0].mxu0
        %2005 = vmatprep.mubr.f32.mxu0 0.0
        %2006 = vmatmul.mubr.f32.gmra.mrb[0].mxu0 %v1812
        %v2007 = vpop.f32.mrb[0].mxu0
        %v2008 = vadd.f32 0.0, %v2007
        %v2009 = vpop.f32.mrb[0].mxu0
        %2010 = vmatprep.mubr.f32.mxu0 0.0
        %2011 = vmatmul.mubr.f32.gmra.mrb[0].mxu0 %v1815
        %v2012 = vpop.f32.mrb[0].mxu0
        %v2013 = vadd.f32 0.0, %v2012
        %v2014 = vpop.f32.mrb[0].mxu0
        %2015 = vmatprep.mubr.f32.mxu0 0.0
        %2016 = vmatmul.mubr.f32.gmra.mrb[0].mxu0 %v1818
        %v2017 = vpop.f32.mrb[0].mxu0
        %v2018 = vadd.f32 0.0, %v2017
        %v2019 = vpop.f32.mrb[0].mxu0
        %2020 = vmatprep.mubr.f32.mxu0 0.0
        %2021 = vmatmul.mubr.f32.gmra.mrb[0].mxu0 %v1821
        %v2022 = vpop.f32.mrb[0].mxu0
        %v2023 = vadd.f32 0.0, %v2022
        %v2024 = vpop.f32.mrb[0].mxu0
        %2025 = vmatprep.mubr.f32.mxu0 0.0
        %2026 = vmatmul.mubr.f32.gmra.mrb[0].mxu0 %v1824
        %v2027 = vpop.f32.mrb[0].mxu0
        %v2028 = vadd.f32 0.0, %v2027
        %v2029 = vpop.f32.mrb[0].mxu0
        %2030 = vmatprep.mubr.f32.mxu0 0.0
        %2031 = vmatmul.mubr.f32.gmra.mrb[0].mxu0 %v1827
        %v2032 = vpop.f32.mrb[0].mxu0
        %v2033 = vadd.f32 0.0, %v2032
        %v2034 = vpop.f32.mrb[0].mxu0
        %2035 = vmatprep.mubr.f32.mxu0 0.0
        %2036 = vmatmul.mubr.f32.gmra.mrb[0].mxu0 %v1830
        %v2037 = vpop.f32.mrb[0].mxu0
        %v2038 = vadd.f32 0.0, %v2037
        %v2039 = vpop.f32.mrb[0].mxu0
        %2040 = vmatprep.mubr.f32.mxu0 0.0
        %2041 = vmatmul.mubr.f32.gmra.mrb[0].mxu0 %v1833
        %v2042 = vpop.f32.mrb[0].mxu0
        %v2043 = vadd.f32 0.0, %v2042
        %v2044 = vpop.f32.mrb[0].mxu0
        %2045 = vmatprep.mubr.f32.mxu0 0.0
        %2046 = vmatmul.mubr.f32.gmra.mrb[0].mxu0 %v1836
        %v2047 = vpop.f32.mrb[0].mxu0
        %v2048 = vadd.f32 0.0, %v2047
        %v2049 = vpop.f32.mrb[0].mxu0
        %2050 = vmatprep.mubr.f32.mxu0 0.0
        %2051 = vmatmul.mubr.f32.gmra.mrb[0].mxu0 %v1839
        %v2052 = vpop.f32.mrb[0].mxu0
        %v2053 = vadd.f32 0.0, %v2052
        %v2054 = vpop.f32.mrb[0].mxu0
        %2055 = vmatprep.mubr.f32.mxu0 0.0
        %2056 = vmatmul.mubr.f32.gmra.mrb[0].mxu0 %v1842
        %v2057 = vpop.f32.mrb[0].mxu0
        %v2058 = vadd.f32 0.0, %v2057
        %v2059 = vpop.f32.mrb[0].mxu0
        %2060 = vmatprep.mubr.f32.mxu0 0.0
        %2061 = vmatmul.mubr.f32.gmra.mrb[0].mxu0 %v1845
        %v2062 = vpop.f32.mrb[0].mxu0
        %v2063 = vadd.f32 0.0, %v2062
        %v2064 = vpop.f32.mrb[0].mxu0
        %2065 = vmatprep.mubr.f32.mxu0 0.0
        %2066 = vmatmul.mubr.f32.gmra.mrb[0].mxu0 %v1848
        %v2067 = vpop.f32.mrb[0].mxu0
        %v2068 = vadd.f32 0.0, %v2067
        %v2069 = vpop.f32.mrb[0].mxu0
        %2070 = vmatprep.mubr.f32.mxu0 0.0
        %2071 = vmatmul.mubr.f32.gmra.mrb[0].mxu0 %v1851
        %v2072 = vpop.f32.mrb[0].mxu0
        %v2073 = vadd.f32 0.0, %v2072
        %v2074 = vpop.f32.mrb[0].mxu0
        %2075 = vmatprep.mubr.f32.mxu0 0.0
        %2076 = vmatmul.mubr.f32.gmra.mrb[0].mxu0 %v1854
        %v2077 = vpop.f32.mrb[0].mxu0
        %v2078 = vadd.f32 0.0, %v2077
        %v2079 = vpop.f32.mrb[0].mxu0
        %2080 = vdwg.mxu0
        %v2081 = vadd.f32 %v1695, %v1923
        %v2082 = vadd.f32 %v1696, %v1928
        %v2083 = vadd.f32 %v1697, %v1933
        %v2084 = vadd.f32 %v1698, %v1938
        %v2085 = vadd.f32 %v1699, %v1943
        %v2086 = vadd.f32 %v1700, %v1948
        %v2087 = vadd.f32 %v1701, %v1953
        %v2088 = vadd.f32 %v1702, %v1958
        %v2089 = vadd.f32 %v1703, %v1963
        %v2090 = vadd.f32 %v1704, %v1968
        %v2091 = vadd.f32 %v1705, %v1973
        %v2092 = vadd.f32 %v1706, %v1978
        %v2093 = vadd.f32 %v1707, %v1983
        %v2094 = vadd.f32 %v1708, %v1988
        %v2095 = vadd.f32 %v1709, %v1993
        %v2096 = vadd.f32 %v1710, %v1998
        %v2097 = vadd.f32 %v1711, %v2003
        %v2098 = vadd.f32 %v1712, %v2008
        %v2099 = vadd.f32 %v1713, %v2013
        %v2100 = vadd.f32 %v1714, %v2018
        %v2101 = vadd.f32 %v1715, %v2023
        %v2102 = vadd.f32 %v1716, %v2028
        %v2103 = vadd.f32 %v1717, %v2033
        %v2104 = vadd.f32 %v1718, %v2038
        %v2105 = vadd.f32 %v1719, %v2043
        %v2106 = vadd.f32 %v1720, %v2048
        %v2107 = vadd.f32 %v1721, %v2053
        %v2108 = vadd.f32 %v1722, %v2058
        %v2109 = vadd.f32 %v1723, %v2063
        %v2110 = vadd.f32 %v1724, %v2068
        %v2111 = vadd.f32 %v1725, %v2073
        %v2112 = vadd.f32 %v1726, %v2078
        %v2113 = vld [vmem:[%s1340 + $0x2] sm:$0xff]
        %v2114 = vld [vmem:[%s1340 + $0xa] sm:$0xff]
        %v2115 = vld [vmem:[%s1340 + $0x1a] sm:$0xff]
        %v2116 = vld [vmem:[%s1340 + $0x22] sm:$0xff]
        %v2117 = vld [vmem:[%s1340 + $0x32] sm:$0xff]
        %v2118 = vld [vmem:[%s1340 + $0x3a] sm:$0xff]
        %v2119 = vld [vmem:[%s1340 + $0x4a] sm:$0xff]
        %v2120 = vld [vmem:[%s1340 + $0x52] sm:$0xff]
        %v2121 = vld [vmem:[%s1340 + $0x62] sm:$0xff]
        %v2122 = vld [vmem:[%s1340 + $0x6a] sm:$0xff]
        %v2123 = vld [vmem:[%s1340 + $0x7a] sm:$0xff]
        %v2124 = vld [vmem:[%s1340 + $0x82] sm:$0xff]
        %v2125 = vld [vmem:[%s1340 + $0x92] sm:$0xff]
        %v2126 = vld [vmem:[%s1340 + $0x9a] sm:$0xff]
        %v2127 = vld [vmem:[%s1340 + $0xaa] sm:$0xff]
        %v2128 = vld [vmem:[%s1340 + $0xb2] sm:$0xff]
        %v2129 = vld [vmem:[%s1340 + $0xc2] sm:$0xff]
        %v2130 = vld [vmem:[%s1340 + $0xca] sm:$0xff]
        %v2131 = vld [vmem:[%s1340 + $0xda] sm:$0xff]
        %v2132 = vld [vmem:[%s1340 + $0xe2] sm:$0xff]
        %v2133 = vld [vmem:[%s1340 + $0xf2] sm:$0xff]
        %v2134 = vld [vmem:[%s1340 + $0xfa] sm:$0xff]
        %v2135 = vld [vmem:[%s1340 + $0x10a] sm:$0xff]
        %v2136 = vld [vmem:[%s1340 + $0x112] sm:$0xff]
        %v2137 = vld [vmem:[%s1340 + $0x122] sm:$0xff]
        %v2138 = vld [vmem:[%s1340 + $0x12a] sm:$0xff]
        %v2139 = vld [vmem:[%s1340 + $0x13a] sm:$0xff]
        %v2140 = vld [vmem:[%s1340 + $0x142] sm:$0xff]
        %v2141 = vld [vmem:[%s1340 + $0x152] sm:$0xff]
        %v2142 = vld [vmem:[%s1340 + $0x15a] sm:$0xff]
        %v2143 = vld [vmem:[%s1340 + $0x16a] sm:$0xff]
        %v2144 = vld [vmem:[%s1340 + $0x172] sm:$0xff]
        %v2145 = vld [vmem:[#allocation5 + $0x28] sm:$0xff]
        %v2147 = vsel %vm309, %v2113, 0
        %v2150 = vsel %vm309, %v2114, 0
        %v2153 = vsel %vm309, %v2115, 0
        %v2156 = vsel %vm309, %v2116, 0
        %v2159 = vsel %vm309, %v2117, 0
        %v2162 = vsel %vm309, %v2118, 0
        %v2165 = vsel %vm309, %v2119, 0
        %v2168 = vsel %vm309, %v2120, 0
        %v2171 = vsel %vm309, %v2121, 0
        %v2174 = vsel %vm309, %v2122, 0
        %v2177 = vsel %vm309, %v2123, 0
        %v2180 = vsel %vm309, %v2124, 0
        %v2183 = vsel %vm309, %v2125, 0
        %v2186 = vsel %vm309, %v2126, 0
        %v2189 = vsel %vm309, %v2127, 0
        %v2192 = vsel %vm309, %v2128, 0
        %v2195 = vsel %vm309, %v2129, 0
        %v2198 = vsel %vm309, %v2130, 0
        %v2201 = vsel %vm309, %v2131, 0
        %v2204 = vsel %vm309, %v2132, 0
        %v2207 = vsel %vm309, %v2133, 0
        %v2210 = vsel %vm309, %v2134, 0
        %v2213 = vsel %vm309, %v2135, 0
        %v2216 = vsel %vm309, %v2136, 0
        %v2219 = vsel %vm309, %v2137, 0
        %v2222 = vsel %vm309, %v2138, 0
        %v2225 = vsel %vm309, %v2139, 0
        %v2228 = vsel %vm309, %v2140, 0
        %v2231 = vsel %vm309, %v2141, 0
        %v2234 = vsel %vm309, %v2142, 0
        %v2237 = vsel %vm309, %v2143, 0
        %v2240 = vsel %vm309, %v2144, 0
        %2242 = vmatprep.subr.mxu0 0.0
        %2243 = vmatpush1.msra.mxu0 %v2145
        %2244 = vmatprep.subr.mxu0 0.0
        %2245 = vmatpush1.msra.mxu0 0.0
        %2246 = vmatprep.subr.mxu0 0.0
        %2247 = vmatpush1.msra.mxu0 0.0
        %2248 = vmatprep.subr.mxu0 0.0
        %2249 = vmatpush1.msra.mxu0 0.0
        %2250 = vmatprep.subr.mxu0 0.0
        %2251 = vmatpush1.msra.mxu0 0.0
        %2252 = vmatprep.subr.mxu0 0.0
        %2253 = vmatpush1.msra.mxu0 0.0
        %2254 = vmatprep.subr.mxu0 0.0
        %2255 = vmatpush1.msra.mxu0 0.0
        %2256 = vmatprep.subr.mxu0 0.0
        %2257 = vmatpush1.msra.mxu0 0.0
        %2258 = vmatprep.subr.mxu0 0.0
        %2259 = vmatpush1.msra.mxu0 0.0
        %2260 = vmatprep.subr.mxu0 0.0
        %2261 = vmatpush1.msra.mxu0 0.0
        %2262 = vmatprep.subr.mxu0 0.0
        %2263 = vmatpush1.msra.mxu0 0.0
        %2264 = vmatprep.subr.mxu0 0.0
        %2265 = vmatpush1.msra.mxu0 0.0
        %2266 = vmatprep.subr.mxu0 0.0
        %2267 = vmatpush1.msra.mxu0 0.0
        %2268 = vmatprep.subr.mxu0 0.0
        %2269 = vmatpush1.msra.mxu0 0.0
        %2270 = vmatprep.subr.mxu0 0.0
        %2271 = vmatpush1.msra.mxu0 0.0
        %2272 = vmatprep.subr.mxu0 0.0
        %2273 = vmatpush1.msra.mxu0 0.0
        %2274 = vmatprep.subr.mxu0 0.0
        %2275 = vmatpush1.msra.mxu0 0.0
        %2276 = vmatprep.subr.mxu0 0.0
        %2277 = vmatpush1.msra.mxu0 0.0
        %2278 = vmatprep.subr.mxu0 0.0
        %2279 = vmatpush1.msra.mxu0 0.0
        %2280 = vmatprep.subr.mxu0 0.0
        %2281 = vmatpush1.msra.mxu0 0.0
        %2282 = vmatprep.subr.mxu0 0.0
        %2283 = vmatpush1.msra.mxu0 0.0
        %2284 = vmatprep.subr.mxu0 0.0
        %2285 = vmatpush1.msra.mxu0 0.0
        %2286 = vmatprep.subr.mxu0 0.0
        %2287 = vmatpush1.msra.mxu0 0.0
        %2288 = vmatprep.subr.mxu0 0.0
        %2289 = vmatpush1.msra.mxu0 0.0
        %2290 = vmatprep.subr.mxu0 0.0
        %2291 = vmatpush1.msra.mxu0 0.0
        %2292 = vmatprep.subr.mxu0 0.0
        %2293 = vmatpush1.msra.mxu0 0.0
        %2294 = vmatprep.subr.mxu0 0.0
        %2295 = vmatpush1.msra.mxu0 0.0
        %2296 = vmatprep.subr.mxu0 0.0
        %2297 = vmatpush1.msra.mxu0 0.0
        %2298 = vmatprep.subr.mxu0 0.0
        %2299 = vmatpush1.msra.mxu0 0.0
        %2300 = vmatprep.subr.mxu0 0.0
        %2301 = vmatpush1.msra.mxu0 0.0
        %2302 = vmatprep.subr.mxu0 0.0
        %2303 = vmatpush1.msra.mxu0 0.0
        %2304 = vmatprep.subr.mxu0 0.0
        %2305 = vmatpush1.msra.mxu0 0.0
        %2306 = vmatprep.mubr.f32.mxu0 0.0
        %2307 = vmatmul.mubr.f32.gmra.mrb[0].mxu0 %v2147
        %v2308 = vpop.f32.mrb[0].mxu0
        %v2309 = vadd.f32 0.0, %v2308
        %v2310 = vpop.f32.mrb[0].mxu0
        %2311 = vmatprep.mubr.f32.mxu0 0.0
        %2312 = vmatmul.mubr.f32.gmra.mrb[0].mxu0 %v2150
        %v2313 = vpop.f32.mrb[0].mxu0
        %v2314 = vadd.f32 0.0, %v2313
        %v2315 = vpop.f32.mrb[0].mxu0
        %2316 = vmatprep.mubr.f32.mxu0 0.0
        %2317 = vmatmul.mubr.f32.gmra.mrb[0].mxu0 %v2153
        %v2318 = vpop.f32.mrb[0].mxu0
        %v2319 = vadd.f32 0.0, %v2318
        %v2320 = vpop.f32.mrb[0].mxu0
        %2321 = vmatprep.mubr.f32.mxu0 0.0
        %2322 = vmatmul.mubr.f32.gmra.mrb[0].mxu0 %v2156
        %v2323 = vpop.f32.mrb[0].mxu0
        %v2324 = vadd.f32 0.0, %v2323
        %v2325 = vpop.f32.mrb[0].mxu0
        %2326 = vmatprep.mubr.f32.mxu0 0.0
        %2327 = vmatmul.mubr.f32.gmra.mrb[0].mxu0 %v2159
        %v2328 = vpop.f32.mrb[0].mxu0
        %v2329 = vadd.f32 0.0, %v2328
        %v2330 = vpop.f32.mrb[0].mxu0
        %2331 = vmatprep.mubr.f32.mxu0 0.0
        %2332 = vmatmul.mubr.f32.gmra.mrb[0].mxu0 %v2162
        %v2333 = vpop.f32.mrb[0].mxu0
        %v2334 = vadd.f32 0.0, %v2333
        %v2335 = vpop.f32.mrb[0].mxu0
        %2336 = vmatprep.mubr.f32.mxu0 0.0
        %2337 = vmatmul.mubr.f32.gmra.mrb[0].mxu0 %v2165
        %v2338 = vpop.f32.mrb[0].mxu0
        %v2339 = vadd.f32 0.0, %v2338
        %v2340 = vpop.f32.mrb[0].mxu0
        %2341 = vmatprep.mubr.f32.mxu0 0.0
        %2342 = vmatmul.mubr.f32.gmra.mrb[0].mxu0 %v2168
        %v2343 = vpop.f32.mrb[0].mxu0
        %v2344 = vadd.f32 0.0, %v2343
        %v2345 = vpop.f32.mrb[0].mxu0
        %2346 = vmatprep.mubr.f32.mxu0 0.0
        %2347 = vmatmul.mubr.f32.gmra.mrb[0].mxu0 %v2171
        %v2348 = vpop.f32.mrb[0].mxu0
        %v2349 = vadd.f32 0.0, %v2348
        %v2350 = vpop.f32.mrb[0].mxu0
        %2351 = vmatprep.mubr.f32.mxu0 0.0
        %2352 = vmatmul.mubr.f32.gmra.mrb[0].mxu0 %v2174
        %v2353 = vpop.f32.mrb[0].mxu0
        %v2354 = vadd.f32 0.0, %v2353
        %v2355 = vpop.f32.mrb[0].mxu0
        %2356 = vmatprep.mubr.f32.mxu0 0.0
        %2357 = vmatmul.mubr.f32.gmra.mrb[0].mxu0 %v2177
        %v2358 = vpop.f32.mrb[0].mxu0
        %v2359 = vadd.f32 0.0, %v2358
        %v2360 = vpop.f32.mrb[0].mxu0
        %2361 = vmatprep.mubr.f32.mxu0 0.0
        %2362 = vmatmul.mubr.f32.gmra.mrb[0].mxu0 %v2180
        %v2363 = vpop.f32.mrb[0].mxu0
        %v2364 = vadd.f32 0.0, %v2363
        %v2365 = vpop.f32.mrb[0].mxu0
        %2366 = vmatprep.mubr.f32.mxu0 0.0
        %2367 = vmatmul.mubr.f32.gmra.mrb[0].mxu0 %v2183
        %v2368 = vpop.f32.mrb[0].mxu0
        %v2369 = vadd.f32 0.0, %v2368
        %v2370 = vpop.f32.mrb[0].mxu0
        %2371 = vmatprep.mubr.f32.mxu0 0.0
        %2372 = vmatmul.mubr.f32.gmra.mrb[0].mxu0 %v2186
        %v2373 = vpop.f32.mrb[0].mxu0
        %v2374 = vadd.f32 0.0, %v2373
        %v2375 = vpop.f32.mrb[0].mxu0
        %2376 = vmatprep.mubr.f32.mxu0 0.0
        %2377 = vmatmul.mubr.f32.gmra.mrb[0].mxu0 %v2189
        %v2378 = vpop.f32.mrb[0].mxu0
        %v2379 = vadd.f32 0.0, %v2378
        %v2380 = vpop.f32.mrb[0].mxu0
        %2381 = vmatprep.mubr.f32.mxu0 0.0
        %2382 = vmatmul.mubr.f32.gmra.mrb[0].mxu0 %v2192
        %v2383 = vpop.f32.mrb[0].mxu0
        %v2384 = vadd.f32 0.0, %v2383
        %v2385 = vpop.f32.mrb[0].mxu0
        %2386 = vmatprep.mubr.f32.mxu0 0.0
        %2387 = vmatmul.mubr.f32.gmra.mrb[0].mxu0 %v2195
        %v2388 = vpop.f32.mrb[0].mxu0
        %v2389 = vadd.f32 0.0, %v2388
        %v2390 = vpop.f32.mrb[0].mxu0
        %2391 = vmatprep.mubr.f32.mxu0 0.0
        %2392 = vmatmul.mubr.f32.gmra.mrb[0].mxu0 %v2198
        %v2393 = vpop.f32.mrb[0].mxu0
        %v2394 = vadd.f32 0.0, %v2393
        %v2395 = vpop.f32.mrb[0].mxu0
        %2396 = vmatprep.mubr.f32.mxu0 0.0
        %2397 = vmatmul.mubr.f32.gmra.mrb[0].mxu0 %v2201
        %v2398 = vpop.f32.mrb[0].mxu0
        %v2399 = vadd.f32 0.0, %v2398
        %v2400 = vpop.f32.mrb[0].mxu0
        %2401 = vmatprep.mubr.f32.mxu0 0.0
        %2402 = vmatmul.mubr.f32.gmra.mrb[0].mxu0 %v2204
        %v2403 = vpop.f32.mrb[0].mxu0
        %v2404 = vadd.f32 0.0, %v2403
        %v2405 = vpop.f32.mrb[0].mxu0
        %2406 = vmatprep.mubr.f32.mxu0 0.0
        %2407 = vmatmul.mubr.f32.gmra.mrb[0].mxu0 %v2207
        %v2408 = vpop.f32.mrb[0].mxu0
        %v2409 = vadd.f32 0.0, %v2408
        %v2410 = vpop.f32.mrb[0].mxu0
        %2411 = vmatprep.mubr.f32.mxu0 0.0
        %2412 = vmatmul.mubr.f32.gmra.mrb[0].mxu0 %v2210
        %v2413 = vpop.f32.mrb[0].mxu0
        %v2414 = vadd.f32 0.0, %v2413
        %v2415 = vpop.f32.mrb[0].mxu0
        %2416 = vmatprep.mubr.f32.mxu0 0.0
        %2417 = vmatmul.mubr.f32.gmra.mrb[0].mxu0 %v2213
        %v2418 = vpop.f32.mrb[0].mxu0
        %v2419 = vadd.f32 0.0, %v2418
        %v2420 = vpop.f32.mrb[0].mxu0
        %2421 = vmatprep.mubr.f32.mxu0 0.0
        %2422 = vmatmul.mubr.f32.gmra.mrb[0].mxu0 %v2216
        %v2423 = vpop.f32.mrb[0].mxu0
        %v2424 = vadd.f32 0.0, %v2423
        %v2425 = vpop.f32.mrb[0].mxu0
        %2426 = vmatprep.mubr.f32.mxu0 0.0
        %2427 = vmatmul.mubr.f32.gmra.mrb[0].mxu0 %v2219
        %v2428 = vpop.f32.mrb[0].mxu0
        %v2429 = vadd.f32 0.0, %v2428
        %v2430 = vpop.f32.mrb[0].mxu0
        %2431 = vmatprep.mubr.f32.mxu0 0.0
        %2432 = vmatmul.mubr.f32.gmra.mrb[0].mxu0 %v2222
        %v2433 = vpop.f32.mrb[0].mxu0
        %v2434 = vadd.f32 0.0, %v2433
        %v2435 = vpop.f32.mrb[0].mxu0
        %2436 = vmatprep.mubr.f32.mxu0 0.0
        %2437 = vmatmul.mubr.f32.gmra.mrb[0].mxu0 %v2225
        %v2438 = vpop.f32.mrb[0].mxu0
        %v2439 = vadd.f32 0.0, %v2438
        %v2440 = vpop.f32.mrb[0].mxu0
        %2441 = vmatprep.mubr.f32.mxu0 0.0
        %2442 = vmatmul.mubr.f32.gmra.mrb[0].mxu0 %v2228
        %v2443 = vpop.f32.mrb[0].mxu0
        %v2444 = vadd.f32 0.0, %v2443
        %v2445 = vpop.f32.mrb[0].mxu0
        %2446 = vmatprep.mubr.f32.mxu0 0.0
        %2447 = vmatmul.mubr.f32.gmra.mrb[0].mxu0 %v2231
        %v2448 = vpop.f32.mrb[0].mxu0
        %v2449 = vadd.f32 0.0, %v2448
        %v2450 = vpop.f32.mrb[0].mxu0
        %2451 = vmatprep.mubr.f32.mxu0 0.0
        %2452 = vmatmul.mubr.f32.gmra.mrb[0].mxu0 %v2234
        %v2453 = vpop.f32.mrb[0].mxu0
        %v2454 = vadd.f32 0.0, %v2453
        %v2455 = vpop.f32.mrb[0].mxu0
        %2456 = vmatprep.mubr.f32.mxu0 0.0
        %2457 = vmatmul.mubr.f32.gmra.mrb[0].mxu0 %v2237
        %v2458 = vpop.f32.mrb[0].mxu0
        %v2459 = vadd.f32 0.0, %v2458
        %v2460 = vpop.f32.mrb[0].mxu0
        %2461 = vmatprep.mubr.f32.mxu0 0.0
        %2462 = vmatmul.mubr.f32.gmra.mrb[0].mxu0 %v2240
        %v2463 = vpop.f32.mrb[0].mxu0
        %v2464 = vadd.f32 0.0, %v2463
        %v2465 = vpop.f32.mrb[0].mxu0
        %2466 = vdwg.mxu0
        %v2467 = vadd.f32 %v2081, %v2309
        %v2468 = vadd.f32 %v2082, %v2314
        %v2469 = vadd.f32 %v2083, %v2319
        %v2470 = vadd.f32 %v2084, %v2324
        %v2471 = vadd.f32 %v2085, %v2329
        %v2472 = vadd.f32 %v2086, %v2334
        %v2473 = vadd.f32 %v2087, %v2339
        %v2474 = vadd.f32 %v2088, %v2344
        %v2475 = vadd.f32 %v2089, %v2349
        %v2476 = vadd.f32 %v2090, %v2354
        %v2477 = vadd.f32 %v2091, %v2359
        %v2478 = vadd.f32 %v2092, %v2364
        %v2479 = vadd.f32 %v2093, %v2369
        %v2480 = vadd.f32 %v2094, %v2374
        %v2481 = vadd.f32 %v2095, %v2379
        %v2482 = vadd.f32 %v2096, %v2384
        %v2483 = vadd.f32 %v2097, %v2389
        %v2484 = vadd.f32 %v2098, %v2394
        %v2485 = vadd.f32 %v2099, %v2399
        %v2486 = vadd.f32 %v2100, %v2404
        %v2487 = vadd.f32 %v2101, %v2409
        %v2488 = vadd.f32 %v2102, %v2414
        %v2489 = vadd.f32 %v2103, %v2419
        %v2490 = vadd.f32 %v2104, %v2424
        %v2491 = vadd.f32 %v2105, %v2429
        %v2492 = vadd.f32 %v2106, %v2434
        %v2493 = vadd.f32 %v2107, %v2439
        %v2494 = vadd.f32 %v2108, %v2444
        %v2495 = vadd.f32 %v2109, %v2449
        %v2496 = vadd.f32 %v2110, %v2454
        %v2497 = vadd.f32 %v2111, %v2459
        %v2498 = vadd.f32 %v2112, %v2464
        %s2499 = sadd.s32 %s240, 2
        %s2500 = smul.u32 %s2499, 24
        %s2501 = scalar_lea.vmem %s208, %s2500 [#allocation2]
        %v2502 = vld [vmem:[%s2501] sm:$0xff]
        %v2503 = vld [vmem:[%s2501 + $0x8] sm:$0xff]
        %v2504 = vld [vmem:[%s2501 + $0x18] sm:$0xff]
        %v2505 = vld [vmem:[%s2501 + $0x20] sm:$0xff]
        %v2506 = vld [vmem:[%s2501 + $0x30] sm:$0xff]
        %v2507 = vld [vmem:[%s2501 + $0x38] sm:$0xff]
        %v2508 = vld [vmem:[%s2501 + $0x48] sm:$0xff]
        %v2509 = vld [vmem:[%s2501 + $0x50] sm:$0xff]
        %v2510 = vld [vmem:[%s2501 + $0x60] sm:$0xff]
        %v2511 = vld [vmem:[%s2501 + $0x68] sm:$0xff]
        %v2512 = vld [vmem:[%s2501 + $0x78] sm:$0xff]
        %v2513 = vld [vmem:[%s2501 + $0x80] sm:$0xff]
        %v2514 = vld [vmem:[%s2501 + $0x90] sm:$0xff]
        %v2515 = vld [vmem:[%s2501 + $0x98] sm:$0xff]
        %v2516 = vld [vmem:[%s2501 + $0xa8] sm:$0xff]
        %v2517 = vld [vmem:[%s2501 + $0xb0] sm:$0xff]
        %v2518 = vld [vmem:[%s2501 + $0xc0] sm:$0xff]
        %v2519 = vld [vmem:[%s2501 + $0xc8] sm:$0xff]
        %v2520 = vld [vmem:[%s2501 + $0xd8] sm:$0xff]
        %v2521 = vld [vmem:[%s2501 + $0xe0] sm:$0xff]
        %v2522 = vld [vmem:[%s2501 + $0xf0] sm:$0xff]
        %v2523 = vld [vmem:[%s2501 + $0xf8] sm:$0xff]
        %v2524 = vld [vmem:[%s2501 + $0x108] sm:$0xff]
        %v2525 = vld [vmem:[%s2501 + $0x110] sm:$0xff]
        %v2526 = vld [vmem:[%s2501 + $0x120] sm:$0xff]
        %v2527 = vld [vmem:[%s2501 + $0x128] sm:$0xff]
        %v2528 = vld [vmem:[%s2501 + $0x138] sm:$0xff]
        %v2529 = vld [vmem:[%s2501 + $0x140] sm:$0xff]
        %v2530 = vld [vmem:[%s2501 + $0x150] sm:$0xff]
        %v2531 = vld [vmem:[%s2501 + $0x158] sm:$0xff]
        %v2532 = vld [vmem:[%s2501 + $0x168] sm:$0xff]
        %v2533 = vld [vmem:[%s2501 + $0x170] sm:$0xff]
        %v2534 = vld [vmem:[#allocation5 + $0x30] sm:$0xff]
        %v2536 = vsel %vm309, %v2502, 0
        %v2539 = vsel %vm309, %v2503, 0
        %v2542 = vsel %vm309, %v2504, 0
        %v2545 = vsel %vm309, %v2505, 0
        %v2548 = vsel %vm309, %v2506, 0
        %v2551 = vsel %vm309, %v2507, 0
        %v2554 = vsel %vm309, %v2508, 0
        %v2557 = vsel %vm309, %v2509, 0
        %v2560 = vsel %vm309, %v2510, 0
        %v2563 = vsel %vm309, %v2511, 0
        %v2566 = vsel %vm309, %v2512, 0
        %v2569 = vsel %vm309, %v2513, 0
        %v2572 = vsel %vm309, %v2514, 0
        %v2575 = vsel %vm309, %v2515, 0
        %v2578 = vsel %vm309, %v2516, 0
        %v2581 = vsel %vm309, %v2517, 0
        %v2584 = vsel %vm309, %v2518, 0
        %v2587 = vsel %vm309, %v2519, 0
        %v2590 = vsel %vm309, %v2520, 0
        %v2593 = vsel %vm309, %v2521, 0
        %v2596 = vsel %vm309, %v2522, 0
        %v2599 = vsel %vm309, %v2523, 0
        %v2602 = vsel %vm309, %v2524, 0
        %v2605 = vsel %vm309, %v2525, 0
        %v2608 = vsel %vm309, %v2526, 0
        %v2611 = vsel %vm309, %v2527, 0
        %v2614 = vsel %vm309, %v2528, 0
        %v2617 = vsel %vm309, %v2529, 0
        %v2620 = vsel %vm309, %v2530, 0
        %v2623 = vsel %vm309, %v2531, 0
        %v2626 = vsel %vm309, %v2532, 0
        %v2629 = vsel %vm309, %v2533, 0
        %2631 = vmatprep.subr.mxu0 0.0
        %2632 = vmatpush1.msra.mxu0 %v2534
        %2633 = vmatprep.subr.mxu0 0.0
        %2634 = vmatpush1.msra.mxu0 0.0
        %2635 = vmatprep.subr.mxu0 0.0
        %2636 = vmatpush1.msra.mxu0 0.0
        %2637 = vmatprep.subr.mxu0 0.0
        %2638 = vmatpush1.msra.mxu0 0.0
        %2639 = vmatprep.subr.mxu0 0.0
        %2640 = vmatpush1.msra.mxu0 0.0
        %2641 = vmatprep.subr.mxu0 0.0
        %2642 = vmatpush1.msra.mxu0 0.0
        %2643 = vmatprep.subr.mxu0 0.0
        %2644 = vmatpush1.msra.mxu0 0.0
        %2645 = vmatprep.subr.mxu0 0.0
        %2646 = vmatpush1.msra.mxu0 0.0
        %2647 = vmatprep.subr.mxu0 0.0
        %2648 = vmatpush1.msra.mxu0 0.0
        %2649 = vmatprep.subr.mxu0 0.0
        %2650 = vmatpush1.msra.mxu0 0.0
        %2651 = vmatprep.subr.mxu0 0.0
        %2652 = vmatpush1.msra.mxu0 0.0
        %2653 = vmatprep.subr.mxu0 0.0
        %2654 = vmatpush1.msra.mxu0 0.0
        %2655 = vmatprep.subr.mxu0 0.0
        %2656 = vmatpush1.msra.mxu0 0.0
        %2657 = vmatprep.subr.mxu0 0.0
        %2658 = vmatpush1.msra.mxu0 0.0
        %2659 = vmatprep.subr.mxu0 0.0
        %2660 = vmatpush1.msra.mxu0 0.0
        %2661 = vmatprep.subr.mxu0 0.0
        %2662 = vmatpush1.msra.mxu0 0.0
        %2663 = vmatprep.subr.mxu0 0.0
        %2664 = vmatpush1.msra.mxu0 0.0
        %2665 = vmatprep.subr.mxu0 0.0
        %2666 = vmatpush1.msra.mxu0 0.0
        %2667 = vmatprep.subr.mxu0 0.0
        %2668 = vmatpush1.msra.mxu0 0.0
        %2669 = vmatprep.subr.mxu0 0.0
        %2670 = vmatpush1.msra.mxu0 0.0
        %2671 = vmatprep.subr.mxu0 0.0
        %2672 = vmatpush1.msra.mxu0 0.0
        %2673 = vmatprep.subr.mxu0 0.0
        %2674 = vmatpush1.msra.mxu0 0.0
        %2675 = vmatprep.subr.mxu0 0.0
        %2676 = vmatpush1.msra.mxu0 0.0
        %2677 = vmatprep.subr.mxu0 0.0
        %2678 = vmatpush1.msra.mxu0 0.0
        %2679 = vmatprep.subr.mxu0 0.0
        %2680 = vmatpush1.msra.mxu0 0.0
        %2681 = vmatprep.subr.mxu0 0.0
        %2682 = vmatpush1.msra.mxu0 0.0
        %2683 = vmatprep.subr.mxu0 0.0
        %2684 = vmatpush1.msra.mxu0 0.0
        %2685 = vmatprep.subr.mxu0 0.0
        %2686 = vmatpush1.msra.mxu0 0.0
        %2687 = vmatprep.subr.mxu0 0.0
        %2688 = vmatpush1.msra.mxu0 0.0
        %2689 = vmatprep.subr.mxu0 0.0
        %2690 = vmatpush1.msra.mxu0 0.0
        %2691 = vmatprep.subr.mxu0 0.0
        %2692 = vmatpush1.msra.mxu0 0.0
        %2693 = vmatprep.subr.mxu0 0.0
        %2694 = vmatpush1.msra.mxu0 0.0
        %2695 = vmatprep.mubr.f32.mxu0 0.0
        %2696 = vmatmul.mubr.f32.gmra.mrb[0].mxu0 %v2536
        %v2697 = vpop.f32.mrb[0].mxu0
        %v2698 = vadd.f32 0.0, %v2697
        %v2699 = vpop.f32.mrb[0].mxu0
        %2700 = vmatprep.mubr.f32.mxu0 0.0
        %2701 = vmatmul.mubr.f32.gmra.mrb[0].mxu0 %v2539
        %v2702 = vpop.f32.mrb[0].mxu0
        %v2703 = vadd.f32 0.0, %v2702
        %v2704 = vpop.f32.mrb[0].mxu0
        %2705 = vmatprep.mubr.f32.mxu0 0.0
        %2706 = vmatmul.mubr.f32.gmra.mrb[0].mxu0 %v2542
        %v2707 = vpop.f32.mrb[0].mxu0
        %v2708 = vadd.f32 0.0, %v2707
        %v2709 = vpop.f32.mrb[0].mxu0
        %2710 = vmatprep.mubr.f32.mxu0 0.0
        %2711 = vmatmul.mubr.f32.gmra.mrb[0].mxu0 %v2545
        %v2712 = vpop.f32.mrb[0].mxu0
        %v2713 = vadd.f32 0.0, %v2712
        %v2714 = vpop.f32.mrb[0].mxu0
        %2715 = vmatprep.mubr.f32.mxu0 0.0
        %2716 = vmatmul.mubr.f32.gmra.mrb[0].mxu0 %v2548
        %v2717 = vpop.f32.mrb[0].mxu0
        %v2718 = vadd.f32 0.0, %v2717
        %v2719 = vpop.f32.mrb[0].mxu0
        %2720 = vmatprep.mubr.f32.mxu0 0.0
        %2721 = vmatmul.mubr.f32.gmra.mrb[0].mxu0 %v2551
        %v2722 = vpop.f32.mrb[0].mxu0
        %v2723 = vadd.f32 0.0, %v2722
        %v2724 = vpop.f32.mrb[0].mxu0
        %2725 = vmatprep.mubr.f32.mxu0 0.0
        %2726 = vmatmul.mubr.f32.gmra.mrb[0].mxu0 %v2554
        %v2727 = vpop.f32.mrb[0].mxu0
        %v2728 = vadd.f32 0.0, %v2727
        %v2729 = vpop.f32.mrb[0].mxu0
        %2730 = vmatprep.mubr.f32.mxu0 0.0
        %2731 = vmatmul.mubr.f32.gmra.mrb[0].mxu0 %v2557
        %v2732 = vpop.f32.mrb[0].mxu0
        %v2733 = vadd.f32 0.0, %v2732
        %v2734 = vpop.f32.mrb[0].mxu0
        %2735 = vmatprep.mubr.f32.mxu0 0.0
        %2736 = vmatmul.mubr.f32.gmra.mrb[0].mxu0 %v2560
        %v2737 = vpop.f32.mrb[0].mxu0
        %v2738 = vadd.f32 0.0, %v2737
        %v2739 = vpop.f32.mrb[0].mxu0
        %2740 = vmatprep.mubr.f32.mxu0 0.0
        %2741 = vmatmul.mubr.f32.gmra.mrb[0].mxu0 %v2563
        %v2742 = vpop.f32.mrb[0].mxu0
        %v2743 = vadd.f32 0.0, %v2742
        %v2744 = vpop.f32.mrb[0].mxu0
        %2745 = vmatprep.mubr.f32.mxu0 0.0
        %2746 = vmatmul.mubr.f32.gmra.mrb[0].mxu0 %v2566
        %v2747 = vpop.f32.mrb[0].mxu0
        %v2748 = vadd.f32 0.0, %v2747
        %v2749 = vpop.f32.mrb[0].mxu0
        %2750 = vmatprep.mubr.f32.mxu0 0.0
        %2751 = vmatmul.mubr.f32.gmra.mrb[0].mxu0 %v2569
        %v2752 = vpop.f32.mrb[0].mxu0
        %v2753 = vadd.f32 0.0, %v2752
        %v2754 = vpop.f32.mrb[0].mxu0
        %2755 = vmatprep.mubr.f32.mxu0 0.0
        %2756 = vmatmul.mubr.f32.gmra.mrb[0].mxu0 %v2572
        %v2757 = vpop.f32.mrb[0].mxu0
        %v2758 = vadd.f32 0.0, %v2757
        %v2759 = vpop.f32.mrb[0].mxu0
        %2760 = vmatprep.mubr.f32.mxu0 0.0
        %2761 = vmatmul.mubr.f32.gmra.mrb[0].mxu0 %v2575
        %v2762 = vpop.f32.mrb[0].mxu0
        %v2763 = vadd.f32 0.0, %v2762
        %v2764 = vpop.f32.mrb[0].mxu0
        %2765 = vmatprep.mubr.f32.mxu0 0.0
        %2766 = vmatmul.mubr.f32.gmra.mrb[0].mxu0 %v2578
        %v2767 = vpop.f32.mrb[0].mxu0
        %v2768 = vadd.f32 0.0, %v2767
        %v2769 = vpop.f32.mrb[0].mxu0
        %2770 = vmatprep.mubr.f32.mxu0 0.0
        %2771 = vmatmul.mubr.f32.gmra.mrb[0].mxu0 %v2581
        %v2772 = vpop.f32.mrb[0].mxu0
        %v2773 = vadd.f32 0.0, %v2772
        %v2774 = vpop.f32.mrb[0].mxu0
        %2775 = vmatprep.mubr.f32.mxu0 0.0
        %2776 = vmatmul.mubr.f32.gmra.mrb[0].mxu0 %v2584
        %v2777 = vpop.f32.mrb[0].mxu0
        %v2778 = vadd.f32 0.0, %v2777
        %v2779 = vpop.f32.mrb[0].mxu0
        %2780 = vmatprep.mubr.f32.mxu0 0.0
        %2781 = vmatmul.mubr.f32.gmra.mrb[0].mxu0 %v2587
        %v2782 = vpop.f32.mrb[0].mxu0
        %v2783 = vadd.f32 0.0, %v2782
        %v2784 = vpop.f32.mrb[0].mxu0
        %2785 = vmatprep.mubr.f32.mxu0 0.0
        %2786 = vmatmul.mubr.f32.gmra.mrb[0].mxu0 %v2590
        %v2787 = vpop.f32.mrb[0].mxu0
        %v2788 = vadd.f32 0.0, %v2787
        %v2789 = vpop.f32.mrb[0].mxu0
        %2790 = vmatprep.mubr.f32.mxu0 0.0
        %2791 = vmatmul.mubr.f32.gmra.mrb[0].mxu0 %v2593
        %v2792 = vpop.f32.mrb[0].mxu0
        %v2793 = vadd.f32 0.0, %v2792
        %v2794 = vpop.f32.mrb[0].mxu0
        %2795 = vmatprep.mubr.f32.mxu0 0.0
        %2796 = vmatmul.mubr.f32.gmra.mrb[0].mxu0 %v2596
        %v2797 = vpop.f32.mrb[0].mxu0
        %v2798 = vadd.f32 0.0, %v2797
        %v2799 = vpop.f32.mrb[0].mxu0
        %2800 = vmatprep.mubr.f32.mxu0 0.0
        %2801 = vmatmul.mubr.f32.gmra.mrb[0].mxu0 %v2599
        %v2802 = vpop.f32.mrb[0].mxu0
        %v2803 = vadd.f32 0.0, %v2802
        %v2804 = vpop.f32.mrb[0].mxu0
        %2805 = vmatprep.mubr.f32.mxu0 0.0
        %2806 = vmatmul.mubr.f32.gmra.mrb[0].mxu0 %v2602
        %v2807 = vpop.f32.mrb[0].mxu0
        %v2808 = vadd.f32 0.0, %v2807
        %v2809 = vpop.f32.mrb[0].mxu0
        %2810 = vmatprep.mubr.f32.mxu0 0.0
        %2811 = vmatmul.mubr.f32.gmra.mrb[0].mxu0 %v2605
        %v2812 = vpop.f32.mrb[0].mxu0
        %v2813 = vadd.f32 0.0, %v2812
        %v2814 = vpop.f32.mrb[0].mxu0
        %2815 = vmatprep.mubr.f32.mxu0 0.0
        %2816 = vmatmul.mubr.f32.gmra.mrb[0].mxu0 %v2608
        %v2817 = vpop.f32.mrb[0].mxu0
        %v2818 = vadd.f32 0.0, %v2817
        %v2819 = vpop.f32.mrb[0].mxu0
        %2820 = vmatprep.mubr.f32.mxu0 0.0
        %2821 = vmatmul.mubr.f32.gmra.mrb[0].mxu0 %v2611
        %v2822 = vpop.f32.mrb[0].mxu0
        %v2823 = vadd.f32 0.0, %v2822
        %v2824 = vpop.f32.mrb[0].mxu0
        %2825 = vmatprep.mubr.f32.mxu0 0.0
        %2826 = vmatmul.mubr.f32.gmra.mrb[0].mxu0 %v2614
        %v2827 = vpop.f32.mrb[0].mxu0
        %v2828 = vadd.f32 0.0, %v2827
        %v2829 = vpop.f32.mrb[0].mxu0
        %2830 = vmatprep.mubr.f32.mxu0 0.0
        %2831 = vmatmul.mubr.f32.gmra.mrb[0].mxu0 %v2617
        %v2832 = vpop.f32.mrb[0].mxu0
        %v2833 = vadd.f32 0.0, %v2832
        %v2834 = vpop.f32.mrb[0].mxu0
        %2835 = vmatprep.mubr.f32.mxu0 0.0
        %2836 = vmatmul.mubr.f32.gmra.mrb[0].mxu0 %v2620
        %v2837 = vpop.f32.mrb[0].mxu0
        %v2838 = vadd.f32 0.0, %v2837
        %v2839 = vpop.f32.mrb[0].mxu0
        %2840 = vmatprep.mubr.f32.mxu0 0.0
        %2841 = vmatmul.mubr.f32.gmra.mrb[0].mxu0 %v2623
        %v2842 = vpop.f32.mrb[0].mxu0
        %v2843 = vadd.f32 0.0, %v2842
        %v2844 = vpop.f32.mrb[0].mxu0
        %2845 = vmatprep.mubr.f32.mxu0 0.0
        %2846 = vmatmul.mubr.f32.gmra.mrb[0].mxu0 %v2626
        %v2847 = vpop.f32.mrb[0].mxu0
        %v2848 = vadd.f32 0.0, %v2847
        %v2849 = vpop.f32.mrb[0].mxu0
        %2850 = vmatprep.mubr.f32.mxu0 0.0
        %2851 = vmatmul.mubr.f32.gmra.mrb[0].mxu0 %v2629
        %v2852 = vpop.f32.mrb[0].mxu0
        %v2853 = vadd.f32 0.0, %v2852
        %v2854 = vpop.f32.mrb[0].mxu0
        %2855 = vdwg.mxu0
        %v2856 = vadd.f32 %v2467, %v2698
        %v2857 = vadd.f32 %v2468, %v2703
        %v2858 = vadd.f32 %v2469, %v2708
        %v2859 = vadd.f32 %v2470, %v2713
        %v2860 = vadd.f32 %v2471, %v2718
        %v2861 = vadd.f32 %v2472, %v2723
        %v2862 = vadd.f32 %v2473, %v2728
        %v2863 = vadd.f32 %v2474, %v2733
        %v2864 = vadd.f32 %v2475, %v2738
        %v2865 = vadd.f32 %v2476, %v2743
        %v2866 = vadd.f32 %v2477, %v2748
        %v2867 = vadd.f32 %v2478, %v2753
        %v2868 = vadd.f32 %v2479, %v2758
        %v2869 = vadd.f32 %v2480, %v2763
        %v2870 = vadd.f32 %v2481, %v2768
        %v2871 = vadd.f32 %v2482, %v2773
        %v2872 = vadd.f32 %v2483, %v2778
        %v2873 = vadd.f32 %v2484, %v2783
        %v2874 = vadd.f32 %v2485, %v2788
        %v2875 = vadd.f32 %v2486, %v2793
        %v2876 = vadd.f32 %v2487, %v2798
        %v2877 = vadd.f32 %v2488, %v2803
        %v2878 = vadd.f32 %v2489, %v2808
        %v2879 = vadd.f32 %v2490, %v2813
        %v2880 = vadd.f32 %v2491, %v2818
        %v2881 = vadd.f32 %v2492, %v2823
        %v2882 = vadd.f32 %v2493, %v2828
        %v2883 = vadd.f32 %v2494, %v2833
        %v2884 = vadd.f32 %v2495, %v2838
        %v2885 = vadd.f32 %v2496, %v2843
        %v2886 = vadd.f32 %v2497, %v2848
        %v2887 = vadd.f32 %v2498, %v2853
        %v2888 = vld [vmem:[%s2501 + $0x1] sm:$0xff]
        %v2889 = vld [vmem:[%s2501 + $0x9] sm:$0xff]
        %v2890 = vld [vmem:[%s2501 + $0x19] sm:$0xff]
        %v2891 = vld [vmem:[%s2501 + $0x21] sm:$0xff]
        %v2892 = vld [vmem:[%s2501 + $0x31] sm:$0xff]
        %v2893 = vld [vmem:[%s2501 + $0x39] sm:$0xff]
        %v2894 = vld [vmem:[%s2501 + $0x49] sm:$0xff]
        %v2895 = vld [vmem:[%s2501 + $0x51] sm:$0xff]
        %v2896 = vld [vmem:[%s2501 + $0x61] sm:$0xff]
        %v2897 = vld [vmem:[%s2501 + $0x69] sm:$0xff]
        %v2898 = vld [vmem:[%s2501 + $0x79] sm:$0xff]
        %v2899 = vld [vmem:[%s2501 + $0x81] sm:$0xff]
        %v2900 = vld [vmem:[%s2501 + $0x91] sm:$0xff]
        %v2901 = vld [vmem:[%s2501 + $0x99] sm:$0xff]
        %v2902 = vld [vmem:[%s2501 + $0xa9] sm:$0xff]
        %v2903 = vld [vmem:[%s2501 + $0xb1] sm:$0xff]
        %v2904 = vld [vmem:[%s2501 + $0xc1] sm:$0xff]
        %v2905 = vld [vmem:[%s2501 + $0xc9] sm:$0xff]
        %v2906 = vld [vmem:[%s2501 + $0xd9] sm:$0xff]
        %v2907 = vld [vmem:[%s2501 + $0xe1] sm:$0xff]
        %v2908 = vld [vmem:[%s2501 + $0xf1] sm:$0xff]
        %v2909 = vld [vmem:[%s2501 + $0xf9] sm:$0xff]
        %v2910 = vld [vmem:[%s2501 + $0x109] sm:$0xff]
        %v2911 = vld [vmem:[%s2501 + $0x111] sm:$0xff]
        %v2912 = vld [vmem:[%s2501 + $0x121] sm:$0xff]
        %v2913 = vld [vmem:[%s2501 + $0x129] sm:$0xff]
        %v2914 = vld [vmem:[%s2501 + $0x139] sm:$0xff]
        %v2915 = vld [vmem:[%s2501 + $0x141] sm:$0xff]
        %v2916 = vld [vmem:[%s2501 + $0x151] sm:$0xff]
        %v2917 = vld [vmem:[%s2501 + $0x159] sm:$0xff]
        %v2918 = vld [vmem:[%s2501 + $0x169] sm:$0xff]
        %v2919 = vld [vmem:[%s2501 + $0x171] sm:$0xff]
        %v2920 = vld [vmem:[#allocation5 + $0x38] sm:$0xff]
        %v2922 = vsel %vm309, %v2888, 0
        %v2925 = vsel %vm309, %v2889, 0
        %v2928 = vsel %vm309, %v2890, 0
        %v2931 = vsel %vm309, %v2891, 0
        %v2934 = vsel %vm309, %v2892, 0
        %v2937 = vsel %vm309, %v2893, 0
        %v2940 = vsel %vm309, %v2894, 0
        %v2943 = vsel %vm309, %v2895, 0
        %v2946 = vsel %vm309, %v2896, 0
        %v2949 = vsel %vm309, %v2897, 0
        %v2952 = vsel %vm309, %v2898, 0
        %v2955 = vsel %vm309, %v2899, 0
        %v2958 = vsel %vm309, %v2900, 0
        %v2961 = vsel %vm309, %v2901, 0
        %v2964 = vsel %vm309, %v2902, 0
        %v2967 = vsel %vm309, %v2903, 0
        %v2970 = vsel %vm309, %v2904, 0
        %v2973 = vsel %vm309, %v2905, 0
        %v2976 = vsel %vm309, %v2906, 0
        %v2979 = vsel %vm309, %v2907, 0
        %v2982 = vsel %vm309, %v2908, 0
        %v2985 = vsel %vm309, %v2909, 0
        %v2988 = vsel %vm309, %v2910, 0
        %v2991 = vsel %vm309, %v2911, 0
        %v2994 = vsel %vm309, %v2912, 0
        %v2997 = vsel %vm309, %v2913, 0
        %v3000 = vsel %vm309, %v2914, 0
        %v3003 = vsel %vm309, %v2915, 0
        %v3006 = vsel %vm309, %v2916, 0
        %v3009 = vsel %vm309, %v2917, 0
        %v3012 = vsel %vm309, %v2918, 0
        %v3015 = vsel %vm309, %v2919, 0
        %3017 = vmatprep.subr.mxu0 0.0
        %3018 = vmatpush1.msra.mxu0 %v2920
        %3019 = vmatprep.subr.mxu0 0.0
        %3020 = vmatpush1.msra.mxu0 0.0
        %3021 = vmatprep.subr.mxu0 0.0
        %3022 = vmatpush1.msra.mxu0 0.0
        %3023 = vmatprep.subr.mxu0 0.0
        %3024 = vmatpush1.msra.mxu0 0.0
        %3025 = vmatprep.subr.mxu0 0.0
        %3026 = vmatpush1.msra.mxu0 0.0
        %3027 = vmatprep.subr.mxu0 0.0
        %3028 = vmatpush1.msra.mxu0 0.0
        %3029 = vmatprep.subr.mxu0 0.0
        %3030 = vmatpush1.msra.mxu0 0.0
        %3031 = vmatprep.subr.mxu0 0.0
        %3032 = vmatpush1.msra.mxu0 0.0
        %3033 = vmatprep.subr.mxu0 0.0
        %3034 = vmatpush1.msra.mxu0 0.0
        %3035 = vmatprep.subr.mxu0 0.0
        %3036 = vmatpush1.msra.mxu0 0.0
        %3037 = vmatprep.subr.mxu0 0.0
        %3038 = vmatpush1.msra.mxu0 0.0
        %3039 = vmatprep.subr.mxu0 0.0
        %3040 = vmatpush1.msra.mxu0 0.0
        %3041 = vmatprep.subr.mxu0 0.0
        %3042 = vmatpush1.msra.mxu0 0.0
        %3043 = vmatprep.subr.mxu0 0.0
        %3044 = vmatpush1.msra.mxu0 0.0
        %3045 = vmatprep.subr.mxu0 0.0
        %3046 = vmatpush1.msra.mxu0 0.0
        %3047 = vmatprep.subr.mxu0 0.0
        %3048 = vmatpush1.msra.mxu0 0.0
        %3049 = vmatprep.subr.mxu0 0.0
        %3050 = vmatpush1.msra.mxu0 0.0
        %3051 = vmatprep.subr.mxu0 0.0
        %3052 = vmatpush1.msra.mxu0 0.0
        %3053 = vmatprep.subr.mxu0 0.0
        %3054 = vmatpush1.msra.mxu0 0.0
        %3055 = vmatprep.subr.mxu0 0.0
        %3056 = vmatpush1.msra.mxu0 0.0
        %3057 = vmatprep.subr.mxu0 0.0
        %3058 = vmatpush1.msra.mxu0 0.0
        %3059 = vmatprep.subr.mxu0 0.0
        %3060 = vmatpush1.msra.mxu0 0.0
        %3061 = vmatprep.subr.mxu0 0.0
        %3062 = vmatpush1.msra.mxu0 0.0
        %3063 = vmatprep.subr.mxu0 0.0
        %3064 = vmatpush1.msra.mxu0 0.0
        %3065 = vmatprep.subr.mxu0 0.0
        %3066 = vmatpush1.msra.mxu0 0.0
        %3067 = vmatprep.subr.mxu0 0.0
        %3068 = vmatpush1.msra.mxu0 0.0
        %3069 = vmatprep.subr.mxu0 0.0
        %3070 = vmatpush1.msra.mxu0 0.0
        %3071 = vmatprep.subr.mxu0 0.0
        %3072 = vmatpush1.msra.mxu0 0.0
        %3073 = vmatprep.subr.mxu0 0.0
        %3074 = vmatpush1.msra.mxu0 0.0
        %3075 = vmatprep.subr.mxu0 0.0
        %3076 = vmatpush1.msra.mxu0 0.0
        %3077 = vmatprep.subr.mxu0 0.0
        %3078 = vmatpush1.msra.mxu0 0.0
        %3079 = vmatprep.subr.mxu0 0.0
        %3080 = vmatpush1.msra.mxu0 0.0
        %3081 = vmatprep.mubr.f32.mxu0 0.0
        %3082 = vmatmul.mubr.f32.gmra.mrb[0].mxu0 %v2922
        %v3083 = vpop.f32.mrb[0].mxu0
        %v3084 = vadd.f32 0.0, %v3083
        %v3085 = vpop.f32.mrb[0].mxu0
        %3086 = vmatprep.mubr.f32.mxu0 0.0
        %3087 = vmatmul.mubr.f32.gmra.mrb[0].mxu0 %v2925
        %v3088 = vpop.f32.mrb[0].mxu0
        %v3089 = vadd.f32 0.0, %v3088
        %v3090 = vpop.f32.mrb[0].mxu0
        %3091 = vmatprep.mubr.f32.mxu0 0.0
        %3092 = vmatmul.mubr.f32.gmra.mrb[0].mxu0 %v2928
        %v3093 = vpop.f32.mrb[0].mxu0
        %v3094 = vadd.f32 0.0, %v3093
        %v3095 = vpop.f32.mrb[0].mxu0
        %3096 = vmatprep.mubr.f32.mxu0 0.0
        %3097 = vmatmul.mubr.f32.gmra.mrb[0].mxu0 %v2931
        %v3098 = vpop.f32.mrb[0].mxu0
        %v3099 = vadd.f32 0.0, %v3098
        %v3100 = vpop.f32.mrb[0].mxu0
        %3101 = vmatprep.mubr.f32.mxu0 0.0
        %3102 = vmatmul.mubr.f32.gmra.mrb[0].mxu0 %v2934
        %v3103 = vpop.f32.mrb[0].mxu0
        %v3104 = vadd.f32 0.0, %v3103
        %v3105 = vpop.f32.mrb[0].mxu0
        %3106 = vmatprep.mubr.f32.mxu0 0.0
        %3107 = vmatmul.mubr.f32.gmra.mrb[0].mxu0 %v2937
        %v3108 = vpop.f32.mrb[0].mxu0
        %v3109 = vadd.f32 0.0, %v3108
        %v3110 = vpop.f32.mrb[0].mxu0
        %3111 = vmatprep.mubr.f32.mxu0 0.0
        %3112 = vmatmul.mubr.f32.gmra.mrb[0].mxu0 %v2940
        %v3113 = vpop.f32.mrb[0].mxu0
        %v3114 = vadd.f32 0.0, %v3113
        %v3115 = vpop.f32.mrb[0].mxu0
        %3116 = vmatprep.mubr.f32.mxu0 0.0
        %3117 = vmatmul.mubr.f32.gmra.mrb[0].mxu0 %v2943
        %v3118 = vpop.f32.mrb[0].mxu0
        %v3119 = vadd.f32 0.0, %v3118
        %v3120 = vpop.f32.mrb[0].mxu0
        %3121 = vmatprep.mubr.f32.mxu0 0.0
        %3122 = vmatmul.mubr.f32.gmra.mrb[0].mxu0 %v2946
        %v3123 = vpop.f32.mrb[0].mxu0
        %v3124 = vadd.f32 0.0, %v3123
        %v3125 = vpop.f32.mrb[0].mxu0
        %3126 = vmatprep.mubr.f32.mxu0 0.0
        %3127 = vmatmul.mubr.f32.gmra.mrb[0].mxu0 %v2949
        %v3128 = vpop.f32.mrb[0].mxu0
        %v3129 = vadd.f32 0.0, %v3128
        %v3130 = vpop.f32.mrb[0].mxu0
        %3131 = vmatprep.mubr.f32.mxu0 0.0
        %3132 = vmatmul.mubr.f32.gmra.mrb[0].mxu0 %v2952
        %v3133 = vpop.f32.mrb[0].mxu0
        %v3134 = vadd.f32 0.0, %v3133
        %v3135 = vpop.f32.mrb[0].mxu0
        %3136 = vmatprep.mubr.f32.mxu0 0.0
        %3137 = vmatmul.mubr.f32.gmra.mrb[0].mxu0 %v2955
        %v3138 = vpop.f32.mrb[0].mxu0
        %v3139 = vadd.f32 0.0, %v3138
        %v3140 = vpop.f32.mrb[0].mxu0
        %3141 = vmatprep.mubr.f32.mxu0 0.0
        %3142 = vmatmul.mubr.f32.gmra.mrb[0].mxu0 %v2958
        %v3143 = vpop.f32.mrb[0].mxu0
        %v3144 = vadd.f32 0.0, %v3143
        %v3145 = vpop.f32.mrb[0].mxu0
        %3146 = vmatprep.mubr.f32.mxu0 0.0
        %3147 = vmatmul.mubr.f32.gmra.mrb[0].mxu0 %v2961
        %v3148 = vpop.f32.mrb[0].mxu0
        %v3149 = vadd.f32 0.0, %v3148
        %v3150 = vpop.f32.mrb[0].mxu0
        %3151 = vmatprep.mubr.f32.mxu0 0.0
        %3152 = vmatmul.mubr.f32.gmra.mrb[0].mxu0 %v2964
        %v3153 = vpop.f32.mrb[0].mxu0
        %v3154 = vadd.f32 0.0, %v3153
        %v3155 = vpop.f32.mrb[0].mxu0
        %3156 = vmatprep.mubr.f32.mxu0 0.0
        %3157 = vmatmul.mubr.f32.gmra.mrb[0].mxu0 %v2967
        %v3158 = vpop.f32.mrb[0].mxu0
        %v3159 = vadd.f32 0.0, %v3158
        %v3160 = vpop.f32.mrb[0].mxu0
        %3161 = vmatprep.mubr.f32.mxu0 0.0
        %3162 = vmatmul.mubr.f32.gmra.mrb[0].mxu0 %v2970
        %v3163 = vpop.f32.mrb[0].mxu0
        %v3164 = vadd.f32 0.0, %v3163
        %v3165 = vpop.f32.mrb[0].mxu0
        %3166 = vmatprep.mubr.f32.mxu0 0.0
        %3167 = vmatmul.mubr.f32.gmra.mrb[0].mxu0 %v2973
        %v3168 = vpop.f32.mrb[0].mxu0
        %v3169 = vadd.f32 0.0, %v3168
        %v3170 = vpop.f32.mrb[0].mxu0
        %3171 = vmatprep.mubr.f32.mxu0 0.0
        %3172 = vmatmul.mubr.f32.gmra.mrb[0].mxu0 %v2976
        %v3173 = vpop.f32.mrb[0].mxu0
        %v3174 = vadd.f32 0.0, %v3173
        %v3175 = vpop.f32.mrb[0].mxu0
        %3176 = vmatprep.mubr.f32.mxu0 0.0
        %3177 = vmatmul.mubr.f32.gmra.mrb[0].mxu0 %v2979
        %v3178 = vpop.f32.mrb[0].mxu0
        %v3179 = vadd.f32 0.0, %v3178
        %v3180 = vpop.f32.mrb[0].mxu0
        %3181 = vmatprep.mubr.f32.mxu0 0.0
        %3182 = vmatmul.mubr.f32.gmra.mrb[0].mxu0 %v2982
        %v3183 = vpop.f32.mrb[0].mxu0
        %v3184 = vadd.f32 0.0, %v3183
        %v3185 = vpop.f32.mrb[0].mxu0
        %3186 = vmatprep.mubr.f32.mxu0 0.0
        %3187 = vmatmul.mubr.f32.gmra.mrb[0].mxu0 %v2985
        %v3188 = vpop.f32.mrb[0].mxu0
        %v3189 = vadd.f32 0.0, %v3188
        %v3190 = vpop.f32.mrb[0].mxu0
        %3191 = vmatprep.mubr.f32.mxu0 0.0
        %3192 = vmatmul.mubr.f32.gmra.mrb[0].mxu0 %v2988
        %v3193 = vpop.f32.mrb[0].mxu0
        %v3194 = vadd.f32 0.0, %v3193
        %v3195 = vpop.f32.mrb[0].mxu0
        %3196 = vmatprep.mubr.f32.mxu0 0.0
        %3197 = vmatmul.mubr.f32.gmra.mrb[0].mxu0 %v2991
        %v3198 = vpop.f32.mrb[0].mxu0
        %v3199 = vadd.f32 0.0, %v3198
        %v3200 = vpop.f32.mrb[0].mxu0
        %3201 = vmatprep.mubr.f32.mxu0 0.0
        %3202 = vmatmul.mubr.f32.gmra.mrb[0].mxu0 %v2994
        %v3203 = vpop.f32.mrb[0].mxu0
        %v3204 = vadd.f32 0.0, %v3203
        %v3205 = vpop.f32.mrb[0].mxu0
        %3206 = vmatprep.mubr.f32.mxu0 0.0
        %3207 = vmatmul.mubr.f32.gmra.mrb[0].mxu0 %v2997
        %v3208 = vpop.f32.mrb[0].mxu0
        %v3209 = vadd.f32 0.0, %v3208
        %v3210 = vpop.f32.mrb[0].mxu0
        %3211 = vmatprep.mubr.f32.mxu0 0.0
        %3212 = vmatmul.mubr.f32.gmra.mrb[0].mxu0 %v3000
        %v3213 = vpop.f32.mrb[0].mxu0
        %v3214 = vadd.f32 0.0, %v3213
        %v3215 = vpop.f32.mrb[0].mxu0
        %3216 = vmatprep.mubr.f32.mxu0 0.0
        %3217 = vmatmul.mubr.f32.gmra.mrb[0].mxu0 %v3003
        %v3218 = vpop.f32.mrb[0].mxu0
        %v3219 = vadd.f32 0.0, %v3218
        %v3220 = vpop.f32.mrb[0].mxu0
        %3221 = vmatprep.mubr.f32.mxu0 0.0
        %3222 = vmatmul.mubr.f32.gmra.mrb[0].mxu0 %v3006
        %v3223 = vpop.f32.mrb[0].mxu0
        %v3224 = vadd.f32 0.0, %v3223
        %v3225 = vpop.f32.mrb[0].mxu0
        %3226 = vmatprep.mubr.f32.mxu0 0.0
        %3227 = vmatmul.mubr.f32.gmra.mrb[0].mxu0 %v3009
        %v3228 = vpop.f32.mrb[0].mxu0
        %v3229 = vadd.f32 0.0, %v3228
        %v3230 = vpop.f32.mrb[0].mxu0
        %3231 = vmatprep.mubr.f32.mxu0 0.0
        %3232 = vmatmul.mubr.f32.gmra.mrb[0].mxu0 %v3012
        %v3233 = vpop.f32.mrb[0].mxu0
        %v3234 = vadd.f32 0.0, %v3233
        %v3235 = vpop.f32.mrb[0].mxu0
        %3236 = vmatprep.mubr.f32.mxu0 0.0
        %3237 = vmatmul.mubr.f32.gmra.mrb[0].mxu0 %v3015
        %v3238 = vpop.f32.mrb[0].mxu0
        %v3239 = vadd.f32 0.0, %v3238
        %v3240 = vpop.f32.mrb[0].mxu0
        %3241 = vdwg.mxu0
        %v3242 = vadd.f32 %v2856, %v3084
        %v3243 = vadd.f32 %v2857, %v3089
        %v3244 = vadd.f32 %v2858, %v3094
        %v3245 = vadd.f32 %v2859, %v3099
        %v3246 = vadd.f32 %v2860, %v3104
        %v3247 = vadd.f32 %v2861, %v3109
        %v3248 = vadd.f32 %v2862, %v3114
        %v3249 = vadd.f32 %v2863, %v3119
        %v3250 = vadd.f32 %v2864, %v3124
        %v3251 = vadd.f32 %v2865, %v3129
        %v3252 = vadd.f32 %v2866, %v3134
        %v3253 = vadd.f32 %v2867, %v3139
        %v3254 = vadd.f32 %v2868, %v3144
        %v3255 = vadd.f32 %v2869, %v3149
        %v3256 = vadd.f32 %v2870, %v3154
        %v3257 = vadd.f32 %v2871, %v3159
        %v3258 = vadd.f32 %v2872, %v3164
        %v3259 = vadd.f32 %v2873, %v3169
        %v3260 = vadd.f32 %v2874, %v3174
        %v3261 = vadd.f32 %v2875, %v3179
        %v3262 = vadd.f32 %v2876, %v3184
        %v3263 = vadd.f32 %v2877, %v3189
        %v3264 = vadd.f32 %v2878, %v3194
        %v3265 = vadd.f32 %v2879, %v3199
        %v3266 = vadd.f32 %v2880, %v3204
        %v3267 = vadd.f32 %v2881, %v3209
        %v3268 = vadd.f32 %v2882, %v3214
        %v3269 = vadd.f32 %v2883, %v3219
        %v3270 = vadd.f32 %v2884, %v3224
        %v3271 = vadd.f32 %v2885, %v3229
        %v3272 = vadd.f32 %v2886, %v3234
        %v3273 = vadd.f32 %v2887, %v3239
        %v3274 = vld [vmem:[%s2501 + $0x2] sm:$0xff]
        %v3275 = vld [vmem:[%s2501 + $0xa] sm:$0xff]
        %v3276 = vld [vmem:[%s2501 + $0x1a] sm:$0xff]
        %v3277 = vld [vmem:[%s2501 + $0x22] sm:$0xff]
        %v3278 = vld [vmem:[%s2501 + $0x32] sm:$0xff]
        %v3279 = vld [vmem:[%s2501 + $0x3a] sm:$0xff]
        %v3280 = vld [vmem:[%s2501 + $0x4a] sm:$0xff]
        %v3281 = vld [vmem:[%s2501 + $0x52] sm:$0xff]
        %v3282 = vld [vmem:[%s2501 + $0x62] sm:$0xff]
        %v3283 = vld [vmem:[%s2501 + $0x6a] sm:$0xff]
        %v3284 = vld [vmem:[%s2501 + $0x7a] sm:$0xff]
        %v3285 = vld [vmem:[%s2501 + $0x82] sm:$0xff]
        %v3286 = vld [vmem:[%s2501 + $0x92] sm:$0xff]
        %v3287 = vld [vmem:[%s2501 + $0x9a] sm:$0xff]
        %v3288 = vld [vmem:[%s2501 + $0xaa] sm:$0xff]
        %v3289 = vld [vmem:[%s2501 + $0xb2] sm:$0xff]
        %v3290 = vld [vmem:[%s2501 + $0xc2] sm:$0xff]
        %v3291 = vld [vmem:[%s2501 + $0xca] sm:$0xff]
        %v3292 = vld [vmem:[%s2501 + $0xda] sm:$0xff]
        %v3293 = vld [vmem:[%s2501 + $0xe2] sm:$0xff]
        %v3294 = vld [vmem:[%s2501 + $0xf2] sm:$0xff]
        %v3295 = vld [vmem:[%s2501 + $0xfa] sm:$0xff]
        %v3296 = vld [vmem:[%s2501 + $0x10a] sm:$0xff]
        %v3297 = vld [vmem:[%s2501 + $0x112] sm:$0xff]
        %v3298 = vld [vmem:[%s2501 + $0x122] sm:$0xff]
        %v3299 = vld [vmem:[%s2501 + $0x12a] sm:$0xff]
        %v3300 = vld [vmem:[%s2501 + $0x13a] sm:$0xff]
        %v3301 = vld [vmem:[%s2501 + $0x142] sm:$0xff]
        %v3302 = vld [vmem:[%s2501 + $0x152] sm:$0xff]
        %v3303 = vld [vmem:[%s2501 + $0x15a] sm:$0xff]
        %v3304 = vld [vmem:[%s2501 + $0x16a] sm:$0xff]
        %v3305 = vld [vmem:[%s2501 + $0x172] sm:$0xff]
        %v3306 = vld [vmem:[#allocation5 + $0x40] sm:$0xff]
        %v3308 = vsel %vm309, %v3274, 0
        %v3311 = vsel %vm309, %v3275, 0
        %v3314 = vsel %vm309, %v3276, 0
        %v3317 = vsel %vm309, %v3277, 0
        %v3320 = vsel %vm309, %v3278, 0
        %v3323 = vsel %vm309, %v3279, 0
        %v3326 = vsel %vm309, %v3280, 0
        %v3329 = vsel %vm309, %v3281, 0
        %v3332 = vsel %vm309, %v3282, 0
        %v3335 = vsel %vm309, %v3283, 0
        %v3338 = vsel %vm309, %v3284, 0
        %v3341 = vsel %vm309, %v3285, 0
        %v3344 = vsel %vm309, %v3286, 0
        %v3347 = vsel %vm309, %v3287, 0
        %v3350 = vsel %vm309, %v3288, 0
        %v3353 = vsel %vm309, %v3289, 0
        %v3356 = vsel %vm309, %v3290, 0
        %v3359 = vsel %vm309, %v3291, 0
        %v3362 = vsel %vm309, %v3292, 0
        %v3365 = vsel %vm309, %v3293, 0
        %v3368 = vsel %vm309, %v3294, 0
        %v3371 = vsel %vm309, %v3295, 0
        %v3374 = vsel %vm309, %v3296, 0
        %v3377 = vsel %vm309, %v3297, 0
        %v3380 = vsel %vm309, %v3298, 0
        %v3383 = vsel %vm309, %v3299, 0
        %v3386 = vsel %vm309, %v3300, 0
        %v3389 = vsel %vm309, %v3301, 0
        %v3392 = vsel %vm309, %v3302, 0
        %v3395 = vsel %vm309, %v3303, 0
        %v3398 = vsel %vm309, %v3304, 0
        %v3401 = vsel %vm309, %v3305, 0
        %3403 = vmatprep.subr.mxu0 0.0
        %3404 = vmatpush1.msra.mxu0 %v3306
        %3405 = vmatprep.subr.mxu0 0.0
        %3406 = vmatpush1.msra.mxu0 0.0
        %3407 = vmatprep.subr.mxu0 0.0
        %3408 = vmatpush1.msra.mxu0 0.0
        %3409 = vmatprep.subr.mxu0 0.0
        %3410 = vmatpush1.msra.mxu0 0.0
        %3411 = vmatprep.subr.mxu0 0.0
        %3412 = vmatpush1.msra.mxu0 0.0
        %3413 = vmatprep.subr.mxu0 0.0
        %3414 = vmatpush1.msra.mxu0 0.0
        %3415 = vmatprep.subr.mxu0 0.0
        %3416 = vmatpush1.msra.mxu0 0.0
        %3417 = vmatprep.subr.mxu0 0.0
        %3418 = vmatpush1.msra.mxu0 0.0
        %3419 = vmatprep.subr.mxu0 0.0
        %3420 = vmatpush1.msra.mxu0 0.0
        %3421 = vmatprep.subr.mxu0 0.0
        %3422 = vmatpush1.msra.mxu0 0.0
        %3423 = vmatprep.subr.mxu0 0.0
        %3424 = vmatpush1.msra.mxu0 0.0
        %3425 = vmatprep.subr.mxu0 0.0
        %3426 = vmatpush1.msra.mxu0 0.0
        %3427 = vmatprep.subr.mxu0 0.0
        %3428 = vmatpush1.msra.mxu0 0.0
        %3429 = vmatprep.subr.mxu0 0.0
        %3430 = vmatpush1.msra.mxu0 0.0
        %3431 = vmatprep.subr.mxu0 0.0
        %3432 = vmatpush1.msra.mxu0 0.0
        %3433 = vmatprep.subr.mxu0 0.0
        %3434 = vmatpush1.msra.mxu0 0.0
        %3435 = vmatprep.subr.mxu0 0.0
        %3436 = vmatpush1.msra.mxu0 0.0
        %3437 = vmatprep.subr.mxu0 0.0
        %3438 = vmatpush1.msra.mxu0 0.0
        %3439 = vmatprep.subr.mxu0 0.0
        %3440 = vmatpush1.msra.mxu0 0.0
        %3441 = vmatprep.subr.mxu0 0.0
        %3442 = vmatpush1.msra.mxu0 0.0
        %3443 = vmatprep.subr.mxu0 0.0
        %3444 = vmatpush1.msra.mxu0 0.0
        %3445 = vmatprep.subr.mxu0 0.0
        %3446 = vmatpush1.msra.mxu0 0.0
        %3447 = vmatprep.subr.mxu0 0.0
        %3448 = vmatpush1.msra.mxu0 0.0
        %3449 = vmatprep.subr.mxu0 0.0
        %3450 = vmatpush1.msra.mxu0 0.0
        %3451 = vmatprep.subr.mxu0 0.0
        %3452 = vmatpush1.msra.mxu0 0.0
        %3453 = vmatprep.subr.mxu0 0.0
        %3454 = vmatpush1.msra.mxu0 0.0
        %3455 = vmatprep.subr.mxu0 0.0
        %3456 = vmatpush1.msra.mxu0 0.0
        %3457 = vmatprep.subr.mxu0 0.0
        %3458 = vmatpush1.msra.mxu0 0.0
        %3459 = vmatprep.subr.mxu0 0.0
        %3460 = vmatpush1.msra.mxu0 0.0
        %3461 = vmatprep.subr.mxu0 0.0
        %3462 = vmatpush1.msra.mxu0 0.0
        %3463 = vmatprep.subr.mxu0 0.0
        %3464 = vmatpush1.msra.mxu0 0.0
        %3465 = vmatprep.subr.mxu0 0.0
        %3466 = vmatpush1.msra.mxu0 0.0
        %3467 = vmatprep.mubr.f32.mxu0 0.0
        %3468 = vmatmul.mubr.f32.gmra.mrb[0].mxu0 %v3308
        %v3469 = vpop.f32.mrb[0].mxu0
        %v3470 = vadd.f32 0.0, %v3469
        %v3471 = vpop.f32.mrb[0].mxu0
        %3472 = vmatprep.mubr.f32.mxu0 0.0
        %3473 = vmatmul.mubr.f32.gmra.mrb[0].mxu0 %v3311
        %v3474 = vpop.f32.mrb[0].mxu0
        %v3475 = vadd.f32 0.0, %v3474
        %v3476 = vpop.f32.mrb[0].mxu0
        %3477 = vmatprep.mubr.f32.mxu0 0.0
        %3478 = vmatmul.mubr.f32.gmra.mrb[0].mxu0 %v3314
        %v3479 = vpop.f32.mrb[0].mxu0
        %v3480 = vadd.f32 0.0, %v3479
        %v3481 = vpop.f32.mrb[0].mxu0
        %3482 = vmatprep.mubr.f32.mxu0 0.0
        %3483 = vmatmul.mubr.f32.gmra.mrb[0].mxu0 %v3317
        %v3484 = vpop.f32.mrb[0].mxu0
        %v3485 = vadd.f32 0.0, %v3484
        %v3486 = vpop.f32.mrb[0].mxu0
        %3487 = vmatprep.mubr.f32.mxu0 0.0
        %3488 = vmatmul.mubr.f32.gmra.mrb[0].mxu0 %v3320
        %v3489 = vpop.f32.mrb[0].mxu0
        %v3490 = vadd.f32 0.0, %v3489
        %v3491 = vpop.f32.mrb[0].mxu0
        %3492 = vmatprep.mubr.f32.mxu0 0.0
        %3493 = vmatmul.mubr.f32.gmra.mrb[0].mxu0 %v3323
        %v3494 = vpop.f32.mrb[0].mxu0
        %v3495 = vadd.f32 0.0, %v3494
        %v3496 = vpop.f32.mrb[0].mxu0
        %3497 = vmatprep.mubr.f32.mxu0 0.0
        %3498 = vmatmul.mubr.f32.gmra.mrb[0].mxu0 %v3326
        %v3499 = vpop.f32.mrb[0].mxu0
        %v3500 = vadd.f32 0.0, %v3499
        %v3501 = vpop.f32.mrb[0].mxu0
        %3502 = vmatprep.mubr.f32.mxu0 0.0
        %3503 = vmatmul.mubr.f32.gmra.mrb[0].mxu0 %v3329
        %v3504 = vpop.f32.mrb[0].mxu0
        %v3505 = vadd.f32 0.0, %v3504
        %v3506 = vpop.f32.mrb[0].mxu0
        %3507 = vmatprep.mubr.f32.mxu0 0.0
        %3508 = vmatmul.mubr.f32.gmra.mrb[0].mxu0 %v3332
        %v3509 = vpop.f32.mrb[0].mxu0
        %v3510 = vadd.f32 0.0, %v3509
        %v3511 = vpop.f32.mrb[0].mxu0
        %3512 = vmatprep.mubr.f32.mxu0 0.0
        %3513 = vmatmul.mubr.f32.gmra.mrb[0].mxu0 %v3335
        %v3514 = vpop.f32.mrb[0].mxu0
        %v3515 = vadd.f32 0.0, %v3514
        %v3516 = vpop.f32.mrb[0].mxu0
        %3517 = vmatprep.mubr.f32.mxu0 0.0
        %3518 = vmatmul.mubr.f32.gmra.mrb[0].mxu0 %v3338
        %v3519 = vpop.f32.mrb[0].mxu0
        %v3520 = vadd.f32 0.0, %v3519
        %v3521 = vpop.f32.mrb[0].mxu0
        %3522 = vmatprep.mubr.f32.mxu0 0.0
        %3523 = vmatmul.mubr.f32.gmra.mrb[0].mxu0 %v3341
        %v3524 = vpop.f32.mrb[0].mxu0
        %v3525 = vadd.f32 0.0, %v3524
        %v3526 = vpop.f32.mrb[0].mxu0
        %3527 = vmatprep.mubr.f32.mxu0 0.0
        %3528 = vmatmul.mubr.f32.gmra.mrb[0].mxu0 %v3344
        %v3529 = vpop.f32.mrb[0].mxu0
        %v3530 = vadd.f32 0.0, %v3529
        %v3531 = vpop.f32.mrb[0].mxu0
        %3532 = vmatprep.mubr.f32.mxu0 0.0
        %3533 = vmatmul.mubr.f32.gmra.mrb[0].mxu0 %v3347
        %v3534 = vpop.f32.mrb[0].mxu0
        %v3535 = vadd.f32 0.0, %v3534
        %v3536 = vpop.f32.mrb[0].mxu0
        %3537 = vmatprep.mubr.f32.mxu0 0.0
        %3538 = vmatmul.mubr.f32.gmra.mrb[0].mxu0 %v3350
        %v3539 = vpop.f32.mrb[0].mxu0
        %v3540 = vadd.f32 0.0, %v3539
        %v3541 = vpop.f32.mrb[0].mxu0
        %3542 = vmatprep.mubr.f32.mxu0 0.0
        %3543 = vmatmul.mubr.f32.gmra.mrb[0].mxu0 %v3353
        %v3544 = vpop.f32.mrb[0].mxu0
        %v3545 = vadd.f32 0.0, %v3544
        %v3546 = vpop.f32.mrb[0].mxu0
        %3547 = vmatprep.mubr.f32.mxu0 0.0
        %3548 = vmatmul.mubr.f32.gmra.mrb[0].mxu0 %v3356
        %v3549 = vpop.f32.mrb[0].mxu0
        %v3550 = vadd.f32 0.0, %v3549
        %v3551 = vpop.f32.mrb[0].mxu0
        %3552 = vmatprep.mubr.f32.mxu0 0.0
        %3553 = vmatmul.mubr.f32.gmra.mrb[0].mxu0 %v3359
        %v3554 = vpop.f32.mrb[0].mxu0
        %v3555 = vadd.f32 0.0, %v3554
        %v3556 = vpop.f32.mrb[0].mxu0
        %3557 = vmatprep.mubr.f32.mxu0 0.0
        %3558 = vmatmul.mubr.f32.gmra.mrb[0].mxu0 %v3362
        %v3559 = vpop.f32.mrb[0].mxu0
        %v3560 = vadd.f32 0.0, %v3559
        %v3561 = vpop.f32.mrb[0].mxu0
        %3562 = vmatprep.mubr.f32.mxu0 0.0
        %3563 = vmatmul.mubr.f32.gmra.mrb[0].mxu0 %v3365
        %v3564 = vpop.f32.mrb[0].mxu0
        %v3565 = vadd.f32 0.0, %v3564
        %v3566 = vpop.f32.mrb[0].mxu0
        %3567 = vmatprep.mubr.f32.mxu0 0.0
        %3568 = vmatmul.mubr.f32.gmra.mrb[0].mxu0 %v3368
        %v3569 = vpop.f32.mrb[0].mxu0
        %v3570 = vadd.f32 0.0, %v3569
        %v3571 = vpop.f32.mrb[0].mxu0
        %3572 = vmatprep.mubr.f32.mxu0 0.0
        %3573 = vmatmul.mubr.f32.gmra.mrb[0].mxu0 %v3371
        %v3574 = vpop.f32.mrb[0].mxu0
        %v3575 = vadd.f32 0.0, %v3574
        %v3576 = vpop.f32.mrb[0].mxu0
        %3577 = vmatprep.mubr.f32.mxu0 0.0
        %3578 = vmatmul.mubr.f32.gmra.mrb[0].mxu0 %v3374
        %v3579 = vpop.f32.mrb[0].mxu0
        %v3580 = vadd.f32 0.0, %v3579
        %v3581 = vpop.f32.mrb[0].mxu0
        %3582 = vmatprep.mubr.f32.mxu0 0.0
        %3583 = vmatmul.mubr.f32.gmra.mrb[0].mxu0 %v3377
        %v3584 = vpop.f32.mrb[0].mxu0
        %v3585 = vadd.f32 0.0, %v3584
        %v3586 = vpop.f32.mrb[0].mxu0
        %3587 = vmatprep.mubr.f32.mxu0 0.0
        %3588 = vmatmul.mubr.f32.gmra.mrb[0].mxu0 %v3380
        %v3589 = vpop.f32.mrb[0].mxu0
        %v3590 = vadd.f32 0.0, %v3589
        %v3591 = vpop.f32.mrb[0].mxu0
        %3592 = vmatprep.mubr.f32.mxu0 0.0
        %3593 = vmatmul.mubr.f32.gmra.mrb[0].mxu0 %v3383
        %v3594 = vpop.f32.mrb[0].mxu0
        %v3595 = vadd.f32 0.0, %v3594
        %v3596 = vpop.f32.mrb[0].mxu0
        %3597 = vmatprep.mubr.f32.mxu0 0.0
        %3598 = vmatmul.mubr.f32.gmra.mrb[0].mxu0 %v3386
        %v3599 = vpop.f32.mrb[0].mxu0
        %v3600 = vadd.f32 0.0, %v3599
        %v3601 = vpop.f32.mrb[0].mxu0
        %3602 = vmatprep.mubr.f32.mxu0 0.0
        %3603 = vmatmul.mubr.f32.gmra.mrb[0].mxu0 %v3389
        %v3604 = vpop.f32.mrb[0].mxu0
        %v3605 = vadd.f32 0.0, %v3604
        %v3606 = vpop.f32.mrb[0].mxu0
        %3607 = vmatprep.mubr.f32.mxu0 0.0
        %3608 = vmatmul.mubr.f32.gmra.mrb[0].mxu0 %v3392
        %v3609 = vpop.f32.mrb[0].mxu0
        %v3610 = vadd.f32 0.0, %v3609
        %v3611 = vpop.f32.mrb[0].mxu0
        %3612 = vmatprep.mubr.f32.mxu0 0.0
        %3613 = vmatmul.mubr.f32.gmra.mrb[0].mxu0 %v3395
        %v3614 = vpop.f32.mrb[0].mxu0
        %v3615 = vadd.f32 0.0, %v3614
        %v3616 = vpop.f32.mrb[0].mxu0
        %3617 = vmatprep.mubr.f32.mxu0 0.0
        %3618 = vmatmul.mubr.f32.gmra.mrb[0].mxu0 %v3398
        %v3619 = vpop.f32.mrb[0].mxu0
        %v3620 = vadd.f32 0.0, %v3619
        %v3621 = vpop.f32.mrb[0].mxu0
        %3622 = vmatprep.mubr.f32.mxu0 0.0
        %3623 = vmatmul.mubr.f32.gmra.mrb[0].mxu0 %v3401
        %v3624 = vpop.f32.mrb[0].mxu0
        %v3625 = vadd.f32 0.0, %v3624
        %v3626 = vpop.f32.mrb[0].mxu0
        %3627 = vdwg.mxu0
        %v3628 = vadd.f32 %v3242, %v3470
        %v3629 = vadd.f32 %v3243, %v3475
        %v3630 = vadd.f32 %v3244, %v3480
        %v3631 = vadd.f32 %v3245, %v3485
        %v3632 = vadd.f32 %v3246, %v3490
        %v3633 = vadd.f32 %v3247, %v3495
        %v3634 = vadd.f32 %v3248, %v3500
        %v3635 = vadd.f32 %v3249, %v3505
        %v3636 = vadd.f32 %v3250, %v3510
        %v3637 = vadd.f32 %v3251, %v3515
        %v3638 = vadd.f32 %v3252, %v3520
        %v3639 = vadd.f32 %v3253, %v3525
        %v3640 = vadd.f32 %v3254, %v3530
        %v3641 = vadd.f32 %v3255, %v3535
        %v3642 = vadd.f32 %v3256, %v3540
        %v3643 = vadd.f32 %v3257, %v3545
        %v3644 = vadd.f32 %v3258, %v3550
        %v3645 = vadd.f32 %v3259, %v3555
        %v3646 = vadd.f32 %v3260, %v3560
        %v3647 = vadd.f32 %v3261, %v3565
        %v3648 = vadd.f32 %v3262, %v3570
        %v3649 = vadd.f32 %v3263, %v3575
        %v3650 = vadd.f32 %v3264, %v3580
        %v3651 = vadd.f32 %v3265, %v3585
        %v3652 = vadd.f32 %v3266, %v3590
        %v3653 = vadd.f32 %v3267, %v3595
        %v3654 = vadd.f32 %v3268, %v3600
        %v3655 = vadd.f32 %v3269, %v3605
        %v3656 = vadd.f32 %v3270, %v3610
        %v3657 = vadd.f32 %v3271, %v3615
        %v3658 = vadd.f32 %v3272, %v3620
        %v3659 = vadd.f32 %v3273, %v3625
        %v3660 = vld [vmem:[#allocation7] sm:$0x1]
        %v3662 = vlaneseq
        %v3663 = vshrl.u32 %v3662, 7
        %v3664 = vsub.s32 0, %v3663
        %v3665 = vrot.slane %v3660, %v3664
        %v3667 = vadd.f32 %v3628, %v3665
        %v3668 = vadd.f32 %v3629, %v3665
        %v3669 = vadd.f32 %v3630, %v3665
        %v3670 = vadd.f32 %v3631, %v3665
        %v3671 = vadd.f32 %v3632, %v3665
        %v3672 = vadd.f32 %v3633, %v3665
        %v3673 = vadd.f32 %v3634, %v3665
        %v3674 = vadd.f32 %v3635, %v3665
        %v3675 = vadd.f32 %v3636, %v3665
        %v3676 = vadd.f32 %v3637, %v3665
        %v3677 = vadd.f32 %v3638, %v3665
        %v3678 = vadd.f32 %v3639, %v3665
        %v3679 = vadd.f32 %v3640, %v3665
        %v3680 = vadd.f32 %v3641, %v3665
        %v3681 = vadd.f32 %v3642, %v3665
        %v3682 = vadd.f32 %v3643, %v3665
        %v3683 = vadd.f32 %v3644, %v3665
        %v3684 = vadd.f32 %v3645, %v3665
        %v3685 = vadd.f32 %v3646, %v3665
        %v3686 = vadd.f32 %v3647, %v3665
        %v3687 = vadd.f32 %v3648, %v3665
        %v3688 = vadd.f32 %v3649, %v3665
        %v3689 = vadd.f32 %v3650, %v3665
        %v3690 = vadd.f32 %v3651, %v3665
        %v3691 = vadd.f32 %v3652, %v3665
        %v3692 = vadd.f32 %v3653, %v3665
        %v3693 = vadd.f32 %v3654, %v3665
        %v3694 = vadd.f32 %v3655, %v3665
        %v3695 = vadd.f32 %v3656, %v3665
        %v3696 = vadd.f32 %v3657, %v3665
        %v3697 = vadd.f32 %v3658, %v3665
        %v3698 = vadd.f32 %v3659, %v3665
        %v3699 = vmax.f32 %v3667, 0.0
        %v3700 = vmax.f32 %v3668, 0.0
        %v3701 = vmax.f32 %v3669, 0.0
        %v3702 = vmax.f32 %v3670, 0.0
        %v3703 = vmax.f32 %v3671, 0.0
        %v3704 = vmax.f32 %v3672, 0.0
        %v3705 = vmax.f32 %v3673, 0.0
        %v3706 = vmax.f32 %v3674, 0.0
        %v3707 = vmax.f32 %v3675, 0.0
        %v3708 = vmax.f32 %v3676, 0.0
        %v3709 = vmax.f32 %v3677, 0.0
        %v3710 = vmax.f32 %v3678, 0.0
        %v3711 = vmax.f32 %v3679, 0.0
        %v3712 = vmax.f32 %v3680, 0.0
        %v3713 = vmax.f32 %v3681, 0.0
        %v3714 = vmax.f32 %v3682, 0.0
        %v3715 = vmax.f32 %v3683, 0.0
        %v3716 = vmax.f32 %v3684, 0.0
        %v3717 = vmax.f32 %v3685, 0.0
        %v3718 = vmax.f32 %v3686, 0.0
        %v3719 = vmax.f32 %v3687, 0.0
        %v3720 = vmax.f32 %v3688, 0.0
        %v3721 = vmax.f32 %v3689, 0.0
        %v3722 = vmax.f32 %v3690, 0.0
        %v3723 = vmax.f32 %v3691, 0.0
        %v3724 = vmax.f32 %v3692, 0.0
        %v3725 = vmax.f32 %v3693, 0.0
        %v3726 = vmax.f32 %v3694, 0.0
        %v3727 = vmax.f32 %v3695, 0.0
        %v3728 = vmax.f32 %v3696, 0.0
        %v3729 = vmax.f32 %v3697, 0.0
        %v3730 = vmax.f32 %v3698, 0.0
        %3731 = vst [vmem:[%s238] sm:$0xff] %v3699
        %3732 = vst [vmem:[%s238 + $0x8] sm:$0xff] %v3700
        %3733 = vst [vmem:[%s238 + $0x10] sm:$0xff] %v3701
        %3734 = vst [vmem:[%s238 + $0x18] sm:$0xff] %v3702
        %3735 = vst [vmem:[%s238 + $0x20] sm:$0xff] %v3703
        %3736 = vst [vmem:[%s238 + $0x28] sm:$0xff] %v3704
        %3737 = vst [vmem:[%s238 + $0x30] sm:$0xff] %v3705
        %3738 = vst [vmem:[%s238 + $0x38] sm:$0xff] %v3706
        %3739 = vst [vmem:[%s238 + $0x40] sm:$0xff] %v3707
        %3740 = vst [vmem:[%s238 + $0x48] sm:$0xff] %v3708
        %3741 = vst [vmem:[%s238 + $0x50] sm:$0xff] %v3709
        %3742 = vst [vmem:[%s238 + $0x58] sm:$0xff] %v3710
        %3743 = vst [vmem:[%s238 + $0x60] sm:$0xff] %v3711
        %3744 = vst [vmem:[%s238 + $0x68] sm:$0xff] %v3712
        %3745 = vst [vmem:[%s238 + $0x70] sm:$0xff] %v3713
        %3746 = vst [vmem:[%s238 + $0x78] sm:$0xff] %v3714
        %3747 = vst [vmem:[%s238 + $0x80] sm:$0xff] %v3715
        %3748 = vst [vmem:[%s238 + $0x88] sm:$0xff] %v3716
        %3749 = vst [vmem:[%s238 + $0x90] sm:$0xff] %v3717
        %3750 = vst [vmem:[%s238 + $0x98] sm:$0xff] %v3718
        %3751 = vst [vmem:[%s238 + $0xa0] sm:$0xff] %v3719
        %3752 = vst [vmem:[%s238 + $0xa8] sm:$0xff] %v3720
        %3753 = vst [vmem:[%s238 + $0xb0] sm:$0xff] %v3721
        %3754 = vst [vmem:[%s238 + $0xb8] sm:$0xff] %v3722
        %3755 = vst [vmem:[%s238 + $0xc0] sm:$0xff] %v3723
        %3756 = vst [vmem:[%s238 + $0xc8] sm:$0xff] %v3724
        %3757 = vst [vmem:[%s238 + $0xd0] sm:$0xff] %v3725
        %3758 = vst [vmem:[%s238 + $0xd8] sm:$0xff] %v3726
        %3759 = vst [vmem:[%s238 + $0xe0] sm:$0xff] %v3727
        %3760 = vst [vmem:[%s238 + $0xe8] sm:$0xff] %v3728
        %3761 = vst [vmem:[%s238 + $0xf0] sm:$0xff] %v3729
        %3762 = vst [vmem:[%s238 + $0xf8] sm:$0xff] %v3730
        %s3763 = sand.u32 %s120, 1
        %s3764 = scalar_lea.sflag [#allocation4], %s3763
        %s3765 = sand.u32 %s120, 1
        %s3766 = smul.addr %s3765, 256
        %s3767 = scalar_lea.vmem [#allocation8], %s3766
        // Predicated region
        $region45: #{tpu_custom_call.1} parent=31 // pred_check
          %p3768 = pneg %p130
        $region46: #{tpu_custom_call.1} parent=31 // pred_check_branch
          %3770 = sbr.rel (%p3768) target = $region48
        $region47: #{tpu_custom_call.1} parent=31 // pred_region
          %s3771 = smul.u32 16, %s27
          %s3773 = ssub.s32 4096, 4096
          %3774 = vsyncadd %s3764, %s3773
          %s3775 = smul.addr %s3771, 2
          %s3776 = sadd.s32 %s28, %s3775
          %s3777 = smul.addr %s26, 32
          %s3778 = sadd.s32 %s3776, %s3777
          %s3779 = smul.addr %s3778, 128
          %s3780 = scalar_lea.hbm %s3, %s3779
          %s3781 = sshll.u32 %s3767, 4
          %s3782 = int_to_ptr.vmem [resolvable:$true] %s3781
          %3787 = dma.vmem_to_hbm [thread:$0]  %s3782, 4096, %s3780, %s3764, 128, 128, 8
        $region48: #{tpu_custom_call.1} parent=31 // pred_fallthru
          _
      $region32: #{tpu_custom_call.1} parent=5 // pred_fallthru
        _
      %p3788 = scmp.le.s32.totalorder 2, %s16
      // Predicated region
      $region49: #{tpu_custom_call.1} parent=5 // pred_check
        %p3789 = pneg %p3788
      $region50: #{tpu_custom_call.1} parent=5 // pred_check_branch
        %3791 = sbr.rel (%p3789) target = $region52
      $region51: #{tpu_custom_call.1} parent=5 // pred_region
        %s3792 = ssub.s32 %s16, 2
        // Predicated region
        $region53: #{tpu_custom_call.1} parent=51 // pred_check
          %p3793 = pneg %p136
        $region54: #{tpu_custom_call.1} parent=51 // pred_check_branch
          %3795 = sbr.rel (%p3793) target = $region56
        $region55: #{tpu_custom_call.1} parent=51 // pred_region
          %s3796 = sand.u32 %s121, 1
          %s3797 = scalar_lea.sflag [#allocation4], %s3796
          %s3798 = sand.u32 %s121, 1
          %s3799 = smul.addr %s3798, 256
          %s3800 = scalar_lea.vmem [#allocation8], %s3799
          %3801 = dma.done %s3797, 4096
        $region56: #{tpu_custom_call.1} parent=51 // pred_fallthru
          _
      $region52: #{tpu_custom_call.1} parent=5 // pred_fallthru
        _
    $region6: #{tpu_custom_call.1} parent=1 // loop_footer
      %s20 = sadd.s32 1, %s16
    $region7: #{tpu_custom_call.1} parent=1 // loop_footer_branch
      %15 = sbr.rel target = $region3
    $region8: #{tpu_custom_call.1} parent=1 // loop_exit
      _
    %3802 = vsyncpa [#allocation3], 1
    %s3803 = scalar_lea.sflag [#allocation3], 1
    %3804 = vsyncpa %s3803, 1
    %3805 = vsyncpa [#allocation6], 1
    %3806 = vsyncpa [#allocation4], 1
    %s3807 = scalar_lea.sflag [#allocation4], 1
    %3808 = vsyncpa %s3807, 1

</llo_original>
